<compile_context>
chip_gen: v6e
topology: v6e:2x2x1
jax: 0.10.0
libtpu: 0.0.40
codegen_flags: <defaults>
</compile_context>

<pallas_src>
import functools

import jax
import jax.numpy as jnp
from jax import lax
from jax.experimental import pallas as pl
from jax.experimental.pallas import tpu as pltpu


def _round_up(x, m):
    return (x + m - 1) // m * m


# ----------------------------- Pallas kernel ---------------------------------
def _gru_encoder_kernel(x_ref, len_ref,
                        wih0_ref, whh0_ref, bi0_ref, bhn0_ref,
                        w1_ref, b1_ref,
                        out_ref,
                        h0_ref, h1_ref, sel_ref,
                        *, use_abs: bool):
    """One (batch-tile, time-chunk) grid step of the 2-layer GRU encoder.

    x_ref   : (Tc, Bt, E)   mm-dtype  embedded tokens, time-major
    len_ref : (Bt, 1)       i32       sequence lengths
    wih0    : (E, 3*Hp)     mm-dtype  layer-0 input->gates, gate-blocked & lane-padded
    whh0    : (Hp, 3*Hp)    mm-dtype  layer-0 hidden->gates
    bi0     : (1, 3*Hp)     f32       layer-0 biases (r,z: b_ih+b_hh ; n: b_ih only)
    bhn0    : (1, Hp)       f32       layer-0 hidden n-gate bias (applied inside r*(...))
    w1      : (2*Hp, 4*Hp)  mm-dtype  layer-1 fused weights (see module header)
    b1      : (1, 4*Hp)     f32       layer-1 biases per fused column block
    out_ref : (Bt, Hp)      f32       L2-normalized final top-layer hidden state
    h0/h1/sel_ref : (Bt, Hp) f32 VMEM scratch carries across the time grid axis
    """
    Tc, Bt, _ = x_ref.shape
    Hp = out_ref.shape[1]
    t_idx = pl.program_id(1)
    mm_dtype = wih0_ref.dtype

    @pl.when(t_idx == 0)
    def _():
        h0_ref[...] = jnp.zeros_like(h0_ref)
        h1_ref[...] = jnp.zeros_like(h1_ref)
        sel_ref[...] = jnp.zeros_like(sel_ref)

    wih0 = wih0_ref[...]
    whh0 = whh0_ref[...]
    w1 = w1_ref[...]
    # Loop-invariant broadcasts hoisted once (JAX does not CSE broadcast_in_dim).
    bi0 = jnp.broadcast_to(bi0_ref[...], (Bt, 3 * Hp))
    bhn0 = jnp.broadcast_to(bhn0_ref[...], (Bt, Hp))
    b1 = jnp.broadcast_to(b1_ref[...], (Bt, 4 * Hp))
    tgt = jnp.broadcast_to(len_ref[...] - 1, (Bt, Hp))          # (Bt, Hp) i32

    # Layer-0 input projections for this chunk hoisted ahead of the recurrence: they do
    # not depend on h, so they issue up-front and overlap the serial h@W chain.
    gi0 = [jnp.dot(x_ref[tt], wih0, preferred_element_type=jnp.float32) + bi0
           for tt in range(Tc)]

    h0 = h0_ref[...]
    h1 = h1_ref[...]
    sel = sel_ref[...]
    t_base = t_idx * Tc

    # Chunk loop: Tc is small & static -> full unroll; the time grid axis bounds the
    # unroll / live ranges at production T.
    for tt in range(Tc):
        t = t_base + tt
        # ---- layer 0 ------------------------------------------------------------
        gh0 = jnp.dot(h0.astype(mm_dtype), whh0, preferred_element_type=jnp.float32)
        g0 = gi0[tt]
        r0 = jax.nn.sigmoid(g0[:, 0:Hp] + gh0[:, 0:Hp])
        z0 = jax.nn.sigmoid(g0[:, Hp:2 * Hp] + gh0[:, Hp:2 * Hp])
        n0 = jnp.tanh(g0[:, 2 * Hp:3 * Hp] + r0 * (gh0[:, 2 * Hp:3 * Hp] + bhn0))
        h0 = (1.0 - z0) * n0 + z0 * h0
        # ---- layer 1: ONE fused K-stacked MXU push per step ---------------------
        cat = jnp.concatenate([h0.astype(mm_dtype), h1.astype(mm_dtype)], axis=1)
        g1 = jnp.dot(cat, w1, preferred_element_type=jnp.float32) + b1
        r1 = jax.nn.sigmoid(g1[:, 0:Hp])
        z1 = jax.nn.sigmoid(g1[:, Hp:2 * Hp])
        n1 = jnp.tanh(g1[:, 2 * Hp:3 * Hp] + r1 * g1[:, 3 * Hp:4 * Hp])
        h1 = (1.0 - z1) * n1 + z1 * h1
        # Emulate pack_padded/pad_packed + gather(lengths-1): snapshot h1 at t==len-1.
        # NOTE: a length of 0 (or > T) never fires and yields an eps-guarded zero row
        # (PyTorch would error); padded batch rows use length 1 and are cropped later.
        sel = jnp.where(tgt == t, h1, sel)

    h0_ref[...] = h0
    h1_ref[...] = h1
    sel_ref[...] = sel

    @pl.when(t_idx == pl.num_programs(1) - 1)
    def _():
        # l2norm epilogue: rsqrt on the EUP + eps guard (avoids vector divide and 0/0 NaN).
        ss = jnp.sum(sel * sel, axis=1, keepdims=True)
        out = sel * lax.rsqrt(jnp.maximum(ss, 1e-12))
        if use_abs:
            out = jnp.abs(out)
        out_ref[...] = out


# ------------------------------- wrapper --------------------------------------
def pretrained_encoder_text(x_ids, lengths, params, *, use_abs=False,
                            matmul_dtype=jnp.bfloat16, t_chunk=8,
                            single_buffer_weights=False,
                            vmem_limit_bytes=64 * 1024 * 1024):
    """Forward pass of PretrainedEncoderText.

    x_ids   : (B, T) int32 token ids
    lengths : (B,)   int32 valid lengths (descending, as pack_padded_sequence requires)
    """
    B, T = x_ids.shape
    E = params["embedding"].shape[1]
    H = params["w_hh0"].shape[1]          # hidden size; w_hh is (3H, H)
    # Per-gate lane padding: every gate slice is a whole 128-lane slab (no XLU shifts) and
    # the output is lane-dense. Sized for production H >= 128; for tiny H this pads each
    # gate block up to 128 (wasted MXU columns at test shapes only).
    Hp = _round_up(H, 128)

    # Batch tile: up to 128 rows feeds the MXU well on all generations and amortizes the
    # ~0.35us per-grid-step overhead. Sublane multiple depends on the matmul dtype so the
    # bf16 x block stays natively tileable.
    sub = 8 if jnp.dtype(matmul_dtype).itemsize >= 4 else 16
    B_TILE = min(128, _round_up(B, sub))
    # v7x has 2 TensorCores: prefer >=2 steps on the "parallel" batch axis when batch permits.
    if B_TILE >= 128 and _round_up(B, B_TILE) // B_TILE < 2:
        B_TILE = _round_up(B_TILE // 2, sub)
    Bp = _round_up(B, B_TILE)

    Tc = max(1, min(t_chunk, T))          # time chunk (streamed over an "arbitrary" axis)
    Tp = _round_up(T, Tc)

    # TODO(synk): embedding row-gather stays in plain JAX glue (data-dependent HBM gather);
    # at scale it would be a scalar-prefetch + manual-DMA Pallas gather. Casting the table
    # to the matmul dtype first halves both the gather bytes and the (T,B,E) intermediate.
    emb_tm = jnp.take(params["embedding"].astype(matmul_dtype),
                      x_ids.astype(jnp.int32).T, axis=0)          # (T, B, E), time-major
    emb_tm = jnp.pad(emb_tm, ((0, Tp - T), (0, Bp - B), (0, 0)))
    len_col = jnp.pad(lengths.astype(jnp.int32).reshape(B, 1),
                      ((0, Bp - B), (0, 0)), constant_values=1)   # padded rows: len=1

    f32 = jnp.float32

    def gates(w, in_dim, in_pad):
        # (3H, in_dim) -> (in_pad, 3, Hp): transpose, split per gate, zero-pad each gate
        # block to Hp lanes so in-kernel gate slices land on 128-lane boundaries.
        wt = w.T.reshape(in_dim, 3, H).astype(f32)
        return jnp.pad(wt, ((0, in_pad - in_dim), (0, 0), (0, Hp - H)))

    def pad_gate_vec(v):
        return jnp.pad(v.astype(f32), (0, Hp - H))

    # ---- layer 0 -----------------------------------------------------------------
    wih0 = gates(params["w_ih0"], E, E).reshape(E, 3 * Hp)
    whh0 = gates(params["w_hh0"], H, Hp).reshape(Hp, 3 * Hp)
    bi0 = jnp.concatenate([
        pad_gate_vec(params["b_ih0"][0:H] + params["b_hh0"][0:H]),
        pad_gate_vec(params["b_ih0"][H:2 * H] + params["b_hh0"][H:2 * H]),
        pad_gate_vec(params["b_ih0"][2 * H:3 * H]),
    ]).reshape(1, 3 * Hp)
    bhn0 = pad_gate_vec(params["b_hh0"][2 * H:3 * H]).reshape(1, Hp)

    # ---- layer 1: fuse W_ih1 / W_hh1 into ONE K-stacked (2Hp, 4Hp) matrix --------
    #   rows [0,Hp)   (h0 side):  [ Wih1_r | Wih1_z | Wih1_n |   0    ]
    #   rows [Hp,2Hp) (h1 side):  [ Whh1_r | Whh1_z |   0    | Whh1_n ]
    wi1 = gates(params["w_ih1"], H, Hp)      # (Hp, 3, Hp)
    wh1 = gates(params["w_hh1"], H, Hp)
    zblk = jnp.zeros((Hp, Hp), f32)
    w1 = jnp.concatenate([
        jnp.concatenate([wi1[:, 0], wi1[:, 1], wi1[:, 2], zblk], axis=1),
        jnp.concatenate([wh1[:, 0], wh1[:, 1], zblk, wh1[:, 2]], axis=1),
    ], axis=0)                               # (2Hp, 4Hp)
    b1 = jnp.concatenate([
        pad_gate_vec(params["b_ih1"][0:H] + params["b_hh1"][0:H]),
        pad_gate_vec(params["b_ih1"][H:2 * H] + params["b_hh1"][H:2 * H]),
        pad_gate_vec(params["b_ih1"][2 * H:3 * H]),
        pad_gate_vec(params["b_hh1"][2 * H:3 * H]),
    ]).reshape(1, 4 * Hp)

    wih0 = wih0.astype(matmul_dtype)
    whh0 = whh0.astype(matmul_dtype)
    w1 = w1.astype(matmul_dtype)

    def wspec(shape):
        kw = {}
        if single_buffer_weights:
            # Constant index_map -> nothing to pipeline; single-buffering halves the
            # resident-weight VMEM (needed for production H on v7x's 64 MiB VMEM).
            kw["pipeline_mode"] = pl.Buffered(1)
        return pl.BlockSpec(shape, lambda b, t: (0, 0), **kw)

    kernel = functools.partial(_gru_encoder_kernel, use_abs=use_abs)

    out = pl.pallas_call(
        kernel,
        out_shape=jax.ShapeDtypeStruct((Bp, Hp), jnp.float32),
        grid=(Bp // B_TILE, Tp // Tc),        # (parallel batch tiles, streamed time chunks)
        in_specs=[
            pl.BlockSpec((Tc, B_TILE, E), lambda b, t: (t, b, 0)),   # x, time-major
            pl.BlockSpec((B_TILE, 1), lambda b, t: (b, 0)),          # lengths
            wspec((E, 3 * Hp)),                                      # wih0
            wspec((Hp, 3 * Hp)),                                     # whh0
            wspec((1, 3 * Hp)),                                      # bi0
            wspec((1, Hp)),                                          # bhn0
            wspec((2 * Hp, 4 * Hp)),                                 # w1 (fused layer 1)
            wspec((1, 4 * Hp)),                                      # b1
        ],
        out_specs=pl.BlockSpec((B_TILE, Hp), lambda b, t: (b, 0)),   # lane-dense, resident over t
        scratch_shapes=[pltpu.VMEM((B_TILE, Hp), jnp.float32)] * 3,  # h0, h1, sel carries
        compiler_params=pltpu.CompilerParams(
            dimension_semantics=("parallel", "arbitrary"),
            vmem_limit_bytes=vmem_limit_bytes),
    )(emb_tm, len_col, wih0, whh0, bi0, bhn0, w1, b1)

    return out[:B, :H]


# --------------------------- pure-JAX reference --------------------------------
def _reference(x_ids, lengths, params, *, use_abs=False):
    emb = jnp.take(params["embedding"], x_ids.astype(jnp.int32), axis=0)  # (B, T, E)
    B, T, E = emb.shape
    H = params["w_hh0"].shape[1]

    def cell(x_t, h, wih, whh, bih, bhh):
        gi = x_t @ wih.T + bih
        gh = h @ whh.T + bhh
        r = jax.nn.sigmoid(gi[:, :H] + gh[:, :H])
        z = jax.nn.sigmoid(gi[:, H:2 * H] + gh[:, H:2 * H])
        n = jnp.tanh(gi[:, 2 * H:] + r * gh[:, 2 * H:])
        return (1.0 - z) * n + z * h

    def scan_fn(carry, x_t):
        h0, h1 = carry
        h0 = cell(x_t, h0, params["w_ih0"], params["w_hh0"], params["b_ih0"], params["b_hh0"])
        h1 = cell(h0, h1, params["w_ih1"], params["w_hh1"], params["b_ih1"], params["b_hh1"])
        return (h0, h1), h1

    h0 = jnp.zeros((B, H), jnp.float32)
    h1 = jnp.zeros((B, H), jnp.float32)
    _, outs = lax.scan(scan_fn, (h0, h1), jnp.transpose(emb, (1, 0, 2)))  # (T, B, H)
    outs = jnp.transpose(outs, (1, 0, 2))                                  # (B, T, H)
    idx = (lengths - 1).astype(jnp.int32)
    sel = outs[jnp.arange(B), idx]                                         # (B, H)
    norm = jnp.sqrt(jnp.sum(sel * sel, axis=1, keepdims=True))
    out = sel / norm
    return jnp.abs(out) if use_abs else out


# ------------------------------- main ------------------------------------------
if __name__ == "__main__":
    # Small, module-consistent shapes.
    B, T = 2, 8            # batch, max sequence length
    VOCAB = 256            # num_embeddings of the pretrained w2v table
    E = 32                 # embedding_dim (w2v vector size)
    H = 32                 # embed_size (GRU hidden)

    key = jax.random.PRNGKey(0)
    keys = jax.random.split(key, 12)
    s = 1.0 / jnp.sqrt(jnp.float32(H))

    params = {
        # frozen pretrained embedding table (synthetic, deterministic)
        "embedding": jax.random.normal(keys[0], (VOCAB, E), jnp.float32) * 0.1,
        # GRU layer 0
        "w_ih0": jax.random.uniform(keys[1], (3 * H, E), jnp.float32, -s, s),
        "w_hh0": jax.random.uniform(keys[2], (3 * H, H), jnp.float32, -s, s),
        "b_ih0": jax.random.uniform(keys[3], (3 * H,), jnp.float32, -s, s),
        "b_hh0": jax.random.uniform(keys[4], (3 * H,), jnp.float32, -s, s),
        # GRU layer 1
        "w_ih1": jax.random.uniform(keys[5], (3 * H, H), jnp.float32, -s, s),
        "w_hh1": jax.random.uniform(keys[6], (3 * H, H), jnp.float32, -s, s),
        "b_ih1": jax.random.uniform(keys[7], (3 * H,), jnp.float32, -s, s),
        "b_hh1": jax.random.uniform(keys[8], (3 * H,), jnp.float32, -s, s),
    }

    x_ids = jax.random.randint(keys[9], (B, T), 0, VOCAB, jnp.int32)
    lengths = jnp.array([8, 5], jnp.int32)  # descending, as pack_padded_sequence requires

    ref = _reference(x_ids, lengths, params, use_abs=False)

    # f32 matmul-input variant: tight numerical check of the kernel logic.
    out_f32 = pretrained_encoder_text(x_ids, lengths, params, use_abs=False,
                                      matmul_dtype=jnp.float32)
    out_f32 = jax.block_until_ready(out_f32)
    assert out_f32.shape == (B, H)
    assert jnp.allclose(out_f32, ref, rtol=1e-3, atol=1e-4), "f32 mismatch vs reference"

    # bf16 matmul-input variant (production path): bf16 weights/x/h at the MXU boundary,
    # f32 accumulation & gates -> looser tolerance vs the all-f32 reference.
    out_bf16 = pretrained_encoder_text(x_ids, lengths, params, use_abs=False,
                                       matmul_dtype=jnp.bfloat16)
    out_bf16 = jax.block_until_ready(out_bf16)
    assert out_bf16.shape == (B, H)
    assert jnp.allclose(out_bf16, ref, rtol=3e-2, atol=3e-2), "bf16 mismatch vs reference"

    print("KERNEL_OK")
</pallas_src>

<mosaic_0001>
module attributes {stable_mosaic.version = 11 : i64} {
  func.func @_gru_encoder_kernel(%arg0: i32, %arg1: i32, %arg2: memref<8x8x32xf32, #tpu.memory_space<vmem>>, %arg3: memref<8x1xi32, #tpu.memory_space<vmem>>, %arg4: memref<32x384xf32, #tpu.memory_space<vmem>>, %arg5: memref<128x384xf32, #tpu.memory_space<vmem>>, %arg6: memref<1x384xf32, #tpu.memory_space<vmem>>, %arg7: memref<1x128xf32, #tpu.memory_space<vmem>>, %arg8: memref<256x512xf32, #tpu.memory_space<vmem>>, %arg9: memref<1x512xf32, #tpu.memory_space<vmem>>, %arg10: memref<8x128xf32, #tpu.memory_space<vmem>>, %arg11: memref<8x128xf32, #tpu.memory_space<vmem>>, %arg12: memref<8x128xf32, #tpu.memory_space<vmem>>, %arg13: memref<8x128xf32, #tpu.memory_space<vmem>>) attributes {dimension_semantics = [#tpu.dimension_semantics<parallel>, #tpu.dimension_semantics<arbitrary>], iteration_bounds = array<i64: 1, 1>, scalar_prefetch = 0 : i64, scratch_operands = 3 : i64, tpu.core_type = #tpu.core_type<tc>, window_params = [{transform_indices = @transform_0, window_bounds = array<i64: 8, 8, 32>}, {transform_indices = @transform_1, window_bounds = array<i64: 8, 1>}, {pipeline_mode = #tpu.pipeline_mode<synchronous>, transform_indices = @transform_2, window_bounds = array<i64: 32, 384>}, {pipeline_mode = #tpu.pipeline_mode<synchronous>, transform_indices = @transform_3, window_bounds = array<i64: 128, 384>}, {pipeline_mode = #tpu.pipeline_mode<synchronous>, transform_indices = @transform_4, window_bounds = array<i64: 1, 384>}, {pipeline_mode = #tpu.pipeline_mode<synchronous>, transform_indices = @transform_5, window_bounds = array<i64: 1, 128>}, {pipeline_mode = #tpu.pipeline_mode<synchronous>, transform_indices = @transform_6, window_bounds = array<i64: 256, 512>}, {pipeline_mode = #tpu.pipeline_mode<synchronous>, transform_indices = @transform_7, window_bounds = array<i64: 1, 512>}, {transform_indices = @transform_8, window_bounds = array<i64: 8, 128>}]} {
    %c0_i32 = arith.constant 0 : i32
    %0 = arith.cmpi eq, %arg1, %c0_i32 : i32
    %1 = arith.extui %0 : i1 to i32
    %c0_i32_0 = arith.constant 0 : i32
    %2 = arith.cmpi ne, %1, %c0_i32_0 : i32
    scf.if %2 {
      %cst_118 = arith.constant 0.000000e+00 : f32
      %518 = vector.broadcast %cst_118 : f32 to vector<8x128xf32>
      %c0_119 = arith.constant 0 : index
      %c0_120 = arith.constant 0 : index
      %519 = vector.load %arg11[%c0_119, %c0_120] : memref<8x128xf32, #tpu.memory_space<vmem>>, vector<8x128xf32>
      tpu.vector_store %arg11[%c0_119, %c0_120], %518 {strides = array<i32>} : memref<8x128xf32, #tpu.memory_space<vmem>>, vector<8x128xf32>,
      %cst_121 = arith.constant 0.000000e+00 : f32
      %520 = vector.broadcast %cst_121 : f32 to vector<8x128xf32>
      %c0_122 = arith.constant 0 : index
      %c0_123 = arith.constant 0 : index
      %521 = vector.load %arg12[%c0_122, %c0_123] : memref<8x128xf32, #tpu.memory_space<vmem>>, vector<8x128xf32>
      tpu.vector_store %arg12[%c0_122, %c0_123], %520 {strides = array<i32>} : memref<8x128xf32, #tpu.memory_space<vmem>>, vector<8x128xf32>,
      %cst_124 = arith.constant 0.000000e+00 : f32
      %522 = vector.broadcast %cst_124 : f32 to vector<8x128xf32>
      %c0_125 = arith.constant 0 : index
      %c0_126 = arith.constant 0 : index
      %523 = vector.load %arg13[%c0_125, %c0_126] : memref<8x128xf32, #tpu.memory_space<vmem>>, vector<8x128xf32>
      tpu.vector_store %arg13[%c0_125, %c0_126], %522 {strides = array<i32>} : memref<8x128xf32, #tpu.memory_space<vmem>>, vector<8x128xf32>,
    } else {
    }
    %c0 = arith.constant 0 : index
    %c0_1 = arith.constant 0 : index
    %3 = vector.load %arg4[%c0, %c0_1] : memref<32x384xf32, #tpu.memory_space<vmem>>, vector<32x384xf32>
    %c0_2 = arith.constant 0 : index
    %c0_3 = arith.constant 0 : index
    %4 = vector.load %arg5[%c0_2, %c0_3] : memref<128x384xf32, #tpu.memory_space<vmem>>, vector<128x384xf32>
    %c0_4 = arith.constant 0 : index
    %c0_5 = arith.constant 0 : index
    %5 = vector.load %arg8[%c0_4, %c0_5] : memref<256x512xf32, #tpu.memory_space<vmem>>, vector<256x512xf32>
    %c0_6 = arith.constant 0 : index
    %c0_7 = arith.constant 0 : index
    %6 = vector.load %arg6[%c0_6, %c0_7] : memref<1x384xf32, #tpu.memory_space<vmem>>, vector<1x384xf32>
    %7 = vector.shape_cast %6 : vector<1x384xf32> to vector<1x384xf32>
    %8 = vector.broadcast %7 : vector<1x384xf32> to vector<8x384xf32>
    %c0_8 = arith.constant 0 : index
    %c0_9 = arith.constant 0 : index
    %9 = vector.load %arg7[%c0_8, %c0_9] : memref<1x128xf32, #tpu.memory_space<vmem>>, vector<1x128xf32>
    %10 = vector.shape_cast %9 : vector<1x128xf32> to vector<1x128xf32>
    %11 = vector.broadcast %10 : vector<1x128xf32> to vector<8x128xf32>
    %c0_10 = arith.constant 0 : index
    %c0_11 = arith.constant 0 : index
    %12 = vector.load %arg9[%c0_10, %c0_11] : memref<1x512xf32, #tpu.memory_space<vmem>>, vector<1x512xf32>
    %13 = vector.shape_cast %12 : vector<1x512xf32> to vector<1x512xf32>
    %14 = vector.broadcast %13 : vector<1x512xf32> to vector<8x512xf32>
    %c0_12 = arith.constant 0 : index
    %c0_13 = arith.constant 0 : index
    %15 = vector.load %arg3[%c0_12, %c0_13] : memref<8x1xi32, #tpu.memory_space<vmem>>, vector<8x1xi32>
    %c1_i32 = arith.constant 1 : i32
    %16 = vector.broadcast %c1_i32 : i32 to vector<8x1xi32>
    %17 = arith.subi %15, %16 : vector<8x1xi32>
    %18 = vector.shape_cast %17 : vector<8x1xi32> to vector<8x1xi32>
    %19 = vector.broadcast %18 : vector<8x1xi32> to vector<8x128xi32>
    %c0_14 = arith.constant 0 : index
    %c0_15 = arith.constant 0 : index
    %c0_16 = arith.constant 0 : index
    %20 = vector.load %arg2[%c0_14, %c0_15, %c0_16] : memref<8x8x32xf32, #tpu.memory_space<vmem>>, vector<1x8x32xf32>
    %21 = vector.shape_cast %20 : vector<1x8x32xf32> to vector<8x32xf32>
    %cst = arith.constant dense<0.000000e+00> : vector<8x384xf32>
    %22 = tpu.matmul %21, %3, %cst {dimension_numbers = #tpu.dot_dimension_numbers<[1], [0], [0], [1], [0, 0, 1, 1], [], []>} : vector<8x32xf32>, vector<32x384xf32>, vector<8x384xf32> -> vector<8x384xf32>
    %23 = arith.addf %22, %8 : vector<8x384xf32>
    %c1 = arith.constant 1 : index
    %c0_17 = arith.constant 0 : index
    %c0_18 = arith.constant 0 : index
    %24 = vector.load %arg2[%c1, %c0_17, %c0_18] : memref<8x8x32xf32, #tpu.memory_space<vmem>>, vector<1x8x32xf32>
    %25 = vector.shape_cast %24 : vector<1x8x32xf32> to vector<8x32xf32>
    %cst_19 = arith.constant dense<0.000000e+00> : vector<8x384xf32>
    %26 = tpu.matmul %25, %3, %cst_19 {dimension_numbers = #tpu.dot_dimension_numbers<[1], [0], [0], [1], [0, 0, 1, 1], [], []>} : vector<8x32xf32>, vector<32x384xf32>, vector<8x384xf32> -> vector<8x384xf32>
    %27 = arith.addf %26, %8 : vector<8x384xf32>
    %c2 = arith.constant 2 : index
    %c0_20 = arith.constant 0 : index
    %c0_21 = arith.constant 0 : index
    %28 = vector.load %arg2[%c2, %c0_20, %c0_21] : memref<8x8x32xf32, #tpu.memory_space<vmem>>, vector<1x8x32xf32>
    %29 = vector.shape_cast %28 : vector<1x8x32xf32> to vector<8x32xf32>
    %cst_22 = arith.constant dense<0.000000e+00> : vector<8x384xf32>
    %30 = tpu.matmul %29, %3, %cst_22 {dimension_numbers = #tpu.dot_dimension_numbers<[1], [0], [0], [1], [0, 0, 1, 1], [], []>} : vector<8x32xf32>, vector<32x384xf32>, vector<8x384xf32> -> vector<8x384xf32>
    %31 = arith.addf %30, %8 : vector<8x384xf32>
    %c3 = arith.constant 3 : index
    %c0_23 = arith.constant 0 : index
    %c0_24 = arith.constant 0 : index
    %32 = vector.load %arg2[%c3, %c0_23, %c0_24] : memref<8x8x32xf32, #tpu.memory_space<vmem>>, vector<1x8x32xf32>
    %33 = vector.shape_cast %32 : vector<1x8x32xf32> to vector<8x32xf32>
    %cst_25 = arith.constant dense<0.000000e+00> : vector<8x384xf32>
    %34 = tpu.matmul %33, %3, %cst_25 {dimension_numbers = #tpu.dot_dimension_numbers<[1], [0], [0], [1], [0, 0, 1, 1], [], []>} : vector<8x32xf32>, vector<32x384xf32>, vector<8x384xf32> -> vector<8x384xf32>
    %35 = arith.addf %34, %8 : vector<8x384xf32>
    %c4 = arith.constant 4 : index
    %c0_26 = arith.constant 0 : index
    %c0_27 = arith.constant 0 : index
    %36 = vector.load %arg2[%c4, %c0_26, %c0_27] : memref<8x8x32xf32, #tpu.memory_space<vmem>>, vector<1x8x32xf32>
    %37 = vector.shape_cast %36 : vector<1x8x32xf32> to vector<8x32xf32>
    %cst_28 = arith.constant dense<0.000000e+00> : vector<8x384xf32>
    %38 = tpu.matmul %37, %3, %cst_28 {dimension_numbers = #tpu.dot_dimension_numbers<[1], [0], [0], [1], [0, 0, 1, 1], [], []>} : vector<8x32xf32>, vector<32x384xf32>, vector<8x384xf32> -> vector<8x384xf32>
    %39 = arith.addf %38, %8 : vector<8x384xf32>
    %c5 = arith.constant 5 : index
    %c0_29 = arith.constant 0 : index
    %c0_30 = arith.constant 0 : index
    %40 = vector.load %arg2[%c5, %c0_29, %c0_30] : memref<8x8x32xf32, #tpu.memory_space<vmem>>, vector<1x8x32xf32>
    %41 = vector.shape_cast %40 : vector<1x8x32xf32> to vector<8x32xf32>
    %cst_31 = arith.constant dense<0.000000e+00> : vector<8x384xf32>
    %42 = tpu.matmul %41, %3, %cst_31 {dimension_numbers = #tpu.dot_dimension_numbers<[1], [0], [0], [1], [0, 0, 1, 1], [], []>} : vector<8x32xf32>, vector<32x384xf32>, vector<8x384xf32> -> vector<8x384xf32>
    %43 = arith.addf %42, %8 : vector<8x384xf32>
    %c6 = arith.constant 6 : index
    %c0_32 = arith.constant 0 : index
    %c0_33 = arith.constant 0 : index
    %44 = vector.load %arg2[%c6, %c0_32, %c0_33] : memref<8x8x32xf32, #tpu.memory_space<vmem>>, vector<1x8x32xf32>
    %45 = vector.shape_cast %44 : vector<1x8x32xf32> to vector<8x32xf32>
    %cst_34 = arith.constant dense<0.000000e+00> : vector<8x384xf32>
    %46 = tpu.matmul %45, %3, %cst_34 {dimension_numbers = #tpu.dot_dimension_numbers<[1], [0], [0], [1], [0, 0, 1, 1], [], []>} : vector<8x32xf32>, vector<32x384xf32>, vector<8x384xf32> -> vector<8x384xf32>
    %47 = arith.addf %46, %8 : vector<8x384xf32>
    %c7 = arith.constant 7 : index
    %c0_35 = arith.constant 0 : index
    %c0_36 = arith.constant 0 : index
    %48 = vector.load %arg2[%c7, %c0_35, %c0_36] : memref<8x8x32xf32, #tpu.memory_space<vmem>>, vector<1x8x32xf32>
    %49 = vector.shape_cast %48 : vector<1x8x32xf32> to vector<8x32xf32>
    %cst_37 = arith.constant dense<0.000000e+00> : vector<8x384xf32>
    %50 = tpu.matmul %49, %3, %cst_37 {dimension_numbers = #tpu.dot_dimension_numbers<[1], [0], [0], [1], [0, 0, 1, 1], [], []>} : vector<8x32xf32>, vector<32x384xf32>, vector<8x384xf32> -> vector<8x384xf32>
    %51 = arith.addf %50, %8 : vector<8x384xf32>
    %c0_38 = arith.constant 0 : index
    %c0_39 = arith.constant 0 : index
    %52 = vector.load %arg11[%c0_38, %c0_39] : memref<8x128xf32, #tpu.memory_space<vmem>>, vector<8x128xf32>
    %c0_40 = arith.constant 0 : index
    %c0_41 = arith.constant 0 : index
    %53 = vector.load %arg12[%c0_40, %c0_41] : memref<8x128xf32, #tpu.memory_space<vmem>>, vector<8x128xf32>
    %c0_42 = arith.constant 0 : index
    %c0_43 = arith.constant 0 : index
    %54 = vector.load %arg13[%c0_42, %c0_43] : memref<8x128xf32, #tpu.memory_space<vmem>>, vector<8x128xf32>
    %c8_i32 = arith.constant 8 : i32
    %55 = arith.muli %arg1, %c8_i32 : i32
    %c0_i32_44 = arith.constant 0 : i32
    %56 = arith.addi %55, %c0_i32_44 : i32
    %cst_45 = arith.constant dense<0.000000e+00> : vector<8x384xf32>
    %57 = tpu.matmul %52, %4, %cst_45 {dimension_numbers = #tpu.dot_dimension_numbers<[1], [0], [0], [1], [0, 0, 1, 1], [], []>} : vector<8x128xf32>, vector<128x384xf32>, vector<8x384xf32> -> vector<8x384xf32>
    %58 = vector.extract_strided_slice %23 {offsets = [0, 0], sizes = [8, 128], strides = [1, 1]} : vector<8x384xf32> to vector<8x128xf32>
    %59 = vector.extract_strided_slice %57 {offsets = [0, 0], sizes = [8, 128], strides = [1, 1]} : vector<8x384xf32> to vector<8x128xf32>
    %60 = arith.addf %58, %59 : vector<8x128xf32>
    %61 = arith.negf %60 : vector<8x128xf32>
    %62 = math.exp %61 : vector<8x128xf32>
    %cst_46 = arith.constant 1.000000e+00 : f32
    %63 = vector.broadcast %cst_46 : f32 to vector<8x128xf32>
    %64 = arith.addf %63, %62 : vector<8x128xf32>
    %65 = arith.divf %63, %64 : vector<8x128xf32>
    %66 = vector.extract_strided_slice %23 {offsets = [0, 128], sizes = [8, 128], strides = [1, 1]} : vector<8x384xf32> to vector<8x128xf32>
    %67 = vector.extract_strided_slice %57 {offsets = [0, 128], sizes = [8, 128], strides = [1, 1]} : vector<8x384xf32> to vector<8x128xf32>
    %68 = arith.addf %66, %67 : vector<8x128xf32>
    %69 = arith.negf %68 : vector<8x128xf32>
    %70 = math.exp %69 : vector<8x128xf32>
    %cst_47 = arith.constant 1.000000e+00 : f32
    %71 = vector.broadcast %cst_47 : f32 to vector<8x128xf32>
    %72 = arith.addf %71, %70 : vector<8x128xf32>
    %73 = arith.divf %71, %72 : vector<8x128xf32>
    %74 = vector.extract_strided_slice %23 {offsets = [0, 256], sizes = [8, 128], strides = [1, 1]} : vector<8x384xf32> to vector<8x128xf32>
    %75 = vector.extract_strided_slice %57 {offsets = [0, 256], sizes = [8, 128], strides = [1, 1]} : vector<8x384xf32> to vector<8x128xf32>
    %76 = arith.addf %75, %11 : vector<8x128xf32>
    %77 = arith.mulf %65, %76 : vector<8x128xf32>
    %78 = arith.addf %74, %77 : vector<8x128xf32>
    %79 = math.tanh %78 : vector<8x128xf32>
    %cst_48 = arith.constant 1.000000e+00 : f32
    %80 = vector.broadcast %cst_48 : f32 to vector<8x128xf32>
    %81 = arith.subf %80, %73 : vector<8x128xf32>
    %82 = arith.mulf %81, %79 : vector<8x128xf32>
    %83 = arith.mulf %73, %52 : vector<8x128xf32>
    %84 = arith.addf %82, %83 : vector<8x128xf32>
    %85 = tpu.concatenate %84, %53 in 1 : vector<8x128xf32>, vector<8x128xf32> -> vector<8x256xf32>
    %cst_49 = arith.constant dense<0.000000e+00> : vector<8x512xf32>
    %86 = tpu.matmul %85, %5, %cst_49 {dimension_numbers = #tpu.dot_dimension_numbers<[1], [0], [0], [1], [0, 0, 1, 1], [], []>} : vector<8x256xf32>, vector<256x512xf32>, vector<8x512xf32> -> vector<8x512xf32>
    %87 = arith.addf %86, %14 : vector<8x512xf32>
    %88 = vector.extract_strided_slice %87 {offsets = [0, 0], sizes = [8, 128], strides = [1, 1]} : vector<8x512xf32> to vector<8x128xf32>
    %89 = arith.negf %88 : vector<8x128xf32>
    %90 = math.exp %89 : vector<8x128xf32>
    %cst_50 = arith.constant 1.000000e+00 : f32
    %91 = vector.broadcast %cst_50 : f32 to vector<8x128xf32>
    %92 = arith.addf %91, %90 : vector<8x128xf32>
    %93 = arith.divf %91, %92 : vector<8x128xf32>
    %94 = vector.extract_strided_slice %87 {offsets = [0, 128], sizes = [8, 128], strides = [1, 1]} : vector<8x512xf32> to vector<8x128xf32>
    %95 = arith.negf %94 : vector<8x128xf32>
    %96 = math.exp %95 : vector<8x128xf32>
    %cst_51 = arith.constant 1.000000e+00 : f32
    %97 = vector.broadcast %cst_51 : f32 to vector<8x128xf32>
    %98 = arith.addf %97, %96 : vector<8x128xf32>
    %99 = arith.divf %97, %98 : vector<8x128xf32>
    %100 = vector.extract_strided_slice %87 {offsets = [0, 256], sizes = [8, 128], strides = [1, 1]} : vector<8x512xf32> to vector<8x128xf32>
    %101 = vector.extract_strided_slice %87 {offsets = [0, 384], sizes = [8, 128], strides = [1, 1]} : vector<8x512xf32> to vector<8x128xf32>
    %102 = arith.mulf %93, %101 : vector<8x128xf32>
    %103 = arith.addf %100, %102 : vector<8x128xf32>
    %104 = math.tanh %103 : vector<8x128xf32>
    %cst_52 = arith.constant 1.000000e+00 : f32
    %105 = vector.broadcast %cst_52 : f32 to vector<8x128xf32>
    %106 = arith.subf %105, %99 : vector<8x128xf32>
    %107 = arith.mulf %106, %104 : vector<8x128xf32>
    %108 = arith.mulf %99, %53 : vector<8x128xf32>
    %109 = arith.addf %107, %108 : vector<8x128xf32>
    %110 = vector.broadcast %56 : i32 to vector<8x128xi32>
    %111 = arith.cmpi eq, %19, %110 : vector<8x128xi32>
    %112 = arith.select %111, %109, %54 : vector<8x128xi1>, vector<8x128xf32>
    %c1_i32_53 = arith.constant 1 : i32
    %113 = arith.addi %55, %c1_i32_53 : i32
    %cst_54 = arith.constant dense<0.000000e+00> : vector<8x384xf32>
    %114 = tpu.matmul %84, %4, %cst_54 {dimension_numbers = #tpu.dot_dimension_numbers<[1], [0], [0], [1], [0, 0, 1, 1], [], []>} : vector<8x128xf32>, vector<128x384xf32>, vector<8x384xf32> -> vector<8x384xf32>
    %115 = vector.extract_strided_slice %27 {offsets = [0, 0], sizes = [8, 128], strides = [1, 1]} : vector<8x384xf32> to vector<8x128xf32>
    %116 = vector.extract_strided_slice %114 {offsets = [0, 0], sizes = [8, 128], strides = [1, 1]} : vector<8x384xf32> to vector<8x128xf32>
    %117 = arith.addf %115, %116 : vector<8x128xf32>
    %118 = arith.negf %117 : vector<8x128xf32>
    %119 = math.exp %118 : vector<8x128xf32>
    %cst_55 = arith.constant 1.000000e+00 : f32
    %120 = vector.broadcast %cst_55 : f32 to vector<8x128xf32>
    %121 = arith.addf %120, %119 : vector<8x128xf32>
    %122 = arith.divf %120, %121 : vector<8x128xf32>
    %123 = vector.extract_strided_slice %27 {offsets = [0, 128], sizes = [8, 128], strides = [1, 1]} : vector<8x384xf32> to vector<8x128xf32>
    %124 = vector.extract_strided_slice %114 {offsets = [0, 128], sizes = [8, 128], strides = [1, 1]} : vector<8x384xf32> to vector<8x128xf32>
    %125 = arith.addf %123, %124 : vector<8x128xf32>
    %126 = arith.negf %125 : vector<8x128xf32>
    %127 = math.exp %126 : vector<8x128xf32>
    %cst_56 = arith.constant 1.000000e+00 : f32
    %128 = vector.broadcast %cst_56 : f32 to vector<8x128xf32>
    %129 = arith.addf %128, %127 : vector<8x128xf32>
    %130 = arith.divf %128, %129 : vector<8x128xf32>
    %131 = vector.extract_strided_slice %27 {offsets = [0, 256], sizes = [8, 128], strides = [1, 1]} : vector<8x384xf32> to vector<8x128xf32>
    %132 = vector.extract_strided_slice %114 {offsets = [0, 256], sizes = [8, 128], strides = [1, 1]} : vector<8x384xf32> to vector<8x128xf32>
    %133 = arith.addf %132, %11 : vector<8x128xf32>
    %134 = arith.mulf %122, %133 : vector<8x128xf32>
    %135 = arith.addf %131, %134 : vector<8x128xf32>
    %136 = math.tanh %135 : vector<8x128xf32>
    %cst_57 = arith.constant 1.000000e+00 : f32
    %137 = vector.broadcast %cst_57 : f32 to vector<8x128xf32>
    %138 = arith.subf %137, %130 : vector<8x128xf32>
    %139 = arith.mulf %138, %136 : vector<8x128xf32>
    %140 = arith.mulf %130, %84 : vector<8x128xf32>
    %141 = arith.addf %139, %140 : vector<8x128xf32>
    %142 = tpu.concatenate %141, %109 in 1 : vector<8x128xf32>, vector<8x128xf32> -> vector<8x256xf32>
    %cst_58 = arith.constant dense<0.000000e+00> : vector<8x512xf32>
    %143 = tpu.matmul %142, %5, %cst_58 {dimension_numbers = #tpu.dot_dimension_numbers<[1], [0], [0], [1], [0, 0, 1, 1], [], []>} : vector<8x256xf32>, vector<256x512xf32>, vector<8x512xf32> -> vector<8x512xf32>
    %144 = arith.addf %143, %14 : vector<8x512xf32>
    %145 = vector.extract_strided_slice %144 {offsets = [0, 0], sizes = [8, 128], strides = [1, 1]} : vector<8x512xf32> to vector<8x128xf32>
    %146 = arith.negf %145 : vector<8x128xf32>
    %147 = math.exp %146 : vector<8x128xf32>
    %cst_59 = arith.constant 1.000000e+00 : f32
    %148 = vector.broadcast %cst_59 : f32 to vector<8x128xf32>
    %149 = arith.addf %148, %147 : vector<8x128xf32>
    %150 = arith.divf %148, %149 : vector<8x128xf32>
    %151 = vector.extract_strided_slice %144 {offsets = [0, 128], sizes = [8, 128], strides = [1, 1]} : vector<8x512xf32> to vector<8x128xf32>
    %152 = arith.negf %151 : vector<8x128xf32>
    %153 = math.exp %152 : vector<8x128xf32>
    %cst_60 = arith.constant 1.000000e+00 : f32
    %154 = vector.broadcast %cst_60 : f32 to vector<8x128xf32>
    %155 = arith.addf %154, %153 : vector<8x128xf32>
    %156 = arith.divf %154, %155 : vector<8x128xf32>
    %157 = vector.extract_strided_slice %144 {offsets = [0, 256], sizes = [8, 128], strides = [1, 1]} : vector<8x512xf32> to vector<8x128xf32>
    %158 = vector.extract_strided_slice %144 {offsets = [0, 384], sizes = [8, 128], strides = [1, 1]} : vector<8x512xf32> to vector<8x128xf32>
    %159 = arith.mulf %150, %158 : vector<8x128xf32>
    %160 = arith.addf %157, %159 : vector<8x128xf32>
    %161 = math.tanh %160 : vector<8x128xf32>
    %cst_61 = arith.constant 1.000000e+00 : f32
    %162 = vector.broadcast %cst_61 : f32 to vector<8x128xf32>
    %163 = arith.subf %162, %156 : vector<8x128xf32>
    %164 = arith.mulf %163, %161 : vector<8x128xf32>
    %165 = arith.mulf %156, %109 : vector<8x128xf32>
    %166 = arith.addf %164, %165 : vector<8x128xf32>
    %167 = vector.broadcast %113 : i32 to vector<8x128xi32>
    %168 = arith.cmpi eq, %19, %167 : vector<8x128xi32>
    %169 = arith.select %168, %166, %112 : vector<8x128xi1>, vector<8x128xf32>
    %c2_i32 = arith.constant 2 : i32
    %170 = arith.addi %55, %c2_i32 : i32
    %cst_62 = arith.constant dense<0.000000e+00> : vector<8x384xf32>
    %171 = tpu.matmul %141, %4, %cst_62 {dimension_numbers = #tpu.dot_dimension_numbers<[1], [0], [0], [1], [0, 0, 1, 1], [], []>} : vector<8x128xf32>, vector<128x384xf32>, vector<8x384xf32> -> vector<8x384xf32>
    %172 = vector.extract_strided_slice %31 {offsets = [0, 0], sizes = [8, 128], strides = [1, 1]} : vector<8x384xf32> to vector<8x128xf32>
    %173 = vector.extract_strided_slice %171 {offsets = [0, 0], sizes = [8, 128], strides = [1, 1]} : vector<8x384xf32> to vector<8x128xf32>
    %174 = arith.addf %172, %173 : vector<8x128xf32>
    %175 = arith.negf %174 : vector<8x128xf32>
    %176 = math.exp %175 : vector<8x128xf32>
    %cst_63 = arith.constant 1.000000e+00 : f32
    %177 = vector.broadcast %cst_63 : f32 to vector<8x128xf32>
    %178 = arith.addf %177, %176 : vector<8x128xf32>
    %179 = arith.divf %177, %178 : vector<8x128xf32>
    %180 = vector.extract_strided_slice %31 {offsets = [0, 128], sizes = [8, 128], strides = [1, 1]} : vector<8x384xf32> to vector<8x128xf32>
    %181 = vector.extract_strided_slice %171 {offsets = [0, 128], sizes = [8, 128], strides = [1, 1]} : vector<8x384xf32> to vector<8x128xf32>
    %182 = arith.addf %180, %181 : vector<8x128xf32>
    %183 = arith.negf %182 : vector<8x128xf32>
    %184 = math.exp %183 : vector<8x128xf32>
    %cst_64 = arith.constant 1.000000e+00 : f32
    %185 = vector.broadcast %cst_64 : f32 to vector<8x128xf32>
    %186 = arith.addf %185, %184 : vector<8x128xf32>
    %187 = arith.divf %185, %186 : vector<8x128xf32>
    %188 = vector.extract_strided_slice %31 {offsets = [0, 256], sizes = [8, 128], strides = [1, 1]} : vector<8x384xf32> to vector<8x128xf32>
    %189 = vector.extract_strided_slice %171 {offsets = [0, 256], sizes = [8, 128], strides = [1, 1]} : vector<8x384xf32> to vector<8x128xf32>
    %190 = arith.addf %189, %11 : vector<8x128xf32>
    %191 = arith.mulf %179, %190 : vector<8x128xf32>
    %192 = arith.addf %188, %191 : vector<8x128xf32>
    %193 = math.tanh %192 : vector<8x128xf32>
    %cst_65 = arith.constant 1.000000e+00 : f32
    %194 = vector.broadcast %cst_65 : f32 to vector<8x128xf32>
    %195 = arith.subf %194, %187 : vector<8x128xf32>
    %196 = arith.mulf %195, %193 : vector<8x128xf32>
    %197 = arith.mulf %187, %141 : vector<8x128xf32>
    %198 = arith.addf %196, %197 : vector<8x128xf32>
    %199 = tpu.concatenate %198, %166 in 1 : vector<8x128xf32>, vector<8x128xf32> -> vector<8x256xf32>
    %cst_66 = arith.constant dense<0.000000e+00> : vector<8x512xf32>
    %200 = tpu.matmul %199, %5, %cst_66 {dimension_numbers = #tpu.dot_dimension_numbers<[1], [0], [0], [1], [0, 0, 1, 1], [], []>} : vector<8x256xf32>, vector<256x512xf32>, vector<8x512xf32> -> vector<8x512xf32>
    %201 = arith.addf %200, %14 : vector<8x512xf32>
    %202 = vector.extract_strided_slice %201 {offsets = [0, 0], sizes = [8, 128], strides = [1, 1]} : vector<8x512xf32> to vector<8x128xf32>
    %203 = arith.negf %202 : vector<8x128xf32>
    %204 = math.exp %203 : vector<8x128xf32>
    %cst_67 = arith.constant 1.000000e+00 : f32
    %205 = vector.broadcast %cst_67 : f32 to vector<8x128xf32>
    %206 = arith.addf %205, %204 : vector<8x128xf32>
    %207 = arith.divf %205, %206 : vector<8x128xf32>
    %208 = vector.extract_strided_slice %201 {offsets = [0, 128], sizes = [8, 128], strides = [1, 1]} : vector<8x512xf32> to vector<8x128xf32>
    %209 = arith.negf %208 : vector<8x128xf32>
    %210 = math.exp %209 : vector<8x128xf32>
    %cst_68 = arith.constant 1.000000e+00 : f32
    %211 = vector.broadcast %cst_68 : f32 to vector<8x128xf32>
    %212 = arith.addf %211, %210 : vector<8x128xf32>
    %213 = arith.divf %211, %212 : vector<8x128xf32>
    %214 = vector.extract_strided_slice %201 {offsets = [0, 256], sizes = [8, 128], strides = [1, 1]} : vector<8x512xf32> to vector<8x128xf32>
    %215 = vector.extract_strided_slice %201 {offsets = [0, 384], sizes = [8, 128], strides = [1, 1]} : vector<8x512xf32> to vector<8x128xf32>
    %216 = arith.mulf %207, %215 : vector<8x128xf32>
    %217 = arith.addf %214, %216 : vector<8x128xf32>
    %218 = math.tanh %217 : vector<8x128xf32>
    %cst_69 = arith.constant 1.000000e+00 : f32
    %219 = vector.broadcast %cst_69 : f32 to vector<8x128xf32>
    %220 = arith.subf %219, %213 : vector<8x128xf32>
    %221 = arith.mulf %220, %218 : vector<8x128xf32>
    %222 = arith.mulf %213, %166 : vector<8x128xf32>
    %223 = arith.addf %221, %222 : vector<8x128xf32>
    %224 = vector.broadcast %170 : i32 to vector<8x128xi32>
    %225 = arith.cmpi eq, %19, %224 : vector<8x128xi32>
    %226 = arith.select %225, %223, %169 : vector<8x128xi1>, vector<8x128xf32>
    %c3_i32 = arith.constant 3 : i32
    %227 = arith.addi %55, %c3_i32 : i32
    %cst_70 = arith.constant dense<0.000000e+00> : vector<8x384xf32>
    %228 = tpu.matmul %198, %4, %cst_70 {dimension_numbers = #tpu.dot_dimension_numbers<[1], [0], [0], [1], [0, 0, 1, 1], [], []>} : vector<8x128xf32>, vector<128x384xf32>, vector<8x384xf32> -> vector<8x384xf32>
    %229 = vector.extract_strided_slice %35 {offsets = [0, 0], sizes = [8, 128], strides = [1, 1]} : vector<8x384xf32> to vector<8x128xf32>
    %230 = vector.extract_strided_slice %228 {offsets = [0, 0], sizes = [8, 128], strides = [1, 1]} : vector<8x384xf32> to vector<8x128xf32>
    %231 = arith.addf %229, %230 : vector<8x128xf32>
    %232 = arith.negf %231 : vector<8x128xf32>
    %233 = math.exp %232 : vector<8x128xf32>
    %cst_71 = arith.constant 1.000000e+00 : f32
    %234 = vector.broadcast %cst_71 : f32 to vector<8x128xf32>
    %235 = arith.addf %234, %233 : vector<8x128xf32>
    %236 = arith.divf %234, %235 : vector<8x128xf32>
    %237 = vector.extract_strided_slice %35 {offsets = [0, 128], sizes = [8, 128], strides = [1, 1]} : vector<8x384xf32> to vector<8x128xf32>
    %238 = vector.extract_strided_slice %228 {offsets = [0, 128], sizes = [8, 128], strides = [1, 1]} : vector<8x384xf32> to vector<8x128xf32>
    %239 = arith.addf %237, %238 : vector<8x128xf32>
    %240 = arith.negf %239 : vector<8x128xf32>
    %241 = math.exp %240 : vector<8x128xf32>
    %cst_72 = arith.constant 1.000000e+00 : f32
    %242 = vector.broadcast %cst_72 : f32 to vector<8x128xf32>
    %243 = arith.addf %242, %241 : vector<8x128xf32>
    %244 = arith.divf %242, %243 : vector<8x128xf32>
    %245 = vector.extract_strided_slice %35 {offsets = [0, 256], sizes = [8, 128], strides = [1, 1]} : vector<8x384xf32> to vector<8x128xf32>
    %246 = vector.extract_strided_slice %228 {offsets = [0, 256], sizes = [8, 128], strides = [1, 1]} : vector<8x384xf32> to vector<8x128xf32>
    %247 = arith.addf %246, %11 : vector<8x128xf32>
    %248 = arith.mulf %236, %247 : vector<8x128xf32>
    %249 = arith.addf %245, %248 : vector<8x128xf32>
    %250 = math.tanh %249 : vector<8x128xf32>
    %cst_73 = arith.constant 1.000000e+00 : f32
    %251 = vector.broadcast %cst_73 : f32 to vector<8x128xf32>
    %252 = arith.subf %251, %244 : vector<8x128xf32>
    %253 = arith.mulf %252, %250 : vector<8x128xf32>
    %254 = arith.mulf %244, %198 : vector<8x128xf32>
    %255 = arith.addf %253, %254 : vector<8x128xf32>
    %256 = tpu.concatenate %255, %223 in 1 : vector<8x128xf32>, vector<8x128xf32> -> vector<8x256xf32>
    %cst_74 = arith.constant dense<0.000000e+00> : vector<8x512xf32>
    %257 = tpu.matmul %256, %5, %cst_74 {dimension_numbers = #tpu.dot_dimension_numbers<[1], [0], [0], [1], [0, 0, 1, 1], [], []>} : vector<8x256xf32>, vector<256x512xf32>, vector<8x512xf32> -> vector<8x512xf32>
    %258 = arith.addf %257, %14 : vector<8x512xf32>
    %259 = vector.extract_strided_slice %258 {offsets = [0, 0], sizes = [8, 128], strides = [1, 1]} : vector<8x512xf32> to vector<8x128xf32>
    %260 = arith.negf %259 : vector<8x128xf32>
    %261 = math.exp %260 : vector<8x128xf32>
    %cst_75 = arith.constant 1.000000e+00 : f32
    %262 = vector.broadcast %cst_75 : f32 to vector<8x128xf32>
    %263 = arith.addf %262, %261 : vector<8x128xf32>
    %264 = arith.divf %262, %263 : vector<8x128xf32>
    %265 = vector.extract_strided_slice %258 {offsets = [0, 128], sizes = [8, 128], strides = [1, 1]} : vector<8x512xf32> to vector<8x128xf32>
    %266 = arith.negf %265 : vector<8x128xf32>
    %267 = math.exp %266 : vector<8x128xf32>
    %cst_76 = arith.constant 1.000000e+00 : f32
    %268 = vector.broadcast %cst_76 : f32 to vector<8x128xf32>
    %269 = arith.addf %268, %267 : vector<8x128xf32>
    %270 = arith.divf %268, %269 : vector<8x128xf32>
    %271 = vector.extract_strided_slice %258 {offsets = [0, 256], sizes = [8, 128], strides = [1, 1]} : vector<8x512xf32> to vector<8x128xf32>
    %272 = vector.extract_strided_slice %258 {offsets = [0, 384], sizes = [8, 128], strides = [1, 1]} : vector<8x512xf32> to vector<8x128xf32>
    %273 = arith.mulf %264, %272 : vector<8x128xf32>
    %274 = arith.addf %271, %273 : vector<8x128xf32>
    %275 = math.tanh %274 : vector<8x128xf32>
    %cst_77 = arith.constant 1.000000e+00 : f32
    %276 = vector.broadcast %cst_77 : f32 to vector<8x128xf32>
    %277 = arith.subf %276, %270 : vector<8x128xf32>
    %278 = arith.mulf %277, %275 : vector<8x128xf32>
    %279 = arith.mulf %270, %223 : vector<8x128xf32>
    %280 = arith.addf %278, %279 : vector<8x128xf32>
    %281 = vector.broadcast %227 : i32 to vector<8x128xi32>
    %282 = arith.cmpi eq, %19, %281 : vector<8x128xi32>
    %283 = arith.select %282, %280, %226 : vector<8x128xi1>, vector<8x128xf32>
    %c4_i32 = arith.constant 4 : i32
    %284 = arith.addi %55, %c4_i32 : i32
    %cst_78 = arith.constant dense<0.000000e+00> : vector<8x384xf32>
    %285 = tpu.matmul %255, %4, %cst_78 {dimension_numbers = #tpu.dot_dimension_numbers<[1], [0], [0], [1], [0, 0, 1, 1], [], []>} : vector<8x128xf32>, vector<128x384xf32>, vector<8x384xf32> -> vector<8x384xf32>
    %286 = vector.extract_strided_slice %39 {offsets = [0, 0], sizes = [8, 128], strides = [1, 1]} : vector<8x384xf32> to vector<8x128xf32>
    %287 = vector.extract_strided_slice %285 {offsets = [0, 0], sizes = [8, 128], strides = [1, 1]} : vector<8x384xf32> to vector<8x128xf32>
    %288 = arith.addf %286, %287 : vector<8x128xf32>
    %289 = arith.negf %288 : vector<8x128xf32>
    %290 = math.exp %289 : vector<8x128xf32>
    %cst_79 = arith.constant 1.000000e+00 : f32
    %291 = vector.broadcast %cst_79 : f32 to vector<8x128xf32>
    %292 = arith.addf %291, %290 : vector<8x128xf32>
    %293 = arith.divf %291, %292 : vector<8x128xf32>
    %294 = vector.extract_strided_slice %39 {offsets = [0, 128], sizes = [8, 128], strides = [1, 1]} : vector<8x384xf32> to vector<8x128xf32>
    %295 = vector.extract_strided_slice %285 {offsets = [0, 128], sizes = [8, 128], strides = [1, 1]} : vector<8x384xf32> to vector<8x128xf32>
    %296 = arith.addf %294, %295 : vector<8x128xf32>
    %297 = arith.negf %296 : vector<8x128xf32>
    %298 = math.exp %297 : vector<8x128xf32>
    %cst_80 = arith.constant 1.000000e+00 : f32
    %299 = vector.broadcast %cst_80 : f32 to vector<8x128xf32>
    %300 = arith.addf %299, %298 : vector<8x128xf32>
    %301 = arith.divf %299, %300 : vector<8x128xf32>
    %302 = vector.extract_strided_slice %39 {offsets = [0, 256], sizes = [8, 128], strides = [1, 1]} : vector<8x384xf32> to vector<8x128xf32>
    %303 = vector.extract_strided_slice %285 {offsets = [0, 256], sizes = [8, 128], strides = [1, 1]} : vector<8x384xf32> to vector<8x128xf32>
    %304 = arith.addf %303, %11 : vector<8x128xf32>
    %305 = arith.mulf %293, %304 : vector<8x128xf32>
    %306 = arith.addf %302, %305 : vector<8x128xf32>
    %307 = math.tanh %306 : vector<8x128xf32>
    %cst_81 = arith.constant 1.000000e+00 : f32
    %308 = vector.broadcast %cst_81 : f32 to vector<8x128xf32>
    %309 = arith.subf %308, %301 : vector<8x128xf32>
    %310 = arith.mulf %309, %307 : vector<8x128xf32>
    %311 = arith.mulf %301, %255 : vector<8x128xf32>
    %312 = arith.addf %310, %311 : vector<8x128xf32>
    %313 = tpu.concatenate %312, %280 in 1 : vector<8x128xf32>, vector<8x128xf32> -> vector<8x256xf32>
    %cst_82 = arith.constant dense<0.000000e+00> : vector<8x512xf32>
    %314 = tpu.matmul %313, %5, %cst_82 {dimension_numbers = #tpu.dot_dimension_numbers<[1], [0], [0], [1], [0, 0, 1, 1], [], []>} : vector<8x256xf32>, vector<256x512xf32>, vector<8x512xf32> -> vector<8x512xf32>
    %315 = arith.addf %314, %14 : vector<8x512xf32>
    %316 = vector.extract_strided_slice %315 {offsets = [0, 0], sizes = [8, 128], strides = [1, 1]} : vector<8x512xf32> to vector<8x128xf32>
    %317 = arith.negf %316 : vector<8x128xf32>
    %318 = math.exp %317 : vector<8x128xf32>
    %cst_83 = arith.constant 1.000000e+00 : f32
    %319 = vector.broadcast %cst_83 : f32 to vector<8x128xf32>
    %320 = arith.addf %319, %318 : vector<8x128xf32>
    %321 = arith.divf %319, %320 : vector<8x128xf32>
    %322 = vector.extract_strided_slice %315 {offsets = [0, 128], sizes = [8, 128], strides = [1, 1]} : vector<8x512xf32> to vector<8x128xf32>
    %323 = arith.negf %322 : vector<8x128xf32>
    %324 = math.exp %323 : vector<8x128xf32>
    %cst_84 = arith.constant 1.000000e+00 : f32
    %325 = vector.broadcast %cst_84 : f32 to vector<8x128xf32>
    %326 = arith.addf %325, %324 : vector<8x128xf32>
    %327 = arith.divf %325, %326 : vector<8x128xf32>
    %328 = vector.extract_strided_slice %315 {offsets = [0, 256], sizes = [8, 128], strides = [1, 1]} : vector<8x512xf32> to vector<8x128xf32>
    %329 = vector.extract_strided_slice %315 {offsets = [0, 384], sizes = [8, 128], strides = [1, 1]} : vector<8x512xf32> to vector<8x128xf32>
    %330 = arith.mulf %321, %329 : vector<8x128xf32>
    %331 = arith.addf %328, %330 : vector<8x128xf32>
    %332 = math.tanh %331 : vector<8x128xf32>
    %cst_85 = arith.constant 1.000000e+00 : f32
    %333 = vector.broadcast %cst_85 : f32 to vector<8x128xf32>
    %334 = arith.subf %333, %327 : vector<8x128xf32>
    %335 = arith.mulf %334, %332 : vector<8x128xf32>
    %336 = arith.mulf %327, %280 : vector<8x128xf32>
    %337 = arith.addf %335, %336 : vector<8x128xf32>
    %338 = vector.broadcast %284 : i32 to vector<8x128xi32>
    %339 = arith.cmpi eq, %19, %338 : vector<8x128xi32>
    %340 = arith.select %339, %337, %283 : vector<8x128xi1>, vector<8x128xf32>
    %c5_i32 = arith.constant 5 : i32
    %341 = arith.addi %55, %c5_i32 : i32
    %cst_86 = arith.constant dense<0.000000e+00> : vector<8x384xf32>
    %342 = tpu.matmul %312, %4, %cst_86 {dimension_numbers = #tpu.dot_dimension_numbers<[1], [0], [0], [1], [0, 0, 1, 1], [], []>} : vector<8x128xf32>, vector<128x384xf32>, vector<8x384xf32> -> vector<8x384xf32>
    %343 = vector.extract_strided_slice %43 {offsets = [0, 0], sizes = [8, 128], strides = [1, 1]} : vector<8x384xf32> to vector<8x128xf32>
    %344 = vector.extract_strided_slice %342 {offsets = [0, 0], sizes = [8, 128], strides = [1, 1]} : vector<8x384xf32> to vector<8x128xf32>
    %345 = arith.addf %343, %344 : vector<8x128xf32>
    %346 = arith.negf %345 : vector<8x128xf32>
    %347 = math.exp %346 : vector<8x128xf32>
    %cst_87 = arith.constant 1.000000e+00 : f32
    %348 = vector.broadcast %cst_87 : f32 to vector<8x128xf32>
    %349 = arith.addf %348, %347 : vector<8x128xf32>
    %350 = arith.divf %348, %349 : vector<8x128xf32>
    %351 = vector.extract_strided_slice %43 {offsets = [0, 128], sizes = [8, 128], strides = [1, 1]} : vector<8x384xf32> to vector<8x128xf32>
    %352 = vector.extract_strided_slice %342 {offsets = [0, 128], sizes = [8, 128], strides = [1, 1]} : vector<8x384xf32> to vector<8x128xf32>
    %353 = arith.addf %351, %352 : vector<8x128xf32>
    %354 = arith.negf %353 : vector<8x128xf32>
    %355 = math.exp %354 : vector<8x128xf32>
    %cst_88 = arith.constant 1.000000e+00 : f32
    %356 = vector.broadcast %cst_88 : f32 to vector<8x128xf32>
    %357 = arith.addf %356, %355 : vector<8x128xf32>
    %358 = arith.divf %356, %357 : vector<8x128xf32>
    %359 = vector.extract_strided_slice %43 {offsets = [0, 256], sizes = [8, 128], strides = [1, 1]} : vector<8x384xf32> to vector<8x128xf32>
    %360 = vector.extract_strided_slice %342 {offsets = [0, 256], sizes = [8, 128], strides = [1, 1]} : vector<8x384xf32> to vector<8x128xf32>
    %361 = arith.addf %360, %11 : vector<8x128xf32>
    %362 = arith.mulf %350, %361 : vector<8x128xf32>
    %363 = arith.addf %359, %362 : vector<8x128xf32>
    %364 = math.tanh %363 : vector<8x128xf32>
    %cst_89 = arith.constant 1.000000e+00 : f32
    %365 = vector.broadcast %cst_89 : f32 to vector<8x128xf32>
    %366 = arith.subf %365, %358 : vector<8x128xf32>
    %367 = arith.mulf %366, %364 : vector<8x128xf32>
    %368 = arith.mulf %358, %312 : vector<8x128xf32>
    %369 = arith.addf %367, %368 : vector<8x128xf32>
    %370 = tpu.concatenate %369, %337 in 1 : vector<8x128xf32>, vector<8x128xf32> -> vector<8x256xf32>
    %cst_90 = arith.constant dense<0.000000e+00> : vector<8x512xf32>
    %371 = tpu.matmul %370, %5, %cst_90 {dimension_numbers = #tpu.dot_dimension_numbers<[1], [0], [0], [1], [0, 0, 1, 1], [], []>} : vector<8x256xf32>, vector<256x512xf32>, vector<8x512xf32> -> vector<8x512xf32>
    %372 = arith.addf %371, %14 : vector<8x512xf32>
    %373 = vector.extract_strided_slice %372 {offsets = [0, 0], sizes = [8, 128], strides = [1, 1]} : vector<8x512xf32> to vector<8x128xf32>
    %374 = arith.negf %373 : vector<8x128xf32>
    %375 = math.exp %374 : vector<8x128xf32>
    %cst_91 = arith.constant 1.000000e+00 : f32
    %376 = vector.broadcast %cst_91 : f32 to vector<8x128xf32>
    %377 = arith.addf %376, %375 : vector<8x128xf32>
    %378 = arith.divf %376, %377 : vector<8x128xf32>
    %379 = vector.extract_strided_slice %372 {offsets = [0, 128], sizes = [8, 128], strides = [1, 1]} : vector<8x512xf32> to vector<8x128xf32>
    %380 = arith.negf %379 : vector<8x128xf32>
    %381 = math.exp %380 : vector<8x128xf32>
    %cst_92 = arith.constant 1.000000e+00 : f32
    %382 = vector.broadcast %cst_92 : f32 to vector<8x128xf32>
    %383 = arith.addf %382, %381 : vector<8x128xf32>
    %384 = arith.divf %382, %383 : vector<8x128xf32>
    %385 = vector.extract_strided_slice %372 {offsets = [0, 256], sizes = [8, 128], strides = [1, 1]} : vector<8x512xf32> to vector<8x128xf32>
    %386 = vector.extract_strided_slice %372 {offsets = [0, 384], sizes = [8, 128], strides = [1, 1]} : vector<8x512xf32> to vector<8x128xf32>
    %387 = arith.mulf %378, %386 : vector<8x128xf32>
    %388 = arith.addf %385, %387 : vector<8x128xf32>
    %389 = math.tanh %388 : vector<8x128xf32>
    %cst_93 = arith.constant 1.000000e+00 : f32
    %390 = vector.broadcast %cst_93 : f32 to vector<8x128xf32>
    %391 = arith.subf %390, %384 : vector<8x128xf32>
    %392 = arith.mulf %391, %389 : vector<8x128xf32>
    %393 = arith.mulf %384, %337 : vector<8x128xf32>
    %394 = arith.addf %392, %393 : vector<8x128xf32>
    %395 = vector.broadcast %341 : i32 to vector<8x128xi32>
    %396 = arith.cmpi eq, %19, %395 : vector<8x128xi32>
    %397 = arith.select %396, %394, %340 : vector<8x128xi1>, vector<8x128xf32>
    %c6_i32 = arith.constant 6 : i32
    %398 = arith.addi %55, %c6_i32 : i32
    %cst_94 = arith.constant dense<0.000000e+00> : vector<8x384xf32>
    %399 = tpu.matmul %369, %4, %cst_94 {dimension_numbers = #tpu.dot_dimension_numbers<[1], [0], [0], [1], [0, 0, 1, 1], [], []>} : vector<8x128xf32>, vector<128x384xf32>, vector<8x384xf32> -> vector<8x384xf32>
    %400 = vector.extract_strided_slice %47 {offsets = [0, 0], sizes = [8, 128], strides = [1, 1]} : vector<8x384xf32> to vector<8x128xf32>
    %401 = vector.extract_strided_slice %399 {offsets = [0, 0], sizes = [8, 128], strides = [1, 1]} : vector<8x384xf32> to vector<8x128xf32>
    %402 = arith.addf %400, %401 : vector<8x128xf32>
    %403 = arith.negf %402 : vector<8x128xf32>
    %404 = math.exp %403 : vector<8x128xf32>
    %cst_95 = arith.constant 1.000000e+00 : f32
    %405 = vector.broadcast %cst_95 : f32 to vector<8x128xf32>
    %406 = arith.addf %405, %404 : vector<8x128xf32>
    %407 = arith.divf %405, %406 : vector<8x128xf32>
    %408 = vector.extract_strided_slice %47 {offsets = [0, 128], sizes = [8, 128], strides = [1, 1]} : vector<8x384xf32> to vector<8x128xf32>
    %409 = vector.extract_strided_slice %399 {offsets = [0, 128], sizes = [8, 128], strides = [1, 1]} : vector<8x384xf32> to vector<8x128xf32>
    %410 = arith.addf %408, %409 : vector<8x128xf32>
    %411 = arith.negf %410 : vector<8x128xf32>
    %412 = math.exp %411 : vector<8x128xf32>
    %cst_96 = arith.constant 1.000000e+00 : f32
    %413 = vector.broadcast %cst_96 : f32 to vector<8x128xf32>
    %414 = arith.addf %413, %412 : vector<8x128xf32>
    %415 = arith.divf %413, %414 : vector<8x128xf32>
    %416 = vector.extract_strided_slice %47 {offsets = [0, 256], sizes = [8, 128], strides = [1, 1]} : vector<8x384xf32> to vector<8x128xf32>
    %417 = vector.extract_strided_slice %399 {offsets = [0, 256], sizes = [8, 128], strides = [1, 1]} : vector<8x384xf32> to vector<8x128xf32>
    %418 = arith.addf %417, %11 : vector<8x128xf32>
    %419 = arith.mulf %407, %418 : vector<8x128xf32>
    %420 = arith.addf %416, %419 : vector<8x128xf32>
    %421 = math.tanh %420 : vector<8x128xf32>
    %cst_97 = arith.constant 1.000000e+00 : f32
    %422 = vector.broadcast %cst_97 : f32 to vector<8x128xf32>
    %423 = arith.subf %422, %415 : vector<8x128xf32>
    %424 = arith.mulf %423, %421 : vector<8x128xf32>
    %425 = arith.mulf %415, %369 : vector<8x128xf32>
    %426 = arith.addf %424, %425 : vector<8x128xf32>
    %427 = tpu.concatenate %426, %394 in 1 : vector<8x128xf32>, vector<8x128xf32> -> vector<8x256xf32>
    %cst_98 = arith.constant dense<0.000000e+00> : vector<8x512xf32>
    %428 = tpu.matmul %427, %5, %cst_98 {dimension_numbers = #tpu.dot_dimension_numbers<[1], [0], [0], [1], [0, 0, 1, 1], [], []>} : vector<8x256xf32>, vector<256x512xf32>, vector<8x512xf32> -> vector<8x512xf32>
    %429 = arith.addf %428, %14 : vector<8x512xf32>
    %430 = vector.extract_strided_slice %429 {offsets = [0, 0], sizes = [8, 128], strides = [1, 1]} : vector<8x512xf32> to vector<8x128xf32>
    %431 = arith.negf %430 : vector<8x128xf32>
    %432 = math.exp %431 : vector<8x128xf32>
    %cst_99 = arith.constant 1.000000e+00 : f32
    %433 = vector.broadcast %cst_99 : f32 to vector<8x128xf32>
    %434 = arith.addf %433, %432 : vector<8x128xf32>
    %435 = arith.divf %433, %434 : vector<8x128xf32>
    %436 = vector.extract_strided_slice %429 {offsets = [0, 128], sizes = [8, 128], strides = [1, 1]} : vector<8x512xf32> to vector<8x128xf32>
    %437 = arith.negf %436 : vector<8x128xf32>
    %438 = math.exp %437 : vector<8x128xf32>
    %cst_100 = arith.constant 1.000000e+00 : f32
    %439 = vector.broadcast %cst_100 : f32 to vector<8x128xf32>
    %440 = arith.addf %439, %438 : vector<8x128xf32>
    %441 = arith.divf %439, %440 : vector<8x128xf32>
    %442 = vector.extract_strided_slice %429 {offsets = [0, 256], sizes = [8, 128], strides = [1, 1]} : vector<8x512xf32> to vector<8x128xf32>
    %443 = vector.extract_strided_slice %429 {offsets = [0, 384], sizes = [8, 128], strides = [1, 1]} : vector<8x512xf32> to vector<8x128xf32>
    %444 = arith.mulf %435, %443 : vector<8x128xf32>
    %445 = arith.addf %442, %444 : vector<8x128xf32>
    %446 = math.tanh %445 : vector<8x128xf32>
    %cst_101 = arith.constant 1.000000e+00 : f32
    %447 = vector.broadcast %cst_101 : f32 to vector<8x128xf32>
    %448 = arith.subf %447, %441 : vector<8x128xf32>
    %449 = arith.mulf %448, %446 : vector<8x128xf32>
    %450 = arith.mulf %441, %394 : vector<8x128xf32>
    %451 = arith.addf %449, %450 : vector<8x128xf32>
    %452 = vector.broadcast %398 : i32 to vector<8x128xi32>
    %453 = arith.cmpi eq, %19, %452 : vector<8x128xi32>
    %454 = arith.select %453, %451, %397 : vector<8x128xi1>, vector<8x128xf32>
    %c7_i32 = arith.constant 7 : i32
    %455 = arith.addi %55, %c7_i32 : i32
    %cst_102 = arith.constant dense<0.000000e+00> : vector<8x384xf32>
    %456 = tpu.matmul %426, %4, %cst_102 {dimension_numbers = #tpu.dot_dimension_numbers<[1], [0], [0], [1], [0, 0, 1, 1], [], []>} : vector<8x128xf32>, vector<128x384xf32>, vector<8x384xf32> -> vector<8x384xf32>
    %457 = vector.extract_strided_slice %51 {offsets = [0, 0], sizes = [8, 128], strides = [1, 1]} : vector<8x384xf32> to vector<8x128xf32>
    %458 = vector.extract_strided_slice %456 {offsets = [0, 0], sizes = [8, 128], strides = [1, 1]} : vector<8x384xf32> to vector<8x128xf32>
    %459 = arith.addf %457, %458 : vector<8x128xf32>
    %460 = arith.negf %459 : vector<8x128xf32>
    %461 = math.exp %460 : vector<8x128xf32>
    %cst_103 = arith.constant 1.000000e+00 : f32
    %462 = vector.broadcast %cst_103 : f32 to vector<8x128xf32>
    %463 = arith.addf %462, %461 : vector<8x128xf32>
    %464 = arith.divf %462, %463 : vector<8x128xf32>
    %465 = vector.extract_strided_slice %51 {offsets = [0, 128], sizes = [8, 128], strides = [1, 1]} : vector<8x384xf32> to vector<8x128xf32>
    %466 = vector.extract_strided_slice %456 {offsets = [0, 128], sizes = [8, 128], strides = [1, 1]} : vector<8x384xf32> to vector<8x128xf32>
    %467 = arith.addf %465, %466 : vector<8x128xf32>
    %468 = arith.negf %467 : vector<8x128xf32>
    %469 = math.exp %468 : vector<8x128xf32>
    %cst_104 = arith.constant 1.000000e+00 : f32
    %470 = vector.broadcast %cst_104 : f32 to vector<8x128xf32>
    %471 = arith.addf %470, %469 : vector<8x128xf32>
    %472 = arith.divf %470, %471 : vector<8x128xf32>
    %473 = vector.extract_strided_slice %51 {offsets = [0, 256], sizes = [8, 128], strides = [1, 1]} : vector<8x384xf32> to vector<8x128xf32>
    %474 = vector.extract_strided_slice %456 {offsets = [0, 256], sizes = [8, 128], strides = [1, 1]} : vector<8x384xf32> to vector<8x128xf32>
    %475 = arith.addf %474, %11 : vector<8x128xf32>
    %476 = arith.mulf %464, %475 : vector<8x128xf32>
    %477 = arith.addf %473, %476 : vector<8x128xf32>
    %478 = math.tanh %477 : vector<8x128xf32>
    %cst_105 = arith.constant 1.000000e+00 : f32
    %479 = vector.broadcast %cst_105 : f32 to vector<8x128xf32>
    %480 = arith.subf %479, %472 : vector<8x128xf32>
    %481 = arith.mulf %480, %478 : vector<8x128xf32>
    %482 = arith.mulf %472, %426 : vector<8x128xf32>
    %483 = arith.addf %481, %482 : vector<8x128xf32>
    %484 = tpu.concatenate %483, %451 in 1 : vector<8x128xf32>, vector<8x128xf32> -> vector<8x256xf32>
    %cst_106 = arith.constant dense<0.000000e+00> : vector<8x512xf32>
    %485 = tpu.matmul %484, %5, %cst_106 {dimension_numbers = #tpu.dot_dimension_numbers<[1], [0], [0], [1], [0, 0, 1, 1], [], []>} : vector<8x256xf32>, vector<256x512xf32>, vector<8x512xf32> -> vector<8x512xf32>
    %486 = arith.addf %485, %14 : vector<8x512xf32>
    %487 = vector.extract_strided_slice %486 {offsets = [0, 0], sizes = [8, 128], strides = [1, 1]} : vector<8x512xf32> to vector<8x128xf32>
    %488 = arith.negf %487 : vector<8x128xf32>
    %489 = math.exp %488 : vector<8x128xf32>
    %cst_107 = arith.constant 1.000000e+00 : f32
    %490 = vector.broadcast %cst_107 : f32 to vector<8x128xf32>
    %491 = arith.addf %490, %489 : vector<8x128xf32>
    %492 = arith.divf %490, %491 : vector<8x128xf32>
    %493 = vector.extract_strided_slice %486 {offsets = [0, 128], sizes = [8, 128], strides = [1, 1]} : vector<8x512xf32> to vector<8x128xf32>
    %494 = arith.negf %493 : vector<8x128xf32>
    %495 = math.exp %494 : vector<8x128xf32>
    %cst_108 = arith.constant 1.000000e+00 : f32
    %496 = vector.broadcast %cst_108 : f32 to vector<8x128xf32>
    %497 = arith.addf %496, %495 : vector<8x128xf32>
    %498 = arith.divf %496, %497 : vector<8x128xf32>
    %499 = vector.extract_strided_slice %486 {offsets = [0, 256], sizes = [8, 128], strides = [1, 1]} : vector<8x512xf32> to vector<8x128xf32>
    %500 = vector.extract_strided_slice %486 {offsets = [0, 384], sizes = [8, 128], strides = [1, 1]} : vector<8x512xf32> to vector<8x128xf32>
    %501 = arith.mulf %492, %500 : vector<8x128xf32>
    %502 = arith.addf %499, %501 : vector<8x128xf32>
    %503 = math.tanh %502 : vector<8x128xf32>
    %cst_109 = arith.constant 1.000000e+00 : f32
    %504 = vector.broadcast %cst_109 : f32 to vector<8x128xf32>
    %505 = arith.subf %504, %498 : vector<8x128xf32>
    %506 = arith.mulf %505, %503 : vector<8x128xf32>
    %507 = arith.mulf %498, %451 : vector<8x128xf32>
    %508 = arith.addf %506, %507 : vector<8x128xf32>
    %509 = vector.broadcast %455 : i32 to vector<8x128xi32>
    %510 = arith.cmpi eq, %19, %509 : vector<8x128xi32>
    %511 = arith.select %510, %508, %454 : vector<8x128xi1>, vector<8x128xf32>
    %c0_110 = arith.constant 0 : index
    %c0_111 = arith.constant 0 : index
    %512 = vector.load %arg11[%c0_110, %c0_111] : memref<8x128xf32, #tpu.memory_space<vmem>>, vector<8x128xf32>
    tpu.vector_store %arg11[%c0_110, %c0_111], %483 {strides = array<i32>} : memref<8x128xf32, #tpu.memory_space<vmem>>, vector<8x128xf32>,
    %c0_112 = arith.constant 0 : index
    %c0_113 = arith.constant 0 : index
    %513 = vector.load %arg12[%c0_112, %c0_113] : memref<8x128xf32, #tpu.memory_space<vmem>>, vector<8x128xf32>
    tpu.vector_store %arg12[%c0_112, %c0_113], %508 {strides = array<i32>} : memref<8x128xf32, #tpu.memory_space<vmem>>, vector<8x128xf32>,
    %c0_114 = arith.constant 0 : index
    %c0_115 = arith.constant 0 : index
    %514 = vector.load %arg13[%c0_114, %c0_115] : memref<8x128xf32, #tpu.memory_space<vmem>>, vector<8x128xf32>
    tpu.vector_store %arg13[%c0_114, %c0_115], %511 {strides = array<i32>} : memref<8x128xf32, #tpu.memory_space<vmem>>, vector<8x128xf32>,
    %c0_i32_116 = arith.constant 0 : i32
    %515 = arith.cmpi eq, %arg1, %c0_i32_116 : i32
    %516 = arith.extui %515 : i1 to i32
    %c0_i32_117 = arith.constant 0 : i32
    %517 = arith.cmpi ne, %516, %c0_i32_117 : i32
    scf.if %517 {
      %518 = arith.mulf %511, %511 : vector<8x128xf32>
      %cst_118 = arith.constant dense<0.000000e+00> : vector<8xf32>
      %519 = vector.multi_reduction <add>, %518, %cst_118 [1] : vector<8x128xf32> to vector<8xf32>
      %520 = vector.shape_cast %519 : vector<8xf32> to vector<8x1xf32>
      %cst_119 = arith.constant 9.99999996E-13 : f32
      %521 = vector.broadcast %cst_119 : f32 to vector<8x1xf32>
      %522 = arith.maximumf %520, %521 : vector<8x1xf32>
      %523 = math.rsqrt %522 : vector<8x1xf32>
      %524 = vector.broadcast %523 : vector<8x1xf32> to vector<8x128xf32>
      %525 = arith.mulf %511, %524 : vector<8x128xf32>
      %c0_120 = arith.constant 0 : index
      %c0_121 = arith.constant 0 : index
      %526 = vector.load %arg10[%c0_120, %c0_121] : memref<8x128xf32, #tpu.memory_space<vmem>>, vector<8x128xf32>
      tpu.vector_store %arg10[%c0_120, %c0_121], %525 {strides = array<i32>} : memref<8x128xf32, #tpu.memory_space<vmem>>, vector<8x128xf32>,
    } else {
    }
    return
  }
  func.func @transform_0(%arg0: i32, %arg1: i32) -> (i32, i32, i32) {
    %c0_i32 = arith.constant 0 : i32
    %c0_i32_0 = arith.constant 0 : i32
    return %arg1, %arg0, %c0_i32 : i32, i32, i32
  }
  func.func @transform_1(%arg0: i32, %arg1: i32) -> (i32, i32) {
    %c0_i32 = arith.constant 0 : i32
    %c0_i32_0 = arith.constant 0 : i32
    return %arg0, %c0_i32 : i32, i32
  }
  func.func @transform_2(%arg0: i32, %arg1: i32) -> (i32, i32) {
    %c0_i32 = arith.constant 0 : i32
    %c0_i32_0 = arith.constant 0 : i32
    %c0_i32_1 = arith.constant 0 : i32
    return %c0_i32, %c0_i32_0 : i32, i32
  }
  func.func @transform_3(%arg0: i32, %arg1: i32) -> (i32, i32) {
    %c0_i32 = arith.constant 0 : i32
    %c0_i32_0 = arith.constant 0 : i32
    %c0_i32_1 = arith.constant 0 : i32
    return %c0_i32, %c0_i32_0 : i32, i32
  }
  func.func @transform_4(%arg0: i32, %arg1: i32) -> (i32, i32) {
    %c0_i32 = arith.constant 0 : i32
    %c0_i32_0 = arith.constant 0 : i32
    %c0_i32_1 = arith.constant 0 : i32
    return %c0_i32, %c0_i32_0 : i32, i32
  }
  func.func @transform_5(%arg0: i32, %arg1: i32) -> (i32, i32) {
    %c0_i32 = arith.constant 0 : i32
    %c0_i32_0 = arith.constant 0 : i32
    %c0_i32_1 = arith.constant 0 : i32
    return %c0_i32, %c0_i32_0 : i32, i32
  }
  func.func @transform_6(%arg0: i32, %arg1: i32) -> (i32, i32) {
    %c0_i32 = arith.constant 0 : i32
    %c0_i32_0 = arith.constant 0 : i32
    %c0_i32_1 = arith.constant 0 : i32
    return %c0_i32, %c0_i32_0 : i32, i32
  }
  func.func @transform_7(%arg0: i32, %arg1: i32) -> (i32, i32) {
    %c0_i32 = arith.constant 0 : i32
    %c0_i32_0 = arith.constant 0 : i32
    %c0_i32_1 = arith.constant 0 : i32
    return %c0_i32, %c0_i32_0 : i32, i32
  }
  func.func @transform_8(%arg0: i32, %arg1: i32) -> (i32, i32) {
    %c0_i32 = arith.constant 0 : i32
    %c0_i32_0 = arith.constant 0 : i32
    return %arg0, %c0_i32 : i32, i32
  }
}

</mosaic_0001>

<llo_original>
// kernel: tpu_custom_call.1
$region0: #{tpu_custom_call.1}
  #allocation0 [shape = 'u32[]', space=smem, size = 0x4, offset = 0x4, fixed_abs, tag = 'smem constant byte address 0x4 - core index']
  #allocation1 [shape = 'u32[144,128]{1,0:T(1,128)}', space=vmem, size = 0x12000, scoped, tag = 'internal scratch']
  #allocation2 [shape = 'f32[8,128]{1,0:T(8,128)}', space=vmem, size = 0x1000, scoped, tag = 'scratch operand']
  #allocation3 [shape = 'f32[8,128]{1,0:T(8,128)}', space=vmem, size = 0x1000, scoped, tag = 'scratch operand']
  #allocation4 [shape = 'f32[8,128]{1,0:T(8,128)}', space=vmem, size = 0x1000, scoped, tag = 'scratch operand']
  %s0 = inlined_call_operand.hbm [shape: f32[8,8,32], index: 0, kind: input, shape index: {}]
  %s1 = inlined_call_operand.vmem [shape: s32[8,1], index: 1, kind: input, shape index: {}]
  %s2 = inlined_call_operand.hbm [shape: f32[32,384], index: 2, kind: input, shape index: {}]
  %s3 = inlined_call_operand.hbm [shape: f32[128,384], index: 3, kind: input, shape index: {}]
  %s4 = inlined_call_operand.vmem [shape: f32[1,384], index: 4, kind: input, shape index: {}]
  %s5 = inlined_call_operand.vmem [shape: f32[1,128], index: 5, kind: input, shape index: {}]
  %s6 = inlined_call_operand.hbm [shape: f32[256,512], index: 6, kind: input, shape index: {}]
  %s7 = inlined_call_operand.vmem [shape: f32[1,512], index: 7, kind: input, shape index: {}]
  %s8 = inlined_call_operand.hbm [shape: f32[8,128], index: 8, kind: output, shape index: {}]
  %s9 = sld [smem:[#allocation0]]
  $region66: #{tpu_custom_call.1} parent=0
    _
  %s11 = ssub.s32 1, %s9
  %s12 = scalar_select 0, %s11, %s9
  $region1: #{tpu_custom_call.1} parent=0
    #allocation5 [shape = 'u8[32768]{0}', space=vmem, size = 0x8000, scoped, tag = 'input window, operand 0, single buffered']
    #allocation6 [shape = 's32[1]{0}', space=sflag, size = 0x4, scoped, tag = 'scoped memory for tpu_custom_call.1']
    #allocation7 [shape = 's32[1]{0}', space=sflag, size = 0x4, scoped, tag = 'scoped memory for tpu_custom_call.1']
    #allocation8 [shape = 'u8[49152]{0}', space=vmem, size = 0xc000, scoped, tag = 'input window, operand 2, single buffered']
    #allocation9 [shape = 's32[1]{0}', space=sflag, size = 0x4, scoped, tag = 'scoped memory for tpu_custom_call.1']
    #allocation10 [shape = 'u8[196608]{0}', space=vmem, size = 0x30000, scoped, tag = 'input window, operand 3, single buffered']
    #allocation11 [shape = 'u8[524288]{0}', space=vmem, size = 0x80000, scoped, tag = 'input window, operand 6, single buffered']
    #allocation12 [shape = 's32[1]{0}', space=sflag, size = 0x4, scoped, tag = 'scoped memory for tpu_custom_call.1']
    #allocation13 [shape = 'u8[4096]{0}', space=vmem, size = 0x1000, scoped, tag = 'output window, operand 0, single buffered']
    %13 = vsyncpa [#allocation6], 0
    %14 = vsyncpa [#allocation9], 0
    %15 = vsyncpa [#allocation12], 0
    %16 = vsyncpa [#allocation7], 0
    // Predicated region
    $region2: #{tpu_custom_call.1} parent=1 // pred_check
      _
    $region3: #{tpu_custom_call.1} parent=1 // pred_check_branch
      %18 = sbr.rel (0) target = $region5
    $region4: #{tpu_custom_call.1} parent=1 // pred_region
      %s20 = ssub.s32 1024, 1024
      %21 = vsyncadd [#allocation6], %s20
      %s22 = sshll.u32 [#allocation5], 4
      %s23 = int_to_ptr.vmem [resolvable:$true] %s22
      %28 = dma.hbm_to_vmem [thread:$0]  %s0, 1024, %s23, [#allocation6], 128, 128, 8
    $region5: #{tpu_custom_call.1} parent=1 // pred_fallthru
      _
    // Predicated region
    $region6: #{tpu_custom_call.1} parent=1 // pred_check
      _
    $region7: #{tpu_custom_call.1} parent=1 // pred_check_branch
      %30 = sbr.rel (0) target = $region9
    $region8: #{tpu_custom_call.1} parent=1 // pred_region
      _
    $region9: #{tpu_custom_call.1} parent=1 // pred_fallthru
      _
    // Predicated region
    $region10: #{tpu_custom_call.1} parent=1 // pred_check
      _
    $region11: #{tpu_custom_call.1} parent=1 // pred_check_branch
      %32 = sbr.rel (0) target = $region13
    $region12: #{tpu_custom_call.1} parent=1 // pred_region
      %s34 = ssub.s32 1536, 1536
      %35 = vsyncadd [#allocation9], %s34
      %s36 = sshll.u32 [#allocation8], 4
      %s37 = int_to_ptr.vmem [resolvable:$true] %s36
      %42 = dma.hbm_to_vmem [thread:$0]  %s2, 1536, %s37, [#allocation9], 384, 384, 24
    $region13: #{tpu_custom_call.1} parent=1 // pred_fallthru
      _
    // Predicated region
    $region14: #{tpu_custom_call.1} parent=1 // pred_check
      _
    $region15: #{tpu_custom_call.1} parent=1 // pred_check_branch
      %44 = sbr.rel (0) target = $region17
    $region16: #{tpu_custom_call.1} parent=1 // pred_region
      %s46 = ssub.s32 6144, 6144
      %47 = vsyncadd [#allocation9], %s46
      %s48 = sshll.u32 [#allocation10], 4
      %s49 = int_to_ptr.vmem [resolvable:$true] %s48
      %54 = dma.hbm_to_vmem [thread:$0]  %s3, 6144, %s49, [#allocation9], 384, 384, 24
    $region17: #{tpu_custom_call.1} parent=1 // pred_fallthru
      _
    // Predicated region
    $region18: #{tpu_custom_call.1} parent=1 // pred_check
      _
    $region19: #{tpu_custom_call.1} parent=1 // pred_check_branch
      %56 = sbr.rel (0) target = $region21
    $region20: #{tpu_custom_call.1} parent=1 // pred_region
      _
    $region21: #{tpu_custom_call.1} parent=1 // pred_fallthru
      _
    // Predicated region
    $region22: #{tpu_custom_call.1} parent=1 // pred_check
      _
    $region23: #{tpu_custom_call.1} parent=1 // pred_check_branch
      %58 = sbr.rel (0) target = $region25
    $region24: #{tpu_custom_call.1} parent=1 // pred_region
      _
    $region25: #{tpu_custom_call.1} parent=1 // pred_fallthru
      _
    // Predicated region
    $region26: #{tpu_custom_call.1} parent=1 // pred_check
      _
    $region27: #{tpu_custom_call.1} parent=1 // pred_check_branch
      %60 = sbr.rel (0) target = $region29
    $region28: #{tpu_custom_call.1} parent=1 // pred_region
      %s62 = ssub.s32 16384, 16384
      %63 = vsyncadd [#allocation12], %s62
      %s64 = sshll.u32 [#allocation11], 4
      %s65 = int_to_ptr.vmem [resolvable:$true] %s64
      %70 = dma.hbm_to_vmem [thread:$0]  %s6, 16384, %s65, [#allocation12], 512, 512, 32
    $region29: #{tpu_custom_call.1} parent=1 // pred_fallthru
      _
    // Predicated region
    $region30: #{tpu_custom_call.1} parent=1 // pred_check
      _
    $region31: #{tpu_custom_call.1} parent=1 // pred_check_branch
      %72 = sbr.rel (0) target = $region33
    $region32: #{tpu_custom_call.1} parent=1 // pred_region
      _
    $region33: #{tpu_custom_call.1} parent=1 // pred_fallthru
      _
    // Predicated region
    $region34: #{tpu_custom_call.1} parent=1 // pred_check
      _
    $region35: #{tpu_custom_call.1} parent=1 // pred_check_branch
      %74 = sbr.rel (0) target = $region37
    $region36: #{tpu_custom_call.1} parent=1 // pred_region
      %75 = dma.done [#allocation6], 1024
    $region37: #{tpu_custom_call.1} parent=1 // pred_fallthru
      _
    // Predicated region
    $region38: #{tpu_custom_call.1} parent=1 // pred_check
      _
    $region39: #{tpu_custom_call.1} parent=1 // pred_check_branch
      %77 = sbr.rel (0) target = $region41
    $region40: #{tpu_custom_call.1} parent=1 // pred_region
      %78 = dma.done [#allocation9], 1536
    $region41: #{tpu_custom_call.1} parent=1 // pred_fallthru
      _
    // Predicated region
    $region42: #{tpu_custom_call.1} parent=1 // pred_check
      _
    $region43: #{tpu_custom_call.1} parent=1 // pred_check_branch
      %80 = sbr.rel (0) target = $region45
    $region44: #{tpu_custom_call.1} parent=1 // pred_region
      %81 = dma.done [#allocation9], 6144
    $region45: #{tpu_custom_call.1} parent=1 // pred_fallthru
      _
    // Predicated region
    $region46: #{tpu_custom_call.1} parent=1 // pred_check
      _
    $region47: #{tpu_custom_call.1} parent=1 // pred_check_branch
      %83 = sbr.rel (0) target = $region49
    $region48: #{tpu_custom_call.1} parent=1 // pred_region
      %84 = dma.done [#allocation12], 16384
    $region49: #{tpu_custom_call.1} parent=1 // pred_fallthru
      _
    %p85 = scmp.eq.s32.totalorder 0, 0
    // Predicated region
    $region50: #{tpu_custom_call.1} parent=1 // pred_check
      %p86 = pneg %p85
    $region51: #{tpu_custom_call.1} parent=1 // pred_check_branch
      %88 = sbr.rel (%p86) target = $region53
    $region52: #{tpu_custom_call.1} parent=1 // pred_region
      %89 = vst [vmem:[#allocation2] sm:$0xff] 0.0
      %90 = vst [vmem:[#allocation3] sm:$0xff] 0.0
      %91 = vst [vmem:[#allocation4] sm:$0xff] 0.0
    $region53: #{tpu_custom_call.1} parent=1 // pred_fallthru
      _
    %v92 = vld [vmem:[#allocation8] sm:$0xff]
    %v93 = vld [vmem:[#allocation8 + $0x8] sm:$0xff]
    %v94 = vld [vmem:[#allocation8 + $0x10] sm:$0xff]
    %v95 = vld [vmem:[#allocation8 + $0x18] sm:$0xff]
    %v96 = vld [vmem:[#allocation8 + $0x20] sm:$0xff]
    %v97 = vld [vmem:[#allocation8 + $0x28] sm:$0xff]
    %v98 = vld [vmem:[#allocation8 + $0x30] sm:$0xff]
    %v99 = vld [vmem:[#allocation8 + $0x38] sm:$0xff]
    %v100 = vld [vmem:[#allocation8 + $0x40] sm:$0xff]
    %v101 = vld [vmem:[#allocation8 + $0x48] sm:$0xff]
    %v102 = vld [vmem:[#allocation8 + $0x50] sm:$0xff]
    %v103 = vld [vmem:[#allocation8 + $0x58] sm:$0xff]
    %v104 = vld [vmem:[#allocation10] sm:$0xff]
    %v105 = vld [vmem:[#allocation10 + $0x8] sm:$0xff]
    %v106 = vld [vmem:[#allocation10 + $0x10] sm:$0xff]
    %v107 = vld [vmem:[#allocation10 + $0x18] sm:$0xff]
    %v108 = vld [vmem:[#allocation10 + $0x20] sm:$0xff]
    %v109 = vld [vmem:[#allocation10 + $0x28] sm:$0xff]
    %v110 = vld [vmem:[#allocation10 + $0x30] sm:$0xff]
    %v111 = vld [vmem:[#allocation10 + $0x38] sm:$0xff]
    %v112 = vld [vmem:[#allocation10 + $0x40] sm:$0xff]
    %v113 = vld [vmem:[#allocation10 + $0x48] sm:$0xff]
    %v114 = vld [vmem:[#allocation10 + $0x50] sm:$0xff]
    %v115 = vld [vmem:[#allocation10 + $0x58] sm:$0xff]
    %v116 = vld [vmem:[#allocation10 + $0x60] sm:$0xff]
    %v117 = vld [vmem:[#allocation10 + $0x68] sm:$0xff]
    %v118 = vld [vmem:[#allocation10 + $0x70] sm:$0xff]
    %v119 = vld [vmem:[#allocation10 + $0x78] sm:$0xff]
    %v120 = vld [vmem:[#allocation10 + $0x80] sm:$0xff]
    %v121 = vld [vmem:[#allocation10 + $0x88] sm:$0xff]
    %v122 = vld [vmem:[#allocation10 + $0x90] sm:$0xff]
    %v123 = vld [vmem:[#allocation10 + $0x98] sm:$0xff]
    %v124 = vld [vmem:[#allocation10 + $0xa0] sm:$0xff]
    %v125 = vld [vmem:[#allocation10 + $0xa8] sm:$0xff]
    %v126 = vld [vmem:[#allocation10 + $0xb0] sm:$0xff]
    %v127 = vld [vmem:[#allocation10 + $0xb8] sm:$0xff]
    %v128 = vld [vmem:[#allocation10 + $0xc0] sm:$0xff]
    %v129 = vld [vmem:[#allocation10 + $0xc8] sm:$0xff]
    %v130 = vld [vmem:[#allocation10 + $0xd0] sm:$0xff]
    %v131 = vld [vmem:[#allocation10 + $0xd8] sm:$0xff]
    %v132 = vld [vmem:[#allocation10 + $0xe0] sm:$0xff]
    %v133 = vld [vmem:[#allocation10 + $0xe8] sm:$0xff]
    %v134 = vld [vmem:[#allocation10 + $0xf0] sm:$0xff]
    %v135 = vld [vmem:[#allocation10 + $0xf8] sm:$0xff]
    %v136 = vld [vmem:[#allocation10 + $0x100] sm:$0xff]
    %v137 = vld [vmem:[#allocation10 + $0x108] sm:$0xff]
    %v138 = vld [vmem:[#allocation10 + $0x110] sm:$0xff]
    %v139 = vld [vmem:[#allocation10 + $0x118] sm:$0xff]
    %v140 = vld [vmem:[#allocation10 + $0x120] sm:$0xff]
    %v141 = vld [vmem:[#allocation10 + $0x128] sm:$0xff]
    %v142 = vld [vmem:[#allocation10 + $0x130] sm:$0xff]
    %v143 = vld [vmem:[#allocation10 + $0x138] sm:$0xff]
    %v144 = vld [vmem:[#allocation10 + $0x140] sm:$0xff]
    %v145 = vld [vmem:[#allocation10 + $0x148] sm:$0xff]
    %v146 = vld [vmem:[#allocation10 + $0x150] sm:$0xff]
    %v147 = vld [vmem:[#allocation10 + $0x158] sm:$0xff]
    %v148 = vld [vmem:[#allocation10 + $0x160] sm:$0xff]
    %v149 = vld [vmem:[#allocation10 + $0x168] sm:$0xff]
    %v150 = vld [vmem:[#allocation10 + $0x170] sm:$0xff]
    %v151 = vld [vmem:[#allocation10 + $0x178] sm:$0xff]
    %v152 = vld [vmem:[#allocation11] sm:$0xff]
    %v153 = vld [vmem:[#allocation11 + $0x8] sm:$0xff]
    %v154 = vld [vmem:[#allocation11 + $0x10] sm:$0xff]
    %v155 = vld [vmem:[#allocation11 + $0x18] sm:$0xff]
    %v156 = vld [vmem:[#allocation11 + $0x20] sm:$0xff]
    %v157 = vld [vmem:[#allocation11 + $0x28] sm:$0xff]
    %v158 = vld [vmem:[#allocation11 + $0x30] sm:$0xff]
    %v159 = vld [vmem:[#allocation11 + $0x38] sm:$0xff]
    %v160 = vld [vmem:[#allocation11 + $0x40] sm:$0xff]
    %v161 = vld [vmem:[#allocation11 + $0x48] sm:$0xff]
    %v162 = vld [vmem:[#allocation11 + $0x50] sm:$0xff]
    %v163 = vld [vmem:[#allocation11 + $0x58] sm:$0xff]
    %v164 = vld [vmem:[#allocation11 + $0x60] sm:$0xff]
    %v165 = vld [vmem:[#allocation11 + $0x68] sm:$0xff]
    %v166 = vld [vmem:[#allocation11 + $0x70] sm:$0xff]
    %v167 = vld [vmem:[#allocation11 + $0x78] sm:$0xff]
    %v168 = vld [vmem:[#allocation11 + $0x80] sm:$0xff]
    %v169 = vld [vmem:[#allocation11 + $0x88] sm:$0xff]
    %v170 = vld [vmem:[#allocation11 + $0x90] sm:$0xff]
    %v171 = vld [vmem:[#allocation11 + $0x98] sm:$0xff]
    %v172 = vld [vmem:[#allocation11 + $0xa0] sm:$0xff]
    %v173 = vld [vmem:[#allocation11 + $0xa8] sm:$0xff]
    %v174 = vld [vmem:[#allocation11 + $0xb0] sm:$0xff]
    %v175 = vld [vmem:[#allocation11 + $0xb8] sm:$0xff]
    %v176 = vld [vmem:[#allocation11 + $0xc0] sm:$0xff]
    %v177 = vld [vmem:[#allocation11 + $0xc8] sm:$0xff]
    %v178 = vld [vmem:[#allocation11 + $0xd0] sm:$0xff]
    %v179 = vld [vmem:[#allocation11 + $0xd8] sm:$0xff]
    %v180 = vld [vmem:[#allocation11 + $0xe0] sm:$0xff]
    %v181 = vld [vmem:[#allocation11 + $0xe8] sm:$0xff]
    %v182 = vld [vmem:[#allocation11 + $0xf0] sm:$0xff]
    %v183 = vld [vmem:[#allocation11 + $0xf8] sm:$0xff]
    %v184 = vld [vmem:[#allocation11 + $0x100] sm:$0xff]
    %v185 = vld [vmem:[#allocation11 + $0x108] sm:$0xff]
    %v186 = vld [vmem:[#allocation11 + $0x110] sm:$0xff]
    %v187 = vld [vmem:[#allocation11 + $0x118] sm:$0xff]
    %v188 = vld [vmem:[#allocation11 + $0x120] sm:$0xff]
    %v189 = vld [vmem:[#allocation11 + $0x128] sm:$0xff]
    %v190 = vld [vmem:[#allocation11 + $0x130] sm:$0xff]
    %v191 = vld [vmem:[#allocation11 + $0x138] sm:$0xff]
    %v192 = vld [vmem:[#allocation11 + $0x140] sm:$0xff]
    %v193 = vld [vmem:[#allocation11 + $0x148] sm:$0xff]
    %v194 = vld [vmem:[#allocation11 + $0x150] sm:$0xff]
    %v195 = vld [vmem:[#allocation11 + $0x158] sm:$0xff]
    %v196 = vld [vmem:[#allocation11 + $0x160] sm:$0xff]
    %v197 = vld [vmem:[#allocation11 + $0x168] sm:$0xff]
    %v198 = vld [vmem:[#allocation11 + $0x170] sm:$0xff]
    %v199 = vld [vmem:[#allocation11 + $0x178] sm:$0xff]
    %v200 = vld [vmem:[#allocation11 + $0x180] sm:$0xff]
    %v201 = vld [vmem:[#allocation11 + $0x188] sm:$0xff]
    %v202 = vld [vmem:[#allocation11 + $0x190] sm:$0xff]
    %v203 = vld [vmem:[#allocation11 + $0x198] sm:$0xff]
    %v204 = vld [vmem:[#allocation11 + $0x1a0] sm:$0xff]
    %v205 = vld [vmem:[#allocation11 + $0x1a8] sm:$0xff]
    %v206 = vld [vmem:[#allocation11 + $0x1b0] sm:$0xff]
    %v207 = vld [vmem:[#allocation11 + $0x1b8] sm:$0xff]
    %v208 = vld [vmem:[#allocation11 + $0x1c0] sm:$0xff]
    %v209 = vld [vmem:[#allocation11 + $0x1c8] sm:$0xff]
    %v210 = vld [vmem:[#allocation11 + $0x1d0] sm:$0xff]
    %v211 = vld [vmem:[#allocation11 + $0x1d8] sm:$0xff]
    %v212 = vld [vmem:[#allocation11 + $0x1e0] sm:$0xff]
    %v213 = vld [vmem:[#allocation11 + $0x1e8] sm:$0xff]
    %v214 = vld [vmem:[#allocation11 + $0x1f0] sm:$0xff]
    %v215 = vld [vmem:[#allocation11 + $0x1f8] sm:$0xff]
    %v216 = vld [vmem:[#allocation11 + $0x200] sm:$0xff]
    %v217 = vld [vmem:[#allocation11 + $0x208] sm:$0xff]
    %v218 = vld [vmem:[#allocation11 + $0x210] sm:$0xff]
    %v219 = vld [vmem:[#allocation11 + $0x218] sm:$0xff]
    %v220 = vld [vmem:[#allocation11 + $0x220] sm:$0xff]
    %v221 = vld [vmem:[#allocation11 + $0x228] sm:$0xff]
    %v222 = vld [vmem:[#allocation11 + $0x230] sm:$0xff]
    %v223 = vld [vmem:[#allocation11 + $0x238] sm:$0xff]
    %v224 = vld [vmem:[#allocation11 + $0x240] sm:$0xff]
    %v225 = vld [vmem:[#allocation11 + $0x248] sm:$0xff]
    %v226 = vld [vmem:[#allocation11 + $0x250] sm:$0xff]
    %v227 = vld [vmem:[#allocation11 + $0x258] sm:$0xff]
    %v228 = vld [vmem:[#allocation11 + $0x260] sm:$0xff]
    %v229 = vld [vmem:[#allocation11 + $0x268] sm:$0xff]
    %v230 = vld [vmem:[#allocation11 + $0x270] sm:$0xff]
    %v231 = vld [vmem:[#allocation11 + $0x278] sm:$0xff]
    %v232 = vld [vmem:[#allocation11 + $0x280] sm:$0xff]
    %v233 = vld [vmem:[#allocation11 + $0x288] sm:$0xff]
    %v234 = vld [vmem:[#allocation11 + $0x290] sm:$0xff]
    %v235 = vld [vmem:[#allocation11 + $0x298] sm:$0xff]
    %v236 = vld [vmem:[#allocation11 + $0x2a0] sm:$0xff]
    %v237 = vld [vmem:[#allocation11 + $0x2a8] sm:$0xff]
    %v238 = vld [vmem:[#allocation11 + $0x2b0] sm:$0xff]
    %v239 = vld [vmem:[#allocation11 + $0x2b8] sm:$0xff]
    %v240 = vld [vmem:[#allocation11 + $0x2c0] sm:$0xff]
    %v241 = vld [vmem:[#allocation11 + $0x2c8] sm:$0xff]
    %v242 = vld [vmem:[#allocation11 + $0x2d0] sm:$0xff]
    %v243 = vld [vmem:[#allocation11 + $0x2d8] sm:$0xff]
    %v244 = vld [vmem:[#allocation11 + $0x2e0] sm:$0xff]
    %v245 = vld [vmem:[#allocation11 + $0x2e8] sm:$0xff]
    %v246 = vld [vmem:[#allocation11 + $0x2f0] sm:$0xff]
    %v247 = vld [vmem:[#allocation11 + $0x2f8] sm:$0xff]
    %v248 = vld [vmem:[#allocation11 + $0x300] sm:$0xff]
    %v249 = vld [vmem:[#allocation11 + $0x308] sm:$0xff]
    %v250 = vld [vmem:[#allocation11 + $0x310] sm:$0xff]
    %v251 = vld [vmem:[#allocation11 + $0x318] sm:$0xff]
    %v252 = vld [vmem:[#allocation11 + $0x320] sm:$0xff]
    %v253 = vld [vmem:[#allocation11 + $0x328] sm:$0xff]
    %v254 = vld [vmem:[#allocation11 + $0x330] sm:$0xff]
    %v255 = vld [vmem:[#allocation11 + $0x338] sm:$0xff]
    %v256 = vld [vmem:[#allocation11 + $0x340] sm:$0xff]
    %v257 = vld [vmem:[#allocation11 + $0x348] sm:$0xff]
    %v258 = vld [vmem:[#allocation11 + $0x350] sm:$0xff]
    %v259 = vld [vmem:[#allocation11 + $0x358] sm:$0xff]
    %v260 = vld [vmem:[#allocation11 + $0x360] sm:$0xff]
    %v261 = vld [vmem:[#allocation11 + $0x368] sm:$0xff]
    %v262 = vld [vmem:[#allocation11 + $0x370] sm:$0xff]
    %v263 = vld [vmem:[#allocation11 + $0x378] sm:$0xff]
    %v264 = vld [vmem:[#allocation11 + $0x380] sm:$0xff]
    %v265 = vld [vmem:[#allocation11 + $0x388] sm:$0xff]
    %v266 = vld [vmem:[#allocation11 + $0x390] sm:$0xff]
    %v267 = vld [vmem:[#allocation11 + $0x398] sm:$0xff]
    %v268 = vld [vmem:[#allocation11 + $0x3a0] sm:$0xff]
    %v269 = vld [vmem:[#allocation11 + $0x3a8] sm:$0xff]
    %v270 = vld [vmem:[#allocation11 + $0x3b0] sm:$0xff]
    %v271 = vld [vmem:[#allocation11 + $0x3b8] sm:$0xff]
    %v272 = vld [vmem:[#allocation11 + $0x3c0] sm:$0xff]
    %v273 = vld [vmem:[#allocation11 + $0x3c8] sm:$0xff]
    %v274 = vld [vmem:[#allocation11 + $0x3d0] sm:$0xff]
    %v275 = vld [vmem:[#allocation11 + $0x3d8] sm:$0xff]
    %v276 = vld [vmem:[#allocation11 + $0x3e0] sm:$0xff]
    %v277 = vld [vmem:[#allocation11 + $0x3e8] sm:$0xff]
    %v278 = vld [vmem:[#allocation11 + $0x3f0] sm:$0xff]
    %v279 = vld [vmem:[#allocation11 + $0x3f8] sm:$0xff]
    %v280 = vld [vmem:[%s4] sm:$0x7]
    %v282 = vlaneseq
    %v283 = vshrl.u32 %v282, 7
    %v284 = vsub.s32 0, %v283
    %v285 = vrot.slane %v280, %v284
    %v286 = vlaneseq
    %v287 = vshrl.u32 %v286, 7
    %v288 = vsub.s32 1, %v287
    %v289 = vrot.slane %v280, %v288
    %v290 = vlaneseq
    %v291 = vshrl.u32 %v290, 7
    %v292 = vsub.s32 2, %v291
    %v293 = vrot.slane %v280, %v292
    %v297 = vld [vmem:[%s5] sm:$0x1]
    %v299 = vlaneseq
    %v300 = vshrl.u32 %v299, 7
    %v301 = vsub.s32 0, %v300
    %v302 = vrot.slane %v297, %v301
    %v304 = vld [vmem:[%s7] sm:$0xf]
    %v306 = vlaneseq
    %v307 = vshrl.u32 %v306, 7
    %v308 = vsub.s32 0, %v307
    %v309 = vrot.slane %v304, %v308
    %v310 = vlaneseq
    %v311 = vshrl.u32 %v310, 7
    %v312 = vsub.s32 1, %v311
    %v313 = vrot.slane %v304, %v312
    %v314 = vlaneseq
    %v315 = vshrl.u32 %v314, 7
    %v316 = vsub.s32 2, %v315
    %v317 = vrot.slane %v304, %v316
    %v318 = vlaneseq
    %v319 = vshrl.u32 %v318, 7
    %v320 = vsub.s32 3, %v319
    %v321 = vrot.slane %v304, %v320
    %v326 = vld [vmem:[%s1] sm:$0xff]
    %v327 = vsub.s32 %v326, 1
    %328 = vset.pattern.permute.xlu0 0
    %329 = vperm.xlu0 %328, %v327
    %v330 = vpop.permute.xlu0 %329
    %v331 = vld [vmem:[#allocation5] sm:$0xff]
    %vm332 = vcmask 261120
    %v334 = vsel %vm332, %v331, 0
    %336 = vmatprep.subr.mxu0 0.0
    %337 = vmatpush1.msra.mxu0 0.0
    %338 = vmatprep.subr.mxu0 0.0
    %339 = vmatpush1.msra.mxu0 0.0
    %340 = vmatprep.subr.mxu0 0.0
    %341 = vmatpush1.msra.mxu0 0.0
    %342 = vmatprep.subr.mxu0 0.0
    %343 = vmatpush1.msra.mxu0 0.0
    %344 = vmatprep.subr.mxu0 0.0
    %345 = vmatpush1.msra.mxu0 0.0
    %346 = vmatprep.subr.mxu0 0.0
    %347 = vmatpush1.msra.mxu0 0.0
    %348 = vmatprep.subr.mxu0 0.0
    %349 = vmatpush1.msra.mxu0 0.0
    %350 = vmatprep.subr.mxu0 0.0
    %351 = vmatpush1.msra.mxu0 0.0
    %352 = vmatprep.subr.mxu0 0.0
    %353 = vmatpush1.msra.mxu0 0.0
    %354 = vmatprep.subr.mxu0 0.0
    %355 = vmatpush1.msra.mxu0 0.0
    %356 = vmatprep.subr.mxu0 0.0
    %357 = vmatpush1.msra.mxu0 0.0
    %358 = vmatprep.subr.mxu0 0.0
    %359 = vmatpush1.msra.mxu0 0.0
    %360 = vmatprep.subr.mxu0 %v102
    %361 = vmatpush1.msra.mxu0 %v101
    %362 = vmatprep.subr.mxu0 %v99
    %363 = vmatpush1.msra.mxu0 %v98
    %364 = vmatprep.subr.mxu0 %v96
    %365 = vmatpush1.msra.mxu0 %v95
    %366 = vmatprep.subr.mxu0 %v93
    %367 = vmatpush1.msra.mxu0 %v92
    %368 = vmatprep.subr.mxu0 0.0
    %369 = vmatpush2.msra.mxu0 0.0
    %370 = vmatprep.subr.mxu0 0.0
    %371 = vmatpush2.msra.mxu0 0.0
    %372 = vmatprep.subr.mxu0 0.0
    %373 = vmatpush2.msra.mxu0 0.0
    %374 = vmatprep.subr.mxu0 0.0
    %375 = vmatpush2.msra.mxu0 0.0
    %376 = vmatprep.subr.mxu0 0.0
    %377 = vmatpush2.msra.mxu0 0.0
    %378 = vmatprep.subr.mxu0 0.0
    %379 = vmatpush2.msra.mxu0 0.0
    %380 = vmatprep.subr.mxu0 0.0
    %381 = vmatpush2.msra.mxu0 0.0
    %382 = vmatprep.subr.mxu0 0.0
    %383 = vmatpush2.msra.mxu0 0.0
    %384 = vmatprep.subr.mxu0 0.0
    %385 = vmatpush2.msra.mxu0 0.0
    %386 = vmatprep.subr.mxu0 0.0
    %387 = vmatpush2.msra.mxu0 0.0
    %388 = vmatprep.subr.mxu0 0.0
    %389 = vmatpush2.msra.mxu0 0.0
    %390 = vmatprep.subr.mxu0 0.0
    %391 = vmatpush2.msra.mxu0 0.0
    %392 = vmatprep.subr.mxu0 0.0
    %393 = vmatpush2.msra.mxu0 0.0
    %394 = vmatprep.subr.mxu0 0.0
    %395 = vmatpush2.msra.mxu0 0.0
    %396 = vmatprep.subr.mxu0 0.0
    %397 = vmatpush2.msra.mxu0 0.0
    %398 = vmatprep.subr.mxu0 0.0
    %399 = vmatpush2.msra.mxu0 0.0
    %400 = vmatprep.mubr.f32.mxu0 0.0
    %401 = vmatmul.mubr.f32.gmra.mxu0 %v334
    %v402 = vpop.f32.mrf.mxu0
    %v403 = vadd.f32 %v285, %v402
    %v404 = vpop.f32.mrf.mxu0
    %v405 = vadd.f32 %v289, %v404
    %406 = vdwg.mxu0
    %407 = vmatprep.subr.mxu0 0.0
    %408 = vmatpush1.msra.mxu0 0.0
    %409 = vmatprep.subr.mxu0 0.0
    %410 = vmatpush1.msra.mxu0 0.0
    %411 = vmatprep.subr.mxu0 0.0
    %412 = vmatpush1.msra.mxu0 0.0
    %413 = vmatprep.subr.mxu0 0.0
    %414 = vmatpush1.msra.mxu0 0.0
    %415 = vmatprep.subr.mxu0 0.0
    %416 = vmatpush1.msra.mxu0 0.0
    %417 = vmatprep.subr.mxu0 0.0
    %418 = vmatpush1.msra.mxu0 0.0
    %419 = vmatprep.subr.mxu0 0.0
    %420 = vmatpush1.msra.mxu0 0.0
    %421 = vmatprep.subr.mxu0 0.0
    %422 = vmatpush1.msra.mxu0 0.0
    %423 = vmatprep.subr.mxu0 0.0
    %424 = vmatpush1.msra.mxu0 0.0
    %425 = vmatprep.subr.mxu0 0.0
    %426 = vmatpush1.msra.mxu0 0.0
    %427 = vmatprep.subr.mxu0 0.0
    %428 = vmatpush1.msra.mxu0 0.0
    %429 = vmatprep.subr.mxu0 0.0
    %430 = vmatpush1.msra.mxu0 0.0
    %431 = vmatprep.subr.mxu0 0.0
    %432 = vmatpush1.msra.mxu0 %v103
    %433 = vmatprep.subr.mxu0 0.0
    %434 = vmatpush1.msra.mxu0 %v100
    %435 = vmatprep.subr.mxu0 0.0
    %436 = vmatpush1.msra.mxu0 %v97
    %437 = vmatprep.subr.mxu0 0.0
    %438 = vmatpush1.msra.mxu0 %v94
    %439 = vmatprep.subr.mxu0 0.0
    %440 = vmatpush2.msra.mxu0 0.0
    %441 = vmatprep.subr.mxu0 0.0
    %442 = vmatpush2.msra.mxu0 0.0
    %443 = vmatprep.subr.mxu0 0.0
    %444 = vmatpush2.msra.mxu0 0.0
    %445 = vmatprep.subr.mxu0 0.0
    %446 = vmatpush2.msra.mxu0 0.0
    %447 = vmatprep.subr.mxu0 0.0
    %448 = vmatpush2.msra.mxu0 0.0
    %449 = vmatprep.subr.mxu0 0.0
    %450 = vmatpush2.msra.mxu0 0.0
    %451 = vmatprep.subr.mxu0 0.0
    %452 = vmatpush2.msra.mxu0 0.0
    %453 = vmatprep.subr.mxu0 0.0
    %454 = vmatpush2.msra.mxu0 0.0
    %455 = vmatprep.subr.mxu0 0.0
    %456 = vmatpush2.msra.mxu0 0.0
    %457 = vmatprep.subr.mxu0 0.0
    %458 = vmatpush2.msra.mxu0 0.0
    %459 = vmatprep.subr.mxu0 0.0
    %460 = vmatpush2.msra.mxu0 0.0
    %461 = vmatprep.subr.mxu0 0.0
    %462 = vmatpush2.msra.mxu0 0.0
    %463 = vmatprep.subr.mxu0 0.0
    %464 = vmatpush2.msra.mxu0 0.0
    %465 = vmatprep.subr.mxu0 0.0
    %466 = vmatpush2.msra.mxu0 0.0
    %467 = vmatprep.subr.mxu0 0.0
    %468 = vmatpush2.msra.mxu0 0.0
    %469 = vmatprep.subr.mxu0 0.0
    %470 = vmatpush2.msra.mxu0 0.0
    %471 = vmatprep.mubr.f32.mxu0 0.0
    %472 = vmatmul.mubr.f32.gmra.mxu0 %v334
    %v473 = vpop.f32.mrf.mxu0
    %v474 = vadd.f32 %v293, %v473
    %v475 = vpop.f32.mrf.mxu0
    %476 = vdwg.mxu0
    %s477 = scalar_lea.vmem [#allocation5], 8
    %v478 = vld [vmem:[%s477] sm:$0xff]
    %v480 = vsel %vm332, %v478, 0
    %482 = vmatprep.subr.mxu0 0.0
    %483 = vmatpush1.msra.mxu0 0.0
    %484 = vmatprep.subr.mxu0 0.0
    %485 = vmatpush1.msra.mxu0 0.0
    %486 = vmatprep.subr.mxu0 0.0
    %487 = vmatpush1.msra.mxu0 0.0
    %488 = vmatprep.subr.mxu0 0.0
    %489 = vmatpush1.msra.mxu0 0.0
    %490 = vmatprep.subr.mxu0 0.0
    %491 = vmatpush1.msra.mxu0 0.0
    %492 = vmatprep.subr.mxu0 0.0
    %493 = vmatpush1.msra.mxu0 0.0
    %494 = vmatprep.subr.mxu0 0.0
    %495 = vmatpush1.msra.mxu0 0.0
    %496 = vmatprep.subr.mxu0 0.0
    %497 = vmatpush1.msra.mxu0 0.0
    %498 = vmatprep.subr.mxu0 0.0
    %499 = vmatpush1.msra.mxu0 0.0
    %500 = vmatprep.subr.mxu0 0.0
    %501 = vmatpush1.msra.mxu0 0.0
    %502 = vmatprep.subr.mxu0 0.0
    %503 = vmatpush1.msra.mxu0 0.0
    %504 = vmatprep.subr.mxu0 0.0
    %505 = vmatpush1.msra.mxu0 0.0
    %506 = vmatprep.subr.mxu0 %v102
    %507 = vmatpush1.msra.mxu0 %v101
    %508 = vmatprep.subr.mxu0 %v99
    %509 = vmatpush1.msra.mxu0 %v98
    %510 = vmatprep.subr.mxu0 %v96
    %511 = vmatpush1.msra.mxu0 %v95
    %512 = vmatprep.subr.mxu0 %v93
    %513 = vmatpush1.msra.mxu0 %v92
    %514 = vmatprep.subr.mxu0 0.0
    %515 = vmatpush2.msra.mxu0 0.0
    %516 = vmatprep.subr.mxu0 0.0
    %517 = vmatpush2.msra.mxu0 0.0
    %518 = vmatprep.subr.mxu0 0.0
    %519 = vmatpush2.msra.mxu0 0.0
    %520 = vmatprep.subr.mxu0 0.0
    %521 = vmatpush2.msra.mxu0 0.0
    %522 = vmatprep.subr.mxu0 0.0
    %523 = vmatpush2.msra.mxu0 0.0
    %524 = vmatprep.subr.mxu0 0.0
    %525 = vmatpush2.msra.mxu0 0.0
    %526 = vmatprep.subr.mxu0 0.0
    %527 = vmatpush2.msra.mxu0 0.0
    %528 = vmatprep.subr.mxu0 0.0
    %529 = vmatpush2.msra.mxu0 0.0
    %530 = vmatprep.subr.mxu0 0.0
    %531 = vmatpush2.msra.mxu0 0.0
    %532 = vmatprep.subr.mxu0 0.0
    %533 = vmatpush2.msra.mxu0 0.0
    %534 = vmatprep.subr.mxu0 0.0
    %535 = vmatpush2.msra.mxu0 0.0
    %536 = vmatprep.subr.mxu0 0.0
    %537 = vmatpush2.msra.mxu0 0.0
    %538 = vmatprep.subr.mxu0 0.0
    %539 = vmatpush2.msra.mxu0 0.0
    %540 = vmatprep.subr.mxu0 0.0
    %541 = vmatpush2.msra.mxu0 0.0
    %542 = vmatprep.subr.mxu0 0.0
    %543 = vmatpush2.msra.mxu0 0.0
    %544 = vmatprep.subr.mxu0 0.0
    %545 = vmatpush2.msra.mxu0 0.0
    %546 = vmatprep.mubr.f32.mxu0 0.0
    %547 = vmatmul.mubr.f32.gmra.mxu0 %v480
    %v548 = vpop.f32.mrf.mxu0
    %v549 = vadd.f32 %v285, %v548
    %v550 = vpop.f32.mrf.mxu0
    %v551 = vadd.f32 %v289, %v550
    %552 = vdwg.mxu0
    %553 = vmatprep.subr.mxu0 0.0
    %554 = vmatpush1.msra.mxu0 0.0
    %555 = vmatprep.subr.mxu0 0.0
    %556 = vmatpush1.msra.mxu0 0.0
    %557 = vmatprep.subr.mxu0 0.0
    %558 = vmatpush1.msra.mxu0 0.0
    %559 = vmatprep.subr.mxu0 0.0
    %560 = vmatpush1.msra.mxu0 0.0
    %561 = vmatprep.subr.mxu0 0.0
    %562 = vmatpush1.msra.mxu0 0.0
    %563 = vmatprep.subr.mxu0 0.0
    %564 = vmatpush1.msra.mxu0 0.0
    %565 = vmatprep.subr.mxu0 0.0
    %566 = vmatpush1.msra.mxu0 0.0
    %567 = vmatprep.subr.mxu0 0.0
    %568 = vmatpush1.msra.mxu0 0.0
    %569 = vmatprep.subr.mxu0 0.0
    %570 = vmatpush1.msra.mxu0 0.0
    %571 = vmatprep.subr.mxu0 0.0
    %572 = vmatpush1.msra.mxu0 0.0
    %573 = vmatprep.subr.mxu0 0.0
    %574 = vmatpush1.msra.mxu0 0.0
    %575 = vmatprep.subr.mxu0 0.0
    %576 = vmatpush1.msra.mxu0 0.0
    %577 = vmatprep.subr.mxu0 0.0
    %578 = vmatpush1.msra.mxu0 %v103
    %579 = vmatprep.subr.mxu0 0.0
    %580 = vmatpush1.msra.mxu0 %v100
    %581 = vmatprep.subr.mxu0 0.0
    %582 = vmatpush1.msra.mxu0 %v97
    %583 = vmatprep.subr.mxu0 0.0
    %584 = vmatpush1.msra.mxu0 %v94
    %585 = vmatprep.subr.mxu0 0.0
    %586 = vmatpush2.msra.mxu0 0.0
    %587 = vmatprep.subr.mxu0 0.0
    %588 = vmatpush2.msra.mxu0 0.0
    %589 = vmatprep.subr.mxu0 0.0
    %590 = vmatpush2.msra.mxu0 0.0
    %591 = vmatprep.subr.mxu0 0.0
    %592 = vmatpush2.msra.mxu0 0.0
    %593 = vmatprep.subr.mxu0 0.0
    %594 = vmatpush2.msra.mxu0 0.0
    %595 = vmatprep.subr.mxu0 0.0
    %596 = vmatpush2.msra.mxu0 0.0
    %597 = vmatprep.subr.mxu0 0.0
    %598 = vmatpush2.msra.mxu0 0.0
    %599 = vmatprep.subr.mxu0 0.0
    %600 = vmatpush2.msra.mxu0 0.0
    %601 = vmatprep.subr.mxu0 0.0
    %602 = vmatpush2.msra.mxu0 0.0
    %603 = vmatprep.subr.mxu0 0.0
    %604 = vmatpush2.msra.mxu0 0.0
    %605 = vmatprep.subr.mxu0 0.0
    %606 = vmatpush2.msra.mxu0 0.0
    %607 = vmatprep.subr.mxu0 0.0
    %608 = vmatpush2.msra.mxu0 0.0
    %609 = vmatprep.subr.mxu0 0.0
    %610 = vmatpush2.msra.mxu0 0.0
    %611 = vmatprep.subr.mxu0 0.0
    %612 = vmatpush2.msra.mxu0 0.0
    %613 = vmatprep.subr.mxu0 0.0
    %614 = vmatpush2.msra.mxu0 0.0
    %615 = vmatprep.subr.mxu0 0.0
    %616 = vmatpush2.msra.mxu0 0.0
    %617 = vmatprep.mubr.f32.mxu0 0.0
    %618 = vmatmul.mubr.f32.gmra.mxu0 %v480
    %v619 = vpop.f32.mrf.mxu0
    %v620 = vadd.f32 %v293, %v619
    %v621 = vpop.f32.mrf.mxu0
    %622 = vdwg.mxu0
    %s623 = scalar_lea.vmem [#allocation5], 16
    %v624 = vld [vmem:[%s623] sm:$0xff]
    %v626 = vsel %vm332, %v624, 0
    %628 = vmatprep.subr.mxu0 0.0
    %629 = vmatpush1.msra.mxu0 0.0
    %630 = vmatprep.subr.mxu0 0.0
    %631 = vmatpush1.msra.mxu0 0.0
    %632 = vmatprep.subr.mxu0 0.0
    %633 = vmatpush1.msra.mxu0 0.0
    %634 = vmatprep.subr.mxu0 0.0
    %635 = vmatpush1.msra.mxu0 0.0
    %636 = vmatprep.subr.mxu0 0.0
    %637 = vmatpush1.msra.mxu0 0.0
    %638 = vmatprep.subr.mxu0 0.0
    %639 = vmatpush1.msra.mxu0 0.0
    %640 = vmatprep.subr.mxu0 0.0
    %641 = vmatpush1.msra.mxu0 0.0
    %642 = vmatprep.subr.mxu0 0.0
    %643 = vmatpush1.msra.mxu0 0.0
    %644 = vmatprep.subr.mxu0 0.0
    %645 = vmatpush1.msra.mxu0 0.0
    %646 = vmatprep.subr.mxu0 0.0
    %647 = vmatpush1.msra.mxu0 0.0
    %648 = vmatprep.subr.mxu0 0.0
    %649 = vmatpush1.msra.mxu0 0.0
    %650 = vmatprep.subr.mxu0 0.0
    %651 = vmatpush1.msra.mxu0 0.0
    %652 = vmatprep.subr.mxu0 %v102
    %653 = vmatpush1.msra.mxu0 %v101
    %654 = vmatprep.subr.mxu0 %v99
    %655 = vmatpush1.msra.mxu0 %v98
    %656 = vmatprep.subr.mxu0 %v96
    %657 = vmatpush1.msra.mxu0 %v95
    %658 = vmatprep.subr.mxu0 %v93
    %659 = vmatpush1.msra.mxu0 %v92
    %660 = vmatprep.subr.mxu0 0.0
    %661 = vmatpush2.msra.mxu0 0.0
    %662 = vmatprep.subr.mxu0 0.0
    %663 = vmatpush2.msra.mxu0 0.0
    %664 = vmatprep.subr.mxu0 0.0
    %665 = vmatpush2.msra.mxu0 0.0
    %666 = vmatprep.subr.mxu0 0.0
    %667 = vmatpush2.msra.mxu0 0.0
    %668 = vmatprep.subr.mxu0 0.0
    %669 = vmatpush2.msra.mxu0 0.0
    %670 = vmatprep.subr.mxu0 0.0
    %671 = vmatpush2.msra.mxu0 0.0
    %672 = vmatprep.subr.mxu0 0.0
    %673 = vmatpush2.msra.mxu0 0.0
    %674 = vmatprep.subr.mxu0 0.0
    %675 = vmatpush2.msra.mxu0 0.0
    %676 = vmatprep.subr.mxu0 0.0
    %677 = vmatpush2.msra.mxu0 0.0
    %678 = vmatprep.subr.mxu0 0.0
    %679 = vmatpush2.msra.mxu0 0.0
    %680 = vmatprep.subr.mxu0 0.0
    %681 = vmatpush2.msra.mxu0 0.0
    %682 = vmatprep.subr.mxu0 0.0
    %683 = vmatpush2.msra.mxu0 0.0
    %684 = vmatprep.subr.mxu0 0.0
    %685 = vmatpush2.msra.mxu0 0.0
    %686 = vmatprep.subr.mxu0 0.0
    %687 = vmatpush2.msra.mxu0 0.0
    %688 = vmatprep.subr.mxu0 0.0
    %689 = vmatpush2.msra.mxu0 0.0
    %690 = vmatprep.subr.mxu0 0.0
    %691 = vmatpush2.msra.mxu0 0.0
    %692 = vmatprep.mubr.f32.mxu0 0.0
    %693 = vmatmul.mubr.f32.gmra.mxu0 %v626
    %v694 = vpop.f32.mrf.mxu0
    %v695 = vadd.f32 %v285, %v694
    %v696 = vpop.f32.mrf.mxu0
    %v697 = vadd.f32 %v289, %v696
    %698 = vdwg.mxu0
    %699 = vmatprep.subr.mxu0 0.0
    %700 = vmatpush1.msra.mxu0 0.0
    %701 = vmatprep.subr.mxu0 0.0
    %702 = vmatpush1.msra.mxu0 0.0
    %703 = vmatprep.subr.mxu0 0.0
    %704 = vmatpush1.msra.mxu0 0.0
    %705 = vmatprep.subr.mxu0 0.0
    %706 = vmatpush1.msra.mxu0 0.0
    %707 = vmatprep.subr.mxu0 0.0
    %708 = vmatpush1.msra.mxu0 0.0
    %709 = vmatprep.subr.mxu0 0.0
    %710 = vmatpush1.msra.mxu0 0.0
    %711 = vmatprep.subr.mxu0 0.0
    %712 = vmatpush1.msra.mxu0 0.0
    %713 = vmatprep.subr.mxu0 0.0
    %714 = vmatpush1.msra.mxu0 0.0
    %715 = vmatprep.subr.mxu0 0.0
    %716 = vmatpush1.msra.mxu0 0.0
    %717 = vmatprep.subr.mxu0 0.0
    %718 = vmatpush1.msra.mxu0 0.0
    %719 = vmatprep.subr.mxu0 0.0
    %720 = vmatpush1.msra.mxu0 0.0
    %721 = vmatprep.subr.mxu0 0.0
    %722 = vmatpush1.msra.mxu0 0.0
    %723 = vmatprep.subr.mxu0 0.0
    %724 = vmatpush1.msra.mxu0 %v103
    %725 = vmatprep.subr.mxu0 0.0
    %726 = vmatpush1.msra.mxu0 %v100
    %727 = vmatprep.subr.mxu0 0.0
    %728 = vmatpush1.msra.mxu0 %v97
    %729 = vmatprep.subr.mxu0 0.0
    %730 = vmatpush1.msra.mxu0 %v94
    %731 = vmatprep.subr.mxu0 0.0
    %732 = vmatpush2.msra.mxu0 0.0
    %733 = vmatprep.subr.mxu0 0.0
    %734 = vmatpush2.msra.mxu0 0.0
    %735 = vmatprep.subr.mxu0 0.0
    %736 = vmatpush2.msra.mxu0 0.0
    %737 = vmatprep.subr.mxu0 0.0
    %738 = vmatpush2.msra.mxu0 0.0
    %739 = vmatprep.subr.mxu0 0.0
    %740 = vmatpush2.msra.mxu0 0.0
    %741 = vmatprep.subr.mxu0 0.0
    %742 = vmatpush2.msra.mxu0 0.0
    %743 = vmatprep.subr.mxu0 0.0
    %744 = vmatpush2.msra.mxu0 0.0
    %745 = vmatprep.subr.mxu0 0.0
    %746 = vmatpush2.msra.mxu0 0.0
    %747 = vmatprep.subr.mxu0 0.0
    %748 = vmatpush2.msra.mxu0 0.0
    %749 = vmatprep.subr.mxu0 0.0
    %750 = vmatpush2.msra.mxu0 0.0
    %751 = vmatprep.subr.mxu0 0.0
    %752 = vmatpush2.msra.mxu0 0.0
    %753 = vmatprep.subr.mxu0 0.0
    %754 = vmatpush2.msra.mxu0 0.0
    %755 = vmatprep.subr.mxu0 0.0
    %756 = vmatpush2.msra.mxu0 0.0
    %757 = vmatprep.subr.mxu0 0.0
    %758 = vmatpush2.msra.mxu0 0.0
    %759 = vmatprep.subr.mxu0 0.0
    %760 = vmatpush2.msra.mxu0 0.0
    %761 = vmatprep.subr.mxu0 0.0
    %762 = vmatpush2.msra.mxu0 0.0
    %763 = vmatprep.mubr.f32.mxu0 0.0
    %764 = vmatmul.mubr.f32.gmra.mxu0 %v626
    %v765 = vpop.f32.mrf.mxu0
    %v766 = vadd.f32 %v293, %v765
    %v767 = vpop.f32.mrf.mxu0
    %768 = vdwg.mxu0
    %s769 = scalar_lea.vmem [#allocation5], 24
    %v770 = vld [vmem:[%s769] sm:$0xff]
    %v772 = vsel %vm332, %v770, 0
    %774 = vmatprep.subr.mxu0 0.0
    %775 = vmatpush1.msra.mxu0 0.0
    %776 = vmatprep.subr.mxu0 0.0
    %777 = vmatpush1.msra.mxu0 0.0
    %778 = vmatprep.subr.mxu0 0.0
    %779 = vmatpush1.msra.mxu0 0.0
    %780 = vmatprep.subr.mxu0 0.0
    %781 = vmatpush1.msra.mxu0 0.0
    %782 = vmatprep.subr.mxu0 0.0
    %783 = vmatpush1.msra.mxu0 0.0
    %784 = vmatprep.subr.mxu0 0.0
    %785 = vmatpush1.msra.mxu0 0.0
    %786 = vmatprep.subr.mxu0 0.0
    %787 = vmatpush1.msra.mxu0 0.0
    %788 = vmatprep.subr.mxu0 0.0
    %789 = vmatpush1.msra.mxu0 0.0
    %790 = vmatprep.subr.mxu0 0.0
    %791 = vmatpush1.msra.mxu0 0.0
    %792 = vmatprep.subr.mxu0 0.0
    %793 = vmatpush1.msra.mxu0 0.0
    %794 = vmatprep.subr.mxu0 0.0
    %795 = vmatpush1.msra.mxu0 0.0
    %796 = vmatprep.subr.mxu0 0.0
    %797 = vmatpush1.msra.mxu0 0.0
    %798 = vmatprep.subr.mxu0 %v102
    %799 = vmatpush1.msra.mxu0 %v101
    %800 = vmatprep.subr.mxu0 %v99
    %801 = vmatpush1.msra.mxu0 %v98
    %802 = vmatprep.subr.mxu0 %v96
    %803 = vmatpush1.msra.mxu0 %v95
    %804 = vmatprep.subr.mxu0 %v93
    %805 = vmatpush1.msra.mxu0 %v92
    %806 = vmatprep.subr.mxu0 0.0
    %807 = vmatpush2.msra.mxu0 0.0
    %808 = vmatprep.subr.mxu0 0.0
    %809 = vmatpush2.msra.mxu0 0.0
    %810 = vmatprep.subr.mxu0 0.0
    %811 = vmatpush2.msra.mxu0 0.0
    %812 = vmatprep.subr.mxu0 0.0
    %813 = vmatpush2.msra.mxu0 0.0
    %814 = vmatprep.subr.mxu0 0.0
    %815 = vmatpush2.msra.mxu0 0.0
    %816 = vmatprep.subr.mxu0 0.0
    %817 = vmatpush2.msra.mxu0 0.0
    %818 = vmatprep.subr.mxu0 0.0
    %819 = vmatpush2.msra.mxu0 0.0
    %820 = vmatprep.subr.mxu0 0.0
    %821 = vmatpush2.msra.mxu0 0.0
    %822 = vmatprep.subr.mxu0 0.0
    %823 = vmatpush2.msra.mxu0 0.0
    %824 = vmatprep.subr.mxu0 0.0
    %825 = vmatpush2.msra.mxu0 0.0
    %826 = vmatprep.subr.mxu0 0.0
    %827 = vmatpush2.msra.mxu0 0.0
    %828 = vmatprep.subr.mxu0 0.0
    %829 = vmatpush2.msra.mxu0 0.0
    %830 = vmatprep.subr.mxu0 0.0
    %831 = vmatpush2.msra.mxu0 0.0
    %832 = vmatprep.subr.mxu0 0.0
    %833 = vmatpush2.msra.mxu0 0.0
    %834 = vmatprep.subr.mxu0 0.0
    %835 = vmatpush2.msra.mxu0 0.0
    %836 = vmatprep.subr.mxu0 0.0
    %837 = vmatpush2.msra.mxu0 0.0
    %838 = vmatprep.mubr.f32.mxu0 0.0
    %839 = vmatmul.mubr.f32.gmra.mxu0 %v772
    %v840 = vpop.f32.mrf.mxu0
    %v841 = vadd.f32 %v285, %v840
    %v842 = vpop.f32.mrf.mxu0
    %v843 = vadd.f32 %v289, %v842
    %844 = vdwg.mxu0
    %845 = vmatprep.subr.mxu0 0.0
    %846 = vmatpush1.msra.mxu0 0.0
    %847 = vmatprep.subr.mxu0 0.0
    %848 = vmatpush1.msra.mxu0 0.0
    %849 = vmatprep.subr.mxu0 0.0
    %850 = vmatpush1.msra.mxu0 0.0
    %851 = vmatprep.subr.mxu0 0.0
    %852 = vmatpush1.msra.mxu0 0.0
    %853 = vmatprep.subr.mxu0 0.0
    %854 = vmatpush1.msra.mxu0 0.0
    %855 = vmatprep.subr.mxu0 0.0
    %856 = vmatpush1.msra.mxu0 0.0
    %857 = vmatprep.subr.mxu0 0.0
    %858 = vmatpush1.msra.mxu0 0.0
    %859 = vmatprep.subr.mxu0 0.0
    %860 = vmatpush1.msra.mxu0 0.0
    %861 = vmatprep.subr.mxu0 0.0
    %862 = vmatpush1.msra.mxu0 0.0
    %863 = vmatprep.subr.mxu0 0.0
    %864 = vmatpush1.msra.mxu0 0.0
    %865 = vmatprep.subr.mxu0 0.0
    %866 = vmatpush1.msra.mxu0 0.0
    %867 = vmatprep.subr.mxu0 0.0
    %868 = vmatpush1.msra.mxu0 0.0
    %869 = vmatprep.subr.mxu0 0.0
    %870 = vmatpush1.msra.mxu0 %v103
    %871 = vmatprep.subr.mxu0 0.0
    %872 = vmatpush1.msra.mxu0 %v100
    %873 = vmatprep.subr.mxu0 0.0
    %874 = vmatpush1.msra.mxu0 %v97
    %875 = vmatprep.subr.mxu0 0.0
    %876 = vmatpush1.msra.mxu0 %v94
    %877 = vmatprep.subr.mxu0 0.0
    %878 = vmatpush2.msra.mxu0 0.0
    %879 = vmatprep.subr.mxu0 0.0
    %880 = vmatpush2.msra.mxu0 0.0
    %881 = vmatprep.subr.mxu0 0.0
    %882 = vmatpush2.msra.mxu0 0.0
    %883 = vmatprep.subr.mxu0 0.0
    %884 = vmatpush2.msra.mxu0 0.0
    %885 = vmatprep.subr.mxu0 0.0
    %886 = vmatpush2.msra.mxu0 0.0
    %887 = vmatprep.subr.mxu0 0.0
    %888 = vmatpush2.msra.mxu0 0.0
    %889 = vmatprep.subr.mxu0 0.0
    %890 = vmatpush2.msra.mxu0 0.0
    %891 = vmatprep.subr.mxu0 0.0
    %892 = vmatpush2.msra.mxu0 0.0
    %893 = vmatprep.subr.mxu0 0.0
    %894 = vmatpush2.msra.mxu0 0.0
    %895 = vmatprep.subr.mxu0 0.0
    %896 = vmatpush2.msra.mxu0 0.0
    %897 = vmatprep.subr.mxu0 0.0
    %898 = vmatpush2.msra.mxu0 0.0
    %899 = vmatprep.subr.mxu0 0.0
    %900 = vmatpush2.msra.mxu0 0.0
    %901 = vmatprep.subr.mxu0 0.0
    %902 = vmatpush2.msra.mxu0 0.0
    %903 = vmatprep.subr.mxu0 0.0
    %904 = vmatpush2.msra.mxu0 0.0
    %905 = vmatprep.subr.mxu0 0.0
    %906 = vmatpush2.msra.mxu0 0.0
    %907 = vmatprep.subr.mxu0 0.0
    %908 = vmatpush2.msra.mxu0 0.0
    %909 = vmatprep.mubr.f32.mxu0 0.0
    %910 = vmatmul.mubr.f32.gmra.mxu0 %v772
    %v911 = vpop.f32.mrf.mxu0
    %v912 = vadd.f32 %v293, %v911
    %v913 = vpop.f32.mrf.mxu0
    %914 = vdwg.mxu0
    %s915 = scalar_lea.vmem [#allocation5], 32
    %v916 = vld [vmem:[%s915] sm:$0xff]
    %v918 = vsel %vm332, %v916, 0
    %920 = vmatprep.subr.mxu0 0.0
    %921 = vmatpush1.msra.mxu0 0.0
    %922 = vmatprep.subr.mxu0 0.0
    %923 = vmatpush1.msra.mxu0 0.0
    %924 = vmatprep.subr.mxu0 0.0
    %925 = vmatpush1.msra.mxu0 0.0
    %926 = vmatprep.subr.mxu0 0.0
    %927 = vmatpush1.msra.mxu0 0.0
    %928 = vmatprep.subr.mxu0 0.0
    %929 = vmatpush1.msra.mxu0 0.0
    %930 = vmatprep.subr.mxu0 0.0
    %931 = vmatpush1.msra.mxu0 0.0
    %932 = vmatprep.subr.mxu0 0.0
    %933 = vmatpush1.msra.mxu0 0.0
    %934 = vmatprep.subr.mxu0 0.0
    %935 = vmatpush1.msra.mxu0 0.0
    %936 = vmatprep.subr.mxu0 0.0
    %937 = vmatpush1.msra.mxu0 0.0
    %938 = vmatprep.subr.mxu0 0.0
    %939 = vmatpush1.msra.mxu0 0.0
    %940 = vmatprep.subr.mxu0 0.0
    %941 = vmatpush1.msra.mxu0 0.0
    %942 = vmatprep.subr.mxu0 0.0
    %943 = vmatpush1.msra.mxu0 0.0
    %944 = vmatprep.subr.mxu0 %v102
    %945 = vmatpush1.msra.mxu0 %v101
    %946 = vmatprep.subr.mxu0 %v99
    %947 = vmatpush1.msra.mxu0 %v98
    %948 = vmatprep.subr.mxu0 %v96
    %949 = vmatpush1.msra.mxu0 %v95
    %950 = vmatprep.subr.mxu0 %v93
    %951 = vmatpush1.msra.mxu0 %v92
    %952 = vmatprep.subr.mxu0 0.0
    %953 = vmatpush2.msra.mxu0 0.0
    %954 = vmatprep.subr.mxu0 0.0
    %955 = vmatpush2.msra.mxu0 0.0
    %956 = vmatprep.subr.mxu0 0.0
    %957 = vmatpush2.msra.mxu0 0.0
    %958 = vmatprep.subr.mxu0 0.0
    %959 = vmatpush2.msra.mxu0 0.0
    %960 = vmatprep.subr.mxu0 0.0
    %961 = vmatpush2.msra.mxu0 0.0
    %962 = vmatprep.subr.mxu0 0.0
    %963 = vmatpush2.msra.mxu0 0.0
    %964 = vmatprep.subr.mxu0 0.0
    %965 = vmatpush2.msra.mxu0 0.0
    %966 = vmatprep.subr.mxu0 0.0
    %967 = vmatpush2.msra.mxu0 0.0
    %968 = vmatprep.subr.mxu0 0.0
    %969 = vmatpush2.msra.mxu0 0.0
    %970 = vmatprep.subr.mxu0 0.0
    %971 = vmatpush2.msra.mxu0 0.0
    %972 = vmatprep.subr.mxu0 0.0
    %973 = vmatpush2.msra.mxu0 0.0
    %974 = vmatprep.subr.mxu0 0.0
    %975 = vmatpush2.msra.mxu0 0.0
    %976 = vmatprep.subr.mxu0 0.0
    %977 = vmatpush2.msra.mxu0 0.0
    %978 = vmatprep.subr.mxu0 0.0
    %979 = vmatpush2.msra.mxu0 0.0
    %980 = vmatprep.subr.mxu0 0.0
    %981 = vmatpush2.msra.mxu0 0.0
    %982 = vmatprep.subr.mxu0 0.0
    %983 = vmatpush2.msra.mxu0 0.0
    %984 = vmatprep.mubr.f32.mxu0 0.0
    %985 = vmatmul.mubr.f32.gmra.mxu0 %v918
    %v986 = vpop.f32.mrf.mxu0
    %v987 = vadd.f32 %v285, %v986
    %v988 = vpop.f32.mrf.mxu0
    %v989 = vadd.f32 %v289, %v988
    %990 = vdwg.mxu0
    %991 = vmatprep.subr.mxu0 0.0
    %992 = vmatpush1.msra.mxu0 0.0
    %993 = vmatprep.subr.mxu0 0.0
    %994 = vmatpush1.msra.mxu0 0.0
    %995 = vmatprep.subr.mxu0 0.0
    %996 = vmatpush1.msra.mxu0 0.0
    %997 = vmatprep.subr.mxu0 0.0
    %998 = vmatpush1.msra.mxu0 0.0
    %999 = vmatprep.subr.mxu0 0.0
    %1000 = vmatpush1.msra.mxu0 0.0
    %1001 = vmatprep.subr.mxu0 0.0
    %1002 = vmatpush1.msra.mxu0 0.0
    %1003 = vmatprep.subr.mxu0 0.0
    %1004 = vmatpush1.msra.mxu0 0.0
    %1005 = vmatprep.subr.mxu0 0.0
    %1006 = vmatpush1.msra.mxu0 0.0
    %1007 = vmatprep.subr.mxu0 0.0
    %1008 = vmatpush1.msra.mxu0 0.0
    %1009 = vmatprep.subr.mxu0 0.0
    %1010 = vmatpush1.msra.mxu0 0.0
    %1011 = vmatprep.subr.mxu0 0.0
    %1012 = vmatpush1.msra.mxu0 0.0
    %1013 = vmatprep.subr.mxu0 0.0
    %1014 = vmatpush1.msra.mxu0 0.0
    %1015 = vmatprep.subr.mxu0 0.0
    %1016 = vmatpush1.msra.mxu0 %v103
    %1017 = vmatprep.subr.mxu0 0.0
    %1018 = vmatpush1.msra.mxu0 %v100
    %1019 = vmatprep.subr.mxu0 0.0
    %1020 = vmatpush1.msra.mxu0 %v97
    %1021 = vmatprep.subr.mxu0 0.0
    %1022 = vmatpush1.msra.mxu0 %v94
    %1023 = vmatprep.subr.mxu0 0.0
    %1024 = vmatpush2.msra.mxu0 0.0
    %1025 = vmatprep.subr.mxu0 0.0
    %1026 = vmatpush2.msra.mxu0 0.0
    %1027 = vmatprep.subr.mxu0 0.0
    %1028 = vmatpush2.msra.mxu0 0.0
    %1029 = vmatprep.subr.mxu0 0.0
    %1030 = vmatpush2.msra.mxu0 0.0
    %1031 = vmatprep.subr.mxu0 0.0
    %1032 = vmatpush2.msra.mxu0 0.0
    %1033 = vmatprep.subr.mxu0 0.0
    %1034 = vmatpush2.msra.mxu0 0.0
    %1035 = vmatprep.subr.mxu0 0.0
    %1036 = vmatpush2.msra.mxu0 0.0
    %1037 = vmatprep.subr.mxu0 0.0
    %1038 = vmatpush2.msra.mxu0 0.0
    %1039 = vmatprep.subr.mxu0 0.0
    %1040 = vmatpush2.msra.mxu0 0.0
    %1041 = vmatprep.subr.mxu0 0.0
    %1042 = vmatpush2.msra.mxu0 0.0
    %1043 = vmatprep.subr.mxu0 0.0
    %1044 = vmatpush2.msra.mxu0 0.0
    %1045 = vmatprep.subr.mxu0 0.0
    %1046 = vmatpush2.msra.mxu0 0.0
    %1047 = vmatprep.subr.mxu0 0.0
    %1048 = vmatpush2.msra.mxu0 0.0
    %1049 = vmatprep.subr.mxu0 0.0
    %1050 = vmatpush2.msra.mxu0 0.0
    %1051 = vmatprep.subr.mxu0 0.0
    %1052 = vmatpush2.msra.mxu0 0.0
    %1053 = vmatprep.subr.mxu0 0.0
    %1054 = vmatpush2.msra.mxu0 0.0
    %1055 = vmatprep.mubr.f32.mxu0 0.0
    %1056 = vmatmul.mubr.f32.gmra.mxu0 %v918
    %v1057 = vpop.f32.mrf.mxu0
    %v1058 = vadd.f32 %v293, %v1057
    %v1059 = vpop.f32.mrf.mxu0
    %1060 = vdwg.mxu0
    %s1061 = scalar_lea.vmem [#allocation5], 40
    %v1062 = vld [vmem:[%s1061] sm:$0xff]
    %v1064 = vsel %vm332, %v1062, 0
    %1066 = vmatprep.subr.mxu0 0.0
    %1067 = vmatpush1.msra.mxu0 0.0
    %1068 = vmatprep.subr.mxu0 0.0
    %1069 = vmatpush1.msra.mxu0 0.0
    %1070 = vmatprep.subr.mxu0 0.0
    %1071 = vmatpush1.msra.mxu0 0.0
    %1072 = vmatprep.subr.mxu0 0.0
    %1073 = vmatpush1.msra.mxu0 0.0
    %1074 = vmatprep.subr.mxu0 0.0
    %1075 = vmatpush1.msra.mxu0 0.0
    %1076 = vmatprep.subr.mxu0 0.0
    %1077 = vmatpush1.msra.mxu0 0.0
    %1078 = vmatprep.subr.mxu0 0.0
    %1079 = vmatpush1.msra.mxu0 0.0
    %1080 = vmatprep.subr.mxu0 0.0
    %1081 = vmatpush1.msra.mxu0 0.0
    %1082 = vmatprep.subr.mxu0 0.0
    %1083 = vmatpush1.msra.mxu0 0.0
    %1084 = vmatprep.subr.mxu0 0.0
    %1085 = vmatpush1.msra.mxu0 0.0
    %1086 = vmatprep.subr.mxu0 0.0
    %1087 = vmatpush1.msra.mxu0 0.0
    %1088 = vmatprep.subr.mxu0 0.0
    %1089 = vmatpush1.msra.mxu0 0.0
    %1090 = vmatprep.subr.mxu0 %v102
    %1091 = vmatpush1.msra.mxu0 %v101
    %1092 = vmatprep.subr.mxu0 %v99
    %1093 = vmatpush1.msra.mxu0 %v98
    %1094 = vmatprep.subr.mxu0 %v96
    %1095 = vmatpush1.msra.mxu0 %v95
    %1096 = vmatprep.subr.mxu0 %v93
    %1097 = vmatpush1.msra.mxu0 %v92
    %1098 = vmatprep.subr.mxu0 0.0
    %1099 = vmatpush2.msra.mxu0 0.0
    %1100 = vmatprep.subr.mxu0 0.0
    %1101 = vmatpush2.msra.mxu0 0.0
    %1102 = vmatprep.subr.mxu0 0.0
    %1103 = vmatpush2.msra.mxu0 0.0
    %1104 = vmatprep.subr.mxu0 0.0
    %1105 = vmatpush2.msra.mxu0 0.0
    %1106 = vmatprep.subr.mxu0 0.0
    %1107 = vmatpush2.msra.mxu0 0.0
    %1108 = vmatprep.subr.mxu0 0.0
    %1109 = vmatpush2.msra.mxu0 0.0
    %1110 = vmatprep.subr.mxu0 0.0
    %1111 = vmatpush2.msra.mxu0 0.0
    %1112 = vmatprep.subr.mxu0 0.0
    %1113 = vmatpush2.msra.mxu0 0.0
    %1114 = vmatprep.subr.mxu0 0.0
    %1115 = vmatpush2.msra.mxu0 0.0
    %1116 = vmatprep.subr.mxu0 0.0
    %1117 = vmatpush2.msra.mxu0 0.0
    %1118 = vmatprep.subr.mxu0 0.0
    %1119 = vmatpush2.msra.mxu0 0.0
    %1120 = vmatprep.subr.mxu0 0.0
    %1121 = vmatpush2.msra.mxu0 0.0
    %1122 = vmatprep.subr.mxu0 0.0
    %1123 = vmatpush2.msra.mxu0 0.0
    %1124 = vmatprep.subr.mxu0 0.0
    %1125 = vmatpush2.msra.mxu0 0.0
    %1126 = vmatprep.subr.mxu0 0.0
    %1127 = vmatpush2.msra.mxu0 0.0
    %1128 = vmatprep.subr.mxu0 0.0
    %1129 = vmatpush2.msra.mxu0 0.0
    %1130 = vmatprep.mubr.f32.mxu0 0.0
    %1131 = vmatmul.mubr.f32.gmra.mxu0 %v1064
    %v1132 = vpop.f32.mrf.mxu0
    %v1133 = vadd.f32 %v285, %v1132
    %v1134 = vpop.f32.mrf.mxu0
    %v1135 = vadd.f32 %v289, %v1134
    %1136 = vdwg.mxu0
    %1137 = vmatprep.subr.mxu0 0.0
    %1138 = vmatpush1.msra.mxu0 0.0
    %1139 = vmatprep.subr.mxu0 0.0
    %1140 = vmatpush1.msra.mxu0 0.0
    %1141 = vmatprep.subr.mxu0 0.0
    %1142 = vmatpush1.msra.mxu0 0.0
    %1143 = vmatprep.subr.mxu0 0.0
    %1144 = vmatpush1.msra.mxu0 0.0
    %1145 = vmatprep.subr.mxu0 0.0
    %1146 = vmatpush1.msra.mxu0 0.0
    %1147 = vmatprep.subr.mxu0 0.0
    %1148 = vmatpush1.msra.mxu0 0.0
    %1149 = vmatprep.subr.mxu0 0.0
    %1150 = vmatpush1.msra.mxu0 0.0
    %1151 = vmatprep.subr.mxu0 0.0
    %1152 = vmatpush1.msra.mxu0 0.0
    %1153 = vmatprep.subr.mxu0 0.0
    %1154 = vmatpush1.msra.mxu0 0.0
    %1155 = vmatprep.subr.mxu0 0.0
    %1156 = vmatpush1.msra.mxu0 0.0
    %1157 = vmatprep.subr.mxu0 0.0
    %1158 = vmatpush1.msra.mxu0 0.0
    %1159 = vmatprep.subr.mxu0 0.0
    %1160 = vmatpush1.msra.mxu0 0.0
    %1161 = vmatprep.subr.mxu0 0.0
    %1162 = vmatpush1.msra.mxu0 %v103
    %1163 = vmatprep.subr.mxu0 0.0
    %1164 = vmatpush1.msra.mxu0 %v100
    %1165 = vmatprep.subr.mxu0 0.0
    %1166 = vmatpush1.msra.mxu0 %v97
    %1167 = vmatprep.subr.mxu0 0.0
    %1168 = vmatpush1.msra.mxu0 %v94
    %1169 = vmatprep.subr.mxu0 0.0
    %1170 = vmatpush2.msra.mxu0 0.0
    %1171 = vmatprep.subr.mxu0 0.0
    %1172 = vmatpush2.msra.mxu0 0.0
    %1173 = vmatprep.subr.mxu0 0.0
    %1174 = vmatpush2.msra.mxu0 0.0
    %1175 = vmatprep.subr.mxu0 0.0
    %1176 = vmatpush2.msra.mxu0 0.0
    %1177 = vmatprep.subr.mxu0 0.0
    %1178 = vmatpush2.msra.mxu0 0.0
    %1179 = vmatprep.subr.mxu0 0.0
    %1180 = vmatpush2.msra.mxu0 0.0
    %1181 = vmatprep.subr.mxu0 0.0
    %1182 = vmatpush2.msra.mxu0 0.0
    %1183 = vmatprep.subr.mxu0 0.0
    %1184 = vmatpush2.msra.mxu0 0.0
    %1185 = vmatprep.subr.mxu0 0.0
    %1186 = vmatpush2.msra.mxu0 0.0
    %1187 = vmatprep.subr.mxu0 0.0
    %1188 = vmatpush2.msra.mxu0 0.0
    %1189 = vmatprep.subr.mxu0 0.0
    %1190 = vmatpush2.msra.mxu0 0.0
    %1191 = vmatprep.subr.mxu0 0.0
    %1192 = vmatpush2.msra.mxu0 0.0
    %1193 = vmatprep.subr.mxu0 0.0
    %1194 = vmatpush2.msra.mxu0 0.0
    %1195 = vmatprep.subr.mxu0 0.0
    %1196 = vmatpush2.msra.mxu0 0.0
    %1197 = vmatprep.subr.mxu0 0.0
    %1198 = vmatpush2.msra.mxu0 0.0
    %1199 = vmatprep.subr.mxu0 0.0
    %1200 = vmatpush2.msra.mxu0 0.0
    %1201 = vmatprep.mubr.f32.mxu0 0.0
    %1202 = vmatmul.mubr.f32.gmra.mxu0 %v1064
    %v1203 = vpop.f32.mrf.mxu0
    %v1204 = vadd.f32 %v293, %v1203
    %v1205 = vpop.f32.mrf.mxu0
    %1206 = vdwg.mxu0
    %s1207 = scalar_lea.vmem [#allocation5], 48
    %v1208 = vld [vmem:[%s1207] sm:$0xff]
    %v1210 = vsel %vm332, %v1208, 0
    %1212 = vmatprep.subr.mxu0 0.0
    %1213 = vmatpush1.msra.mxu0 0.0
    %1214 = vmatprep.subr.mxu0 0.0
    %1215 = vmatpush1.msra.mxu0 0.0
    %1216 = vmatprep.subr.mxu0 0.0
    %1217 = vmatpush1.msra.mxu0 0.0
    %1218 = vmatprep.subr.mxu0 0.0
    %1219 = vmatpush1.msra.mxu0 0.0
    %1220 = vmatprep.subr.mxu0 0.0
    %1221 = vmatpush1.msra.mxu0 0.0
    %1222 = vmatprep.subr.mxu0 0.0
    %1223 = vmatpush1.msra.mxu0 0.0
    %1224 = vmatprep.subr.mxu0 0.0
    %1225 = vmatpush1.msra.mxu0 0.0
    %1226 = vmatprep.subr.mxu0 0.0
    %1227 = vmatpush1.msra.mxu0 0.0
    %1228 = vmatprep.subr.mxu0 0.0
    %1229 = vmatpush1.msra.mxu0 0.0
    %1230 = vmatprep.subr.mxu0 0.0
    %1231 = vmatpush1.msra.mxu0 0.0
    %1232 = vmatprep.subr.mxu0 0.0
    %1233 = vmatpush1.msra.mxu0 0.0
    %1234 = vmatprep.subr.mxu0 0.0
    %1235 = vmatpush1.msra.mxu0 0.0
    %1236 = vmatprep.subr.mxu0 %v102
    %1237 = vmatpush1.msra.mxu0 %v101
    %1238 = vmatprep.subr.mxu0 %v99
    %1239 = vmatpush1.msra.mxu0 %v98
    %1240 = vmatprep.subr.mxu0 %v96
    %1241 = vmatpush1.msra.mxu0 %v95
    %1242 = vmatprep.subr.mxu0 %v93
    %1243 = vmatpush1.msra.mxu0 %v92
    %1244 = vmatprep.subr.mxu0 0.0
    %1245 = vmatpush2.msra.mxu0 0.0
    %1246 = vmatprep.subr.mxu0 0.0
    %1247 = vmatpush2.msra.mxu0 0.0
    %1248 = vmatprep.subr.mxu0 0.0
    %1249 = vmatpush2.msra.mxu0 0.0
    %1250 = vmatprep.subr.mxu0 0.0
    %1251 = vmatpush2.msra.mxu0 0.0
    %1252 = vmatprep.subr.mxu0 0.0
    %1253 = vmatpush2.msra.mxu0 0.0
    %1254 = vmatprep.subr.mxu0 0.0
    %1255 = vmatpush2.msra.mxu0 0.0
    %1256 = vmatprep.subr.mxu0 0.0
    %1257 = vmatpush2.msra.mxu0 0.0
    %1258 = vmatprep.subr.mxu0 0.0
    %1259 = vmatpush2.msra.mxu0 0.0
    %1260 = vmatprep.subr.mxu0 0.0
    %1261 = vmatpush2.msra.mxu0 0.0
    %1262 = vmatprep.subr.mxu0 0.0
    %1263 = vmatpush2.msra.mxu0 0.0
    %1264 = vmatprep.subr.mxu0 0.0
    %1265 = vmatpush2.msra.mxu0 0.0
    %1266 = vmatprep.subr.mxu0 0.0
    %1267 = vmatpush2.msra.mxu0 0.0
    %1268 = vmatprep.subr.mxu0 0.0
    %1269 = vmatpush2.msra.mxu0 0.0
    %1270 = vmatprep.subr.mxu0 0.0
    %1271 = vmatpush2.msra.mxu0 0.0
    %1272 = vmatprep.subr.mxu0 0.0
    %1273 = vmatpush2.msra.mxu0 0.0
    %1274 = vmatprep.subr.mxu0 0.0
    %1275 = vmatpush2.msra.mxu0 0.0
    %1276 = vmatprep.mubr.f32.mxu0 0.0
    %1277 = vmatmul.mubr.f32.gmra.mxu0 %v1210
    %v1278 = vpop.f32.mrf.mxu0
    %v1279 = vadd.f32 %v285, %v1278
    %v1280 = vpop.f32.mrf.mxu0
    %v1281 = vadd.f32 %v289, %v1280
    %1282 = vdwg.mxu0
    %1283 = vmatprep.subr.mxu0 0.0
    %1284 = vmatpush1.msra.mxu0 0.0
    %1285 = vmatprep.subr.mxu0 0.0
    %1286 = vmatpush1.msra.mxu0 0.0
    %1287 = vmatprep.subr.mxu0 0.0
    %1288 = vmatpush1.msra.mxu0 0.0
    %1289 = vmatprep.subr.mxu0 0.0
    %1290 = vmatpush1.msra.mxu0 0.0
    %1291 = vmatprep.subr.mxu0 0.0
    %1292 = vmatpush1.msra.mxu0 0.0
    %1293 = vmatprep.subr.mxu0 0.0
    %1294 = vmatpush1.msra.mxu0 0.0
    %1295 = vmatprep.subr.mxu0 0.0
    %1296 = vmatpush1.msra.mxu0 0.0
    %1297 = vmatprep.subr.mxu0 0.0
    %1298 = vmatpush1.msra.mxu0 0.0
    %1299 = vmatprep.subr.mxu0 0.0
    %1300 = vmatpush1.msra.mxu0 0.0
    %1301 = vmatprep.subr.mxu0 0.0
    %1302 = vmatpush1.msra.mxu0 0.0
    %1303 = vmatprep.subr.mxu0 0.0
    %1304 = vmatpush1.msra.mxu0 0.0
    %1305 = vmatprep.subr.mxu0 0.0
    %1306 = vmatpush1.msra.mxu0 0.0
    %1307 = vmatprep.subr.mxu0 0.0
    %1308 = vmatpush1.msra.mxu0 %v103
    %1309 = vmatprep.subr.mxu0 0.0
    %1310 = vmatpush1.msra.mxu0 %v100
    %1311 = vmatprep.subr.mxu0 0.0
    %1312 = vmatpush1.msra.mxu0 %v97
    %1313 = vmatprep.subr.mxu0 0.0
    %1314 = vmatpush1.msra.mxu0 %v94
    %1315 = vmatprep.subr.mxu0 0.0
    %1316 = vmatpush2.msra.mxu0 0.0
    %1317 = vmatprep.subr.mxu0 0.0
    %1318 = vmatpush2.msra.mxu0 0.0
    %1319 = vmatprep.subr.mxu0 0.0
    %1320 = vmatpush2.msra.mxu0 0.0
    %1321 = vmatprep.subr.mxu0 0.0
    %1322 = vmatpush2.msra.mxu0 0.0
    %1323 = vmatprep.subr.mxu0 0.0
    %1324 = vmatpush2.msra.mxu0 0.0
    %1325 = vmatprep.subr.mxu0 0.0
    %1326 = vmatpush2.msra.mxu0 0.0
    %1327 = vmatprep.subr.mxu0 0.0
    %1328 = vmatpush2.msra.mxu0 0.0
    %1329 = vmatprep.subr.mxu0 0.0
    %1330 = vmatpush2.msra.mxu0 0.0
    %1331 = vmatprep.subr.mxu0 0.0
    %1332 = vmatpush2.msra.mxu0 0.0
    %1333 = vmatprep.subr.mxu0 0.0
    %1334 = vmatpush2.msra.mxu0 0.0
    %1335 = vmatprep.subr.mxu0 0.0
    %1336 = vmatpush2.msra.mxu0 0.0
    %1337 = vmatprep.subr.mxu0 0.0
    %1338 = vmatpush2.msra.mxu0 0.0
    %1339 = vmatprep.subr.mxu0 0.0
    %1340 = vmatpush2.msra.mxu0 0.0
    %1341 = vmatprep.subr.mxu0 0.0
    %1342 = vmatpush2.msra.mxu0 0.0
    %1343 = vmatprep.subr.mxu0 0.0
    %1344 = vmatpush2.msra.mxu0 0.0
    %1345 = vmatprep.subr.mxu0 0.0
    %1346 = vmatpush2.msra.mxu0 0.0
    %1347 = vmatprep.mubr.f32.mxu0 0.0
    %1348 = vmatmul.mubr.f32.gmra.mxu0 %v1210
    %v1349 = vpop.f32.mrf.mxu0
    %v1350 = vadd.f32 %v293, %v1349
    %v1351 = vpop.f32.mrf.mxu0
    %1352 = vdwg.mxu0
    %s1353 = scalar_lea.vmem [#allocation5], 56
    %v1354 = vld [vmem:[%s1353] sm:$0xff]
    %v1356 = vsel %vm332, %v1354, 0
    %1358 = vmatprep.subr.mxu0 0.0
    %1359 = vmatpush1.msra.mxu0 0.0
    %1360 = vmatprep.subr.mxu0 0.0
    %1361 = vmatpush1.msra.mxu0 0.0
    %1362 = vmatprep.subr.mxu0 0.0
    %1363 = vmatpush1.msra.mxu0 0.0
    %1364 = vmatprep.subr.mxu0 0.0
    %1365 = vmatpush1.msra.mxu0 0.0
    %1366 = vmatprep.subr.mxu0 0.0
    %1367 = vmatpush1.msra.mxu0 0.0
    %1368 = vmatprep.subr.mxu0 0.0
    %1369 = vmatpush1.msra.mxu0 0.0
    %1370 = vmatprep.subr.mxu0 0.0
    %1371 = vmatpush1.msra.mxu0 0.0
    %1372 = vmatprep.subr.mxu0 0.0
    %1373 = vmatpush1.msra.mxu0 0.0
    %1374 = vmatprep.subr.mxu0 0.0
    %1375 = vmatpush1.msra.mxu0 0.0
    %1376 = vmatprep.subr.mxu0 0.0
    %1377 = vmatpush1.msra.mxu0 0.0
    %1378 = vmatprep.subr.mxu0 0.0
    %1379 = vmatpush1.msra.mxu0 0.0
    %1380 = vmatprep.subr.mxu0 0.0
    %1381 = vmatpush1.msra.mxu0 0.0
    %1382 = vmatprep.subr.mxu0 %v102
    %1383 = vmatpush1.msra.mxu0 %v101
    %1384 = vmatprep.subr.mxu0 %v99
    %1385 = vmatpush1.msra.mxu0 %v98
    %1386 = vmatprep.subr.mxu0 %v96
    %1387 = vmatpush1.msra.mxu0 %v95
    %1388 = vmatprep.subr.mxu0 %v93
    %1389 = vmatpush1.msra.mxu0 %v92
    %1390 = vmatprep.subr.mxu0 0.0
    %1391 = vmatpush2.msra.mxu0 0.0
    %1392 = vmatprep.subr.mxu0 0.0
    %1393 = vmatpush2.msra.mxu0 0.0
    %1394 = vmatprep.subr.mxu0 0.0
    %1395 = vmatpush2.msra.mxu0 0.0
    %1396 = vmatprep.subr.mxu0 0.0
    %1397 = vmatpush2.msra.mxu0 0.0
    %1398 = vmatprep.subr.mxu0 0.0
    %1399 = vmatpush2.msra.mxu0 0.0
    %1400 = vmatprep.subr.mxu0 0.0
    %1401 = vmatpush2.msra.mxu0 0.0
    %1402 = vmatprep.subr.mxu0 0.0
    %1403 = vmatpush2.msra.mxu0 0.0
    %1404 = vmatprep.subr.mxu0 0.0
    %1405 = vmatpush2.msra.mxu0 0.0
    %1406 = vmatprep.subr.mxu0 0.0
    %1407 = vmatpush2.msra.mxu0 0.0
    %1408 = vmatprep.subr.mxu0 0.0
    %1409 = vmatpush2.msra.mxu0 0.0
    %1410 = vmatprep.subr.mxu0 0.0
    %1411 = vmatpush2.msra.mxu0 0.0
    %1412 = vmatprep.subr.mxu0 0.0
    %1413 = vmatpush2.msra.mxu0 0.0
    %1414 = vmatprep.subr.mxu0 0.0
    %1415 = vmatpush2.msra.mxu0 0.0
    %1416 = vmatprep.subr.mxu0 0.0
    %1417 = vmatpush2.msra.mxu0 0.0
    %1418 = vmatprep.subr.mxu0 0.0
    %1419 = vmatpush2.msra.mxu0 0.0
    %1420 = vmatprep.subr.mxu0 0.0
    %1421 = vmatpush2.msra.mxu0 0.0
    %1422 = vmatprep.mubr.f32.mxu0 0.0
    %1423 = vmatmul.mubr.f32.gmra.mxu0 %v1356
    %v1424 = vpop.f32.mrf.mxu0
    %v1425 = vadd.f32 %v285, %v1424
    %v1426 = vpop.f32.mrf.mxu0
    %v1427 = vadd.f32 %v289, %v1426
    %1428 = vdwg.mxu0
    %1429 = vmatprep.subr.mxu0 0.0
    %1430 = vmatpush1.msra.mxu0 0.0
    %1431 = vmatprep.subr.mxu0 0.0
    %1432 = vmatpush1.msra.mxu0 0.0
    %1433 = vmatprep.subr.mxu0 0.0
    %1434 = vmatpush1.msra.mxu0 0.0
    %1435 = vmatprep.subr.mxu0 0.0
    %1436 = vmatpush1.msra.mxu0 0.0
    %1437 = vmatprep.subr.mxu0 0.0
    %1438 = vmatpush1.msra.mxu0 0.0
    %1439 = vmatprep.subr.mxu0 0.0
    %1440 = vmatpush1.msra.mxu0 0.0
    %1441 = vmatprep.subr.mxu0 0.0
    %1442 = vmatpush1.msra.mxu0 0.0
    %1443 = vmatprep.subr.mxu0 0.0
    %1444 = vmatpush1.msra.mxu0 0.0
    %1445 = vmatprep.subr.mxu0 0.0
    %1446 = vmatpush1.msra.mxu0 0.0
    %1447 = vmatprep.subr.mxu0 0.0
    %1448 = vmatpush1.msra.mxu0 0.0
    %1449 = vmatprep.subr.mxu0 0.0
    %1450 = vmatpush1.msra.mxu0 0.0
    %1451 = vmatprep.subr.mxu0 0.0
    %1452 = vmatpush1.msra.mxu0 0.0
    %1453 = vmatprep.subr.mxu0 0.0
    %1454 = vmatpush1.msra.mxu0 %v103
    %1455 = vmatprep.subr.mxu0 0.0
    %1456 = vmatpush1.msra.mxu0 %v100
    %1457 = vmatprep.subr.mxu0 0.0
    %1458 = vmatpush1.msra.mxu0 %v97
    %1459 = vmatprep.subr.mxu0 0.0
    %1460 = vmatpush1.msra.mxu0 %v94
    %1461 = vmatprep.subr.mxu0 0.0
    %1462 = vmatpush2.msra.mxu0 0.0
    %1463 = vmatprep.subr.mxu0 0.0
    %1464 = vmatpush2.msra.mxu0 0.0
    %1465 = vmatprep.subr.mxu0 0.0
    %1466 = vmatpush2.msra.mxu0 0.0
    %1467 = vmatprep.subr.mxu0 0.0
    %1468 = vmatpush2.msra.mxu0 0.0
    %1469 = vmatprep.subr.mxu0 0.0
    %1470 = vmatpush2.msra.mxu0 0.0
    %1471 = vmatprep.subr.mxu0 0.0
    %1472 = vmatpush2.msra.mxu0 0.0
    %1473 = vmatprep.subr.mxu0 0.0
    %1474 = vmatpush2.msra.mxu0 0.0
    %1475 = vmatprep.subr.mxu0 0.0
    %1476 = vmatpush2.msra.mxu0 0.0
    %1477 = vmatprep.subr.mxu0 0.0
    %1478 = vmatpush2.msra.mxu0 0.0
    %1479 = vmatprep.subr.mxu0 0.0
    %1480 = vmatpush2.msra.mxu0 0.0
    %1481 = vmatprep.subr.mxu0 0.0
    %1482 = vmatpush2.msra.mxu0 0.0
    %1483 = vmatprep.subr.mxu0 0.0
    %1484 = vmatpush2.msra.mxu0 0.0
    %1485 = vmatprep.subr.mxu0 0.0
    %1486 = vmatpush2.msra.mxu0 0.0
    %1487 = vmatprep.subr.mxu0 0.0
    %1488 = vmatpush2.msra.mxu0 0.0
    %1489 = vmatprep.subr.mxu0 0.0
    %1490 = vmatpush2.msra.mxu0 0.0
    %1491 = vmatprep.subr.mxu0 0.0
    %1492 = vmatpush2.msra.mxu0 0.0
    %1493 = vmatprep.mubr.f32.mxu0 0.0
    %1494 = vmatmul.mubr.f32.gmra.mxu0 %v1356
    %v1495 = vpop.f32.mrf.mxu0
    %v1496 = vadd.f32 %v293, %v1495
    %v1497 = vpop.f32.mrf.mxu0
    %1498 = vdwg.mxu0
    %v1499 = vld [vmem:[#allocation2] sm:$0xff]
    %v1500 = vld [vmem:[#allocation3] sm:$0xff]
    %v1501 = vld [vmem:[#allocation4] sm:$0xff]
    %s1502 = smul.u32 0, 8
    %1503 = vmatprep.subr.mxu0 %v150
    %1504 = vmatpush1.msra.mxu0 %v149
    %1505 = vmatprep.subr.mxu0 %v147
    %1506 = vmatpush1.msra.mxu0 %v146
    %1507 = vmatprep.subr.mxu0 %v144
    %1508 = vmatpush1.msra.mxu0 %v143
    %1509 = vmatprep.subr.mxu0 %v141
    %1510 = vmatpush1.msra.mxu0 %v140
    %1511 = vmatprep.subr.mxu0 %v138
    %1512 = vmatpush1.msra.mxu0 %v137
    %1513 = vmatprep.subr.mxu0 %v135
    %1514 = vmatpush1.msra.mxu0 %v134
    %1515 = vmatprep.subr.mxu0 %v132
    %1516 = vmatpush1.msra.mxu0 %v131
    %1517 = vmatprep.subr.mxu0 %v129
    %1518 = vmatpush1.msra.mxu0 %v128
    %1519 = vmatprep.subr.mxu0 %v126
    %1520 = vmatpush1.msra.mxu0 %v125
    %1521 = vmatprep.subr.mxu0 %v123
    %1522 = vmatpush1.msra.mxu0 %v122
    %1523 = vmatprep.subr.mxu0 %v120
    %1524 = vmatpush1.msra.mxu0 %v119
    %1525 = vmatprep.subr.mxu0 %v117
    %1526 = vmatpush1.msra.mxu0 %v116
    %1527 = vmatprep.subr.mxu0 %v114
    %1528 = vmatpush1.msra.mxu0 %v113
    %1529 = vmatprep.subr.mxu0 %v111
    %1530 = vmatpush1.msra.mxu0 %v110
    %1531 = vmatprep.subr.mxu0 %v108
    %1532 = vmatpush1.msra.mxu0 %v107
    %1533 = vmatprep.subr.mxu0 %v105
    %1534 = vmatpush1.msra.mxu0 %v104
    %1535 = vmatprep.subr.mxu0 0.0
    %1536 = vmatpush2.msra.mxu0 0.0
    %1537 = vmatprep.subr.mxu0 0.0
    %1538 = vmatpush2.msra.mxu0 0.0
    %1539 = vmatprep.subr.mxu0 0.0
    %1540 = vmatpush2.msra.mxu0 0.0
    %1541 = vmatprep.subr.mxu0 0.0
    %1542 = vmatpush2.msra.mxu0 0.0
    %1543 = vmatprep.subr.mxu0 0.0
    %1544 = vmatpush2.msra.mxu0 0.0
    %1545 = vmatprep.subr.mxu0 0.0
    %1546 = vmatpush2.msra.mxu0 0.0
    %1547 = vmatprep.subr.mxu0 0.0
    %1548 = vmatpush2.msra.mxu0 0.0
    %1549 = vmatprep.subr.mxu0 0.0
    %1550 = vmatpush2.msra.mxu0 0.0
    %1551 = vmatprep.subr.mxu0 0.0
    %1552 = vmatpush2.msra.mxu0 0.0
    %1553 = vmatprep.subr.mxu0 0.0
    %1554 = vmatpush2.msra.mxu0 0.0
    %1555 = vmatprep.subr.mxu0 0.0
    %1556 = vmatpush2.msra.mxu0 0.0
    %1557 = vmatprep.subr.mxu0 0.0
    %1558 = vmatpush2.msra.mxu0 0.0
    %1559 = vmatprep.subr.mxu0 0.0
    %1560 = vmatpush2.msra.mxu0 0.0
    %1561 = vmatprep.subr.mxu0 0.0
    %1562 = vmatpush2.msra.mxu0 0.0
    %1563 = vmatprep.subr.mxu0 0.0
    %1564 = vmatpush2.msra.mxu0 0.0
    %1565 = vmatprep.subr.mxu0 0.0
    %1566 = vmatpush2.msra.mxu0 0.0
    %1567 = vmatprep.mubr.f32.mxu0 0.0
    %1568 = vmatmul.mubr.f32.gmra.mxu0 %v1499
    %v1569 = vpop.f32.mrf.mxu0
    %v1570 = vadd.f32 0.0, %v1569
    %v1571 = vpop.f32.mrf.mxu0
    %v1572 = vadd.f32 0.0, %v1571
    %1573 = vdwg.mxu0
    %1574 = vmatprep.subr.mxu0 0.0
    %1575 = vmatpush1.msra.mxu0 %v151
    %1576 = vmatprep.subr.mxu0 0.0
    %1577 = vmatpush1.msra.mxu0 %v148
    %1578 = vmatprep.subr.mxu0 0.0
    %1579 = vmatpush1.msra.mxu0 %v145
    %1580 = vmatprep.subr.mxu0 0.0
    %1581 = vmatpush1.msra.mxu0 %v142
    %1582 = vmatprep.subr.mxu0 0.0
    %1583 = vmatpush1.msra.mxu0 %v139
    %1584 = vmatprep.subr.mxu0 0.0
    %1585 = vmatpush1.msra.mxu0 %v136
    %1586 = vmatprep.subr.mxu0 0.0
    %1587 = vmatpush1.msra.mxu0 %v133
    %1588 = vmatprep.subr.mxu0 0.0
    %1589 = vmatpush1.msra.mxu0 %v130
    %1590 = vmatprep.subr.mxu0 0.0
    %1591 = vmatpush1.msra.mxu0 %v127
    %1592 = vmatprep.subr.mxu0 0.0
    %1593 = vmatpush1.msra.mxu0 %v124
    %1594 = vmatprep.subr.mxu0 0.0
    %1595 = vmatpush1.msra.mxu0 %v121
    %1596 = vmatprep.subr.mxu0 0.0
    %1597 = vmatpush1.msra.mxu0 %v118
    %1598 = vmatprep.subr.mxu0 0.0
    %1599 = vmatpush1.msra.mxu0 %v115
    %1600 = vmatprep.subr.mxu0 0.0
    %1601 = vmatpush1.msra.mxu0 %v112
    %1602 = vmatprep.subr.mxu0 0.0
    %1603 = vmatpush1.msra.mxu0 %v109
    %1604 = vmatprep.subr.mxu0 0.0
    %1605 = vmatpush1.msra.mxu0 %v106
    %1606 = vmatprep.subr.mxu0 0.0
    %1607 = vmatpush2.msra.mxu0 0.0
    %1608 = vmatprep.subr.mxu0 0.0
    %1609 = vmatpush2.msra.mxu0 0.0
    %1610 = vmatprep.subr.mxu0 0.0
    %1611 = vmatpush2.msra.mxu0 0.0
    %1612 = vmatprep.subr.mxu0 0.0
    %1613 = vmatpush2.msra.mxu0 0.0
    %1614 = vmatprep.subr.mxu0 0.0
    %1615 = vmatpush2.msra.mxu0 0.0
    %1616 = vmatprep.subr.mxu0 0.0
    %1617 = vmatpush2.msra.mxu0 0.0
    %1618 = vmatprep.subr.mxu0 0.0
    %1619 = vmatpush2.msra.mxu0 0.0
    %1620 = vmatprep.subr.mxu0 0.0
    %1621 = vmatpush2.msra.mxu0 0.0
    %1622 = vmatprep.subr.mxu0 0.0
    %1623 = vmatpush2.msra.mxu0 0.0
    %1624 = vmatprep.subr.mxu0 0.0
    %1625 = vmatpush2.msra.mxu0 0.0
    %1626 = vmatprep.subr.mxu0 0.0
    %1627 = vmatpush2.msra.mxu0 0.0
    %1628 = vmatprep.subr.mxu0 0.0
    %1629 = vmatpush2.msra.mxu0 0.0
    %1630 = vmatprep.subr.mxu0 0.0
    %1631 = vmatpush2.msra.mxu0 0.0
    %1632 = vmatprep.subr.mxu0 0.0
    %1633 = vmatpush2.msra.mxu0 0.0
    %1634 = vmatprep.subr.mxu0 0.0
    %1635 = vmatpush2.msra.mxu0 0.0
    %1636 = vmatprep.subr.mxu0 0.0
    %1637 = vmatpush2.msra.mxu0 0.0
    %1638 = vmatprep.mubr.f32.mxu0 0.0
    %1639 = vmatmul.mubr.f32.gmra.mxu0 %v1499
    %v1640 = vpop.f32.mrf.mxu0
    %v1641 = vadd.f32 0.0, %v1640
    %v1642 = vpop.f32.mrf.mxu0
    %1643 = vdwg.mxu0
    %v1644 = vadd.f32 %v403, %v1570
    %v1645 = vxor.u32 %v1644, 2147483648
    %v1646 = vmul.f32 %v1645, 1.442695
    %v1647 = vpow.pop %v1646
    %v1648 = vadd.f32 %v1647, 1.0
    %v1649 = vrcp.pop %v1648
    %v1650 = vmul.f32 1.0, %v1649
    %v1651 = vadd.f32 %v405, %v1572
    %v1652 = vxor.u32 %v1651, 2147483648
    %v1653 = vmul.f32 %v1652, 1.442695
    %v1654 = vpow.pop %v1653
    %v1655 = vadd.f32 %v1654, 1.0
    %v1656 = vrcp.pop %v1655
    %v1657 = vmul.f32 1.0, %v1656
    %v1658 = vadd.f32 %v1641, %v302
    %v1659 = vmul.f32 %v1650, %v1658
    %v1660 = vadd.f32 %v474, %v1659
    %v1661 = vtanh.pop %v1660
    %v1662 = vsub.f32 1.0, %v1657
    %v1663 = vmul.f32 %v1662, %v1661
    %v1664 = vmul.f32 %v1657, %v1499
    %v1665 = vadd.f32 %v1663, %v1664
    %1666 = vmatprep.subr.mxu0 %v213
    %1667 = vmatpush1.msra.mxu0 %v212
    %1668 = vmatprep.subr.mxu0 %v209
    %1669 = vmatpush1.msra.mxu0 %v208
    %1670 = vmatprep.subr.mxu0 %v205
    %1671 = vmatpush1.msra.mxu0 %v204
    %1672 = vmatprep.subr.mxu0 %v201
    %1673 = vmatpush1.msra.mxu0 %v200
    %1674 = vmatprep.subr.mxu0 %v197
    %1675 = vmatpush1.msra.mxu0 %v196
    %1676 = vmatprep.subr.mxu0 %v193
    %1677 = vmatpush1.msra.mxu0 %v192
    %1678 = vmatprep.subr.mxu0 %v189
    %1679 = vmatpush1.msra.mxu0 %v188
    %1680 = vmatprep.subr.mxu0 %v185
    %1681 = vmatpush1.msra.mxu0 %v184
    %1682 = vmatprep.subr.mxu0 %v181
    %1683 = vmatpush1.msra.mxu0 %v180
    %1684 = vmatprep.subr.mxu0 %v177
    %1685 = vmatpush1.msra.mxu0 %v176
    %1686 = vmatprep.subr.mxu0 %v173
    %1687 = vmatpush1.msra.mxu0 %v172
    %1688 = vmatprep.subr.mxu0 %v169
    %1689 = vmatpush1.msra.mxu0 %v168
    %1690 = vmatprep.subr.mxu0 %v165
    %1691 = vmatpush1.msra.mxu0 %v164
    %1692 = vmatprep.subr.mxu0 %v161
    %1693 = vmatpush1.msra.mxu0 %v160
    %1694 = vmatprep.subr.mxu0 %v157
    %1695 = vmatpush1.msra.mxu0 %v156
    %1696 = vmatprep.subr.mxu0 %v153
    %1697 = vmatpush1.msra.mxu0 %v152
    %1698 = vmatprep.subr.mxu0 %v277
    %1699 = vmatpush2.msra.mxu0 %v276
    %1700 = vmatprep.subr.mxu0 %v273
    %1701 = vmatpush2.msra.mxu0 %v272
    %1702 = vmatprep.subr.mxu0 %v269
    %1703 = vmatpush2.msra.mxu0 %v268
    %1704 = vmatprep.subr.mxu0 %v265
    %1705 = vmatpush2.msra.mxu0 %v264
    %1706 = vmatprep.subr.mxu0 %v261
    %1707 = vmatpush2.msra.mxu0 %v260
    %1708 = vmatprep.subr.mxu0 %v257
    %1709 = vmatpush2.msra.mxu0 %v256
    %1710 = vmatprep.subr.mxu0 %v253
    %1711 = vmatpush2.msra.mxu0 %v252
    %1712 = vmatprep.subr.mxu0 %v249
    %1713 = vmatpush2.msra.mxu0 %v248
    %1714 = vmatprep.subr.mxu0 %v245
    %1715 = vmatpush2.msra.mxu0 %v244
    %1716 = vmatprep.subr.mxu0 %v241
    %1717 = vmatpush2.msra.mxu0 %v240
    %1718 = vmatprep.subr.mxu0 %v237
    %1719 = vmatpush2.msra.mxu0 %v236
    %1720 = vmatprep.subr.mxu0 %v233
    %1721 = vmatpush2.msra.mxu0 %v232
    %1722 = vmatprep.subr.mxu0 %v229
    %1723 = vmatpush2.msra.mxu0 %v228
    %1724 = vmatprep.subr.mxu0 %v225
    %1725 = vmatpush2.msra.mxu0 %v224
    %1726 = vmatprep.subr.mxu0 %v221
    %1727 = vmatpush2.msra.mxu0 %v220
    %1728 = vmatprep.subr.mxu0 %v217
    %1729 = vmatpush2.msra.mxu0 %v216
    %1730 = vmatprep.mubr.f32.mxu0 %v1500
    %1731 = vmatmul.mubr.f32.gmra.mxu0 %v1665
    %v1732 = vpop.f32.mrf.mxu0
    %v1733 = vadd.f32 %v309, %v1732
    %v1734 = vpop.f32.mrf.mxu0
    %v1735 = vadd.f32 %v313, %v1734
    %1736 = vdwg.mxu0
    %1737 = vmatprep.subr.mxu0 %v215
    %1738 = vmatpush1.msra.mxu0 %v214
    %1739 = vmatprep.subr.mxu0 %v211
    %1740 = vmatpush1.msra.mxu0 %v210
    %1741 = vmatprep.subr.mxu0 %v207
    %1742 = vmatpush1.msra.mxu0 %v206
    %1743 = vmatprep.subr.mxu0 %v203
    %1744 = vmatpush1.msra.mxu0 %v202
    %1745 = vmatprep.subr.mxu0 %v199
    %1746 = vmatpush1.msra.mxu0 %v198
    %1747 = vmatprep.subr.mxu0 %v195
    %1748 = vmatpush1.msra.mxu0 %v194
    %1749 = vmatprep.subr.mxu0 %v191
    %1750 = vmatpush1.msra.mxu0 %v190
    %1751 = vmatprep.subr.mxu0 %v187
    %1752 = vmatpush1.msra.mxu0 %v186
    %1753 = vmatprep.subr.mxu0 %v183
    %1754 = vmatpush1.msra.mxu0 %v182
    %1755 = vmatprep.subr.mxu0 %v179
    %1756 = vmatpush1.msra.mxu0 %v178
    %1757 = vmatprep.subr.mxu0 %v175
    %1758 = vmatpush1.msra.mxu0 %v174
    %1759 = vmatprep.subr.mxu0 %v171
    %1760 = vmatpush1.msra.mxu0 %v170
    %1761 = vmatprep.subr.mxu0 %v167
    %1762 = vmatpush1.msra.mxu0 %v166
    %1763 = vmatprep.subr.mxu0 %v163
    %1764 = vmatpush1.msra.mxu0 %v162
    %1765 = vmatprep.subr.mxu0 %v159
    %1766 = vmatpush1.msra.mxu0 %v158
    %1767 = vmatprep.subr.mxu0 %v155
    %1768 = vmatpush1.msra.mxu0 %v154
    %1769 = vmatprep.subr.mxu0 %v279
    %1770 = vmatpush2.msra.mxu0 %v278
    %1771 = vmatprep.subr.mxu0 %v275
    %1772 = vmatpush2.msra.mxu0 %v274
    %1773 = vmatprep.subr.mxu0 %v271
    %1774 = vmatpush2.msra.mxu0 %v270
    %1775 = vmatprep.subr.mxu0 %v267
    %1776 = vmatpush2.msra.mxu0 %v266
    %1777 = vmatprep.subr.mxu0 %v263
    %1778 = vmatpush2.msra.mxu0 %v262
    %1779 = vmatprep.subr.mxu0 %v259
    %1780 = vmatpush2.msra.mxu0 %v258
    %1781 = vmatprep.subr.mxu0 %v255
    %1782 = vmatpush2.msra.mxu0 %v254
    %1783 = vmatprep.subr.mxu0 %v251
    %1784 = vmatpush2.msra.mxu0 %v250
    %1785 = vmatprep.subr.mxu0 %v247
    %1786 = vmatpush2.msra.mxu0 %v246
    %1787 = vmatprep.subr.mxu0 %v243
    %1788 = vmatpush2.msra.mxu0 %v242
    %1789 = vmatprep.subr.mxu0 %v239
    %1790 = vmatpush2.msra.mxu0 %v238
    %1791 = vmatprep.subr.mxu0 %v235
    %1792 = vmatpush2.msra.mxu0 %v234
    %1793 = vmatprep.subr.mxu0 %v231
    %1794 = vmatpush2.msra.mxu0 %v230
    %1795 = vmatprep.subr.mxu0 %v227
    %1796 = vmatpush2.msra.mxu0 %v226
    %1797 = vmatprep.subr.mxu0 %v223
    %1798 = vmatpush2.msra.mxu0 %v222
    %1799 = vmatprep.subr.mxu0 %v219
    %1800 = vmatpush2.msra.mxu0 %v218
    %1801 = vmatprep.mubr.f32.mxu0 %v1500
    %1802 = vmatmul.mubr.f32.gmra.mxu0 %v1665
    %v1803 = vpop.f32.mrf.mxu0
    %v1804 = vadd.f32 %v317, %v1803
    %v1805 = vpop.f32.mrf.mxu0
    %v1806 = vadd.f32 %v321, %v1805
    %1807 = vdwg.mxu0
    %v1808 = vxor.u32 %v1733, 2147483648
    %v1809 = vmul.f32 %v1808, 1.442695
    %v1810 = vpow.pop %v1809
    %v1811 = vadd.f32 %v1810, 1.0
    %v1812 = vrcp.pop %v1811
    %v1813 = vmul.f32 1.0, %v1812
    %v1814 = vxor.u32 %v1735, 2147483648
    %v1815 = vmul.f32 %v1814, 1.442695
    %v1816 = vpow.pop %v1815
    %v1817 = vadd.f32 %v1816, 1.0
    %v1818 = vrcp.pop %v1817
    %v1819 = vmul.f32 1.0, %v1818
    %v1820 = vmul.f32 %v1813, %v1806
    %v1821 = vadd.f32 %v1804, %v1820
    %v1822 = vtanh.pop %v1821
    %v1823 = vsub.f32 1.0, %v1819
    %v1824 = vmul.f32 %v1823, %v1822
    %v1825 = vmul.f32 %v1819, %v1500
    %v1826 = vadd.f32 %v1824, %v1825
    %v1827 = vstv %s1502
    %vm1828 = vcmp.eq.s32.totalorder %v330, %v1827
    %v1829 = vsel %vm1828, %v1826, %v1501
    %s1830 = sadd.s32 %s1502, 1
    %1831 = vmatprep.subr.mxu0 %v150
    %1832 = vmatpush1.msra.mxu0 %v149
    %1833 = vmatprep.subr.mxu0 %v147
    %1834 = vmatpush1.msra.mxu0 %v146
    %1835 = vmatprep.subr.mxu0 %v144
    %1836 = vmatpush1.msra.mxu0 %v143
    %1837 = vmatprep.subr.mxu0 %v141
    %1838 = vmatpush1.msra.mxu0 %v140
    %1839 = vmatprep.subr.mxu0 %v138
    %1840 = vmatpush1.msra.mxu0 %v137
    %1841 = vmatprep.subr.mxu0 %v135
    %1842 = vmatpush1.msra.mxu0 %v134
    %1843 = vmatprep.subr.mxu0 %v132
    %1844 = vmatpush1.msra.mxu0 %v131
    %1845 = vmatprep.subr.mxu0 %v129
    %1846 = vmatpush1.msra.mxu0 %v128
    %1847 = vmatprep.subr.mxu0 %v126
    %1848 = vmatpush1.msra.mxu0 %v125
    %1849 = vmatprep.subr.mxu0 %v123
    %1850 = vmatpush1.msra.mxu0 %v122
    %1851 = vmatprep.subr.mxu0 %v120
    %1852 = vmatpush1.msra.mxu0 %v119
    %1853 = vmatprep.subr.mxu0 %v117
    %1854 = vmatpush1.msra.mxu0 %v116
    %1855 = vmatprep.subr.mxu0 %v114
    %1856 = vmatpush1.msra.mxu0 %v113
    %1857 = vmatprep.subr.mxu0 %v111
    %1858 = vmatpush1.msra.mxu0 %v110
    %1859 = vmatprep.subr.mxu0 %v108
    %1860 = vmatpush1.msra.mxu0 %v107
    %1861 = vmatprep.subr.mxu0 %v105
    %1862 = vmatpush1.msra.mxu0 %v104
    %1863 = vmatprep.subr.mxu0 0.0
    %1864 = vmatpush2.msra.mxu0 0.0
    %1865 = vmatprep.subr.mxu0 0.0
    %1866 = vmatpush2.msra.mxu0 0.0
    %1867 = vmatprep.subr.mxu0 0.0
    %1868 = vmatpush2.msra.mxu0 0.0
    %1869 = vmatprep.subr.mxu0 0.0
    %1870 = vmatpush2.msra.mxu0 0.0
    %1871 = vmatprep.subr.mxu0 0.0
    %1872 = vmatpush2.msra.mxu0 0.0
    %1873 = vmatprep.subr.mxu0 0.0
    %1874 = vmatpush2.msra.mxu0 0.0
    %1875 = vmatprep.subr.mxu0 0.0
    %1876 = vmatpush2.msra.mxu0 0.0
    %1877 = vmatprep.subr.mxu0 0.0
    %1878 = vmatpush2.msra.mxu0 0.0
    %1879 = vmatprep.subr.mxu0 0.0
    %1880 = vmatpush2.msra.mxu0 0.0
    %1881 = vmatprep.subr.mxu0 0.0
    %1882 = vmatpush2.msra.mxu0 0.0
    %1883 = vmatprep.subr.mxu0 0.0
    %1884 = vmatpush2.msra.mxu0 0.0
    %1885 = vmatprep.subr.mxu0 0.0
    %1886 = vmatpush2.msra.mxu0 0.0
    %1887 = vmatprep.subr.mxu0 0.0
    %1888 = vmatpush2.msra.mxu0 0.0
    %1889 = vmatprep.subr.mxu0 0.0
    %1890 = vmatpush2.msra.mxu0 0.0
    %1891 = vmatprep.subr.mxu0 0.0
    %1892 = vmatpush2.msra.mxu0 0.0
    %1893 = vmatprep.subr.mxu0 0.0
    %1894 = vmatpush2.msra.mxu0 0.0
    %1895 = vmatprep.mubr.f32.mxu0 0.0
    %1896 = vmatmul.mubr.f32.gmra.mxu0 %v1665
    %v1897 = vpop.f32.mrf.mxu0
    %v1898 = vadd.f32 0.0, %v1897
    %v1899 = vpop.f32.mrf.mxu0
    %v1900 = vadd.f32 0.0, %v1899
    %1901 = vdwg.mxu0
    %1902 = vmatprep.subr.mxu0 0.0
    %1903 = vmatpush1.msra.mxu0 %v151
    %1904 = vmatprep.subr.mxu0 0.0
    %1905 = vmatpush1.msra.mxu0 %v148
    %1906 = vmatprep.subr.mxu0 0.0
    %1907 = vmatpush1.msra.mxu0 %v145
    %1908 = vmatprep.subr.mxu0 0.0
    %1909 = vmatpush1.msra.mxu0 %v142
    %1910 = vmatprep.subr.mxu0 0.0
    %1911 = vmatpush1.msra.mxu0 %v139
    %1912 = vmatprep.subr.mxu0 0.0
    %1913 = vmatpush1.msra.mxu0 %v136
    %1914 = vmatprep.subr.mxu0 0.0
    %1915 = vmatpush1.msra.mxu0 %v133
    %1916 = vmatprep.subr.mxu0 0.0
    %1917 = vmatpush1.msra.mxu0 %v130
    %1918 = vmatprep.subr.mxu0 0.0
    %1919 = vmatpush1.msra.mxu0 %v127
    %1920 = vmatprep.subr.mxu0 0.0
    %1921 = vmatpush1.msra.mxu0 %v124
    %1922 = vmatprep.subr.mxu0 0.0
    %1923 = vmatpush1.msra.mxu0 %v121
    %1924 = vmatprep.subr.mxu0 0.0
    %1925 = vmatpush1.msra.mxu0 %v118
    %1926 = vmatprep.subr.mxu0 0.0
    %1927 = vmatpush1.msra.mxu0 %v115
    %1928 = vmatprep.subr.mxu0 0.0
    %1929 = vmatpush1.msra.mxu0 %v112
    %1930 = vmatprep.subr.mxu0 0.0
    %1931 = vmatpush1.msra.mxu0 %v109
    %1932 = vmatprep.subr.mxu0 0.0
    %1933 = vmatpush1.msra.mxu0 %v106
    %1934 = vmatprep.subr.mxu0 0.0
    %1935 = vmatpush2.msra.mxu0 0.0
    %1936 = vmatprep.subr.mxu0 0.0
    %1937 = vmatpush2.msra.mxu0 0.0
    %1938 = vmatprep.subr.mxu0 0.0
    %1939 = vmatpush2.msra.mxu0 0.0
    %1940 = vmatprep.subr.mxu0 0.0
    %1941 = vmatpush2.msra.mxu0 0.0
    %1942 = vmatprep.subr.mxu0 0.0
    %1943 = vmatpush2.msra.mxu0 0.0
    %1944 = vmatprep.subr.mxu0 0.0
    %1945 = vmatpush2.msra.mxu0 0.0
    %1946 = vmatprep.subr.mxu0 0.0
    %1947 = vmatpush2.msra.mxu0 0.0
    %1948 = vmatprep.subr.mxu0 0.0
    %1949 = vmatpush2.msra.mxu0 0.0
    %1950 = vmatprep.subr.mxu0 0.0
    %1951 = vmatpush2.msra.mxu0 0.0
    %1952 = vmatprep.subr.mxu0 0.0
    %1953 = vmatpush2.msra.mxu0 0.0
    %1954 = vmatprep.subr.mxu0 0.0
    %1955 = vmatpush2.msra.mxu0 0.0
    %1956 = vmatprep.subr.mxu0 0.0
    %1957 = vmatpush2.msra.mxu0 0.0
    %1958 = vmatprep.subr.mxu0 0.0
    %1959 = vmatpush2.msra.mxu0 0.0
    %1960 = vmatprep.subr.mxu0 0.0
    %1961 = vmatpush2.msra.mxu0 0.0
    %1962 = vmatprep.subr.mxu0 0.0
    %1963 = vmatpush2.msra.mxu0 0.0
    %1964 = vmatprep.subr.mxu0 0.0
    %1965 = vmatpush2.msra.mxu0 0.0
    %1966 = vmatprep.mubr.f32.mxu0 0.0
    %1967 = vmatmul.mubr.f32.gmra.mxu0 %v1665
    %v1968 = vpop.f32.mrf.mxu0
    %v1969 = vadd.f32 0.0, %v1968
    %v1970 = vpop.f32.mrf.mxu0
    %1971 = vdwg.mxu0
    %v1972 = vadd.f32 %v549, %v1898
    %v1973 = vxor.u32 %v1972, 2147483648
    %v1974 = vmul.f32 %v1973, 1.442695
    %v1975 = vpow.pop %v1974
    %v1976 = vadd.f32 %v1975, 1.0
    %v1977 = vrcp.pop %v1976
    %v1978 = vmul.f32 1.0, %v1977
    %v1979 = vadd.f32 %v551, %v1900
    %v1980 = vxor.u32 %v1979, 2147483648
    %v1981 = vmul.f32 %v1980, 1.442695
    %v1982 = vpow.pop %v1981
    %v1983 = vadd.f32 %v1982, 1.0
    %v1984 = vrcp.pop %v1983
    %v1985 = vmul.f32 1.0, %v1984
    %v1986 = vadd.f32 %v1969, %v302
    %v1987 = vmul.f32 %v1978, %v1986
    %v1988 = vadd.f32 %v620, %v1987
    %v1989 = vtanh.pop %v1988
    %v1990 = vsub.f32 1.0, %v1985
    %v1991 = vmul.f32 %v1990, %v1989
    %v1992 = vmul.f32 %v1985, %v1665
    %v1993 = vadd.f32 %v1991, %v1992
    %1994 = vmatprep.subr.mxu0 %v213
    %1995 = vmatpush1.msra.mxu0 %v212
    %1996 = vmatprep.subr.mxu0 %v209
    %1997 = vmatpush1.msra.mxu0 %v208
    %1998 = vmatprep.subr.mxu0 %v205
    %1999 = vmatpush1.msra.mxu0 %v204
    %2000 = vmatprep.subr.mxu0 %v201
    %2001 = vmatpush1.msra.mxu0 %v200
    %2002 = vmatprep.subr.mxu0 %v197
    %2003 = vmatpush1.msra.mxu0 %v196
    %2004 = vmatprep.subr.mxu0 %v193
    %2005 = vmatpush1.msra.mxu0 %v192
    %2006 = vmatprep.subr.mxu0 %v189
    %2007 = vmatpush1.msra.mxu0 %v188
    %2008 = vmatprep.subr.mxu0 %v185
    %2009 = vmatpush1.msra.mxu0 %v184
    %2010 = vmatprep.subr.mxu0 %v181
    %2011 = vmatpush1.msra.mxu0 %v180
    %2012 = vmatprep.subr.mxu0 %v177
    %2013 = vmatpush1.msra.mxu0 %v176
    %2014 = vmatprep.subr.mxu0 %v173
    %2015 = vmatpush1.msra.mxu0 %v172
    %2016 = vmatprep.subr.mxu0 %v169
    %2017 = vmatpush1.msra.mxu0 %v168
    %2018 = vmatprep.subr.mxu0 %v165
    %2019 = vmatpush1.msra.mxu0 %v164
    %2020 = vmatprep.subr.mxu0 %v161
    %2021 = vmatpush1.msra.mxu0 %v160
    %2022 = vmatprep.subr.mxu0 %v157
    %2023 = vmatpush1.msra.mxu0 %v156
    %2024 = vmatprep.subr.mxu0 %v153
    %2025 = vmatpush1.msra.mxu0 %v152
    %2026 = vmatprep.subr.mxu0 %v277
    %2027 = vmatpush2.msra.mxu0 %v276
    %2028 = vmatprep.subr.mxu0 %v273
    %2029 = vmatpush2.msra.mxu0 %v272
    %2030 = vmatprep.subr.mxu0 %v269
    %2031 = vmatpush2.msra.mxu0 %v268
    %2032 = vmatprep.subr.mxu0 %v265
    %2033 = vmatpush2.msra.mxu0 %v264
    %2034 = vmatprep.subr.mxu0 %v261
    %2035 = vmatpush2.msra.mxu0 %v260
    %2036 = vmatprep.subr.mxu0 %v257
    %2037 = vmatpush2.msra.mxu0 %v256
    %2038 = vmatprep.subr.mxu0 %v253
    %2039 = vmatpush2.msra.mxu0 %v252
    %2040 = vmatprep.subr.mxu0 %v249
    %2041 = vmatpush2.msra.mxu0 %v248
    %2042 = vmatprep.subr.mxu0 %v245
    %2043 = vmatpush2.msra.mxu0 %v244
    %2044 = vmatprep.subr.mxu0 %v241
    %2045 = vmatpush2.msra.mxu0 %v240
    %2046 = vmatprep.subr.mxu0 %v237
    %2047 = vmatpush2.msra.mxu0 %v236
    %2048 = vmatprep.subr.mxu0 %v233
    %2049 = vmatpush2.msra.mxu0 %v232
    %2050 = vmatprep.subr.mxu0 %v229
    %2051 = vmatpush2.msra.mxu0 %v228
    %2052 = vmatprep.subr.mxu0 %v225
    %2053 = vmatpush2.msra.mxu0 %v224
    %2054 = vmatprep.subr.mxu0 %v221
    %2055 = vmatpush2.msra.mxu0 %v220
    %2056 = vmatprep.subr.mxu0 %v217
    %2057 = vmatpush2.msra.mxu0 %v216
    %2058 = vmatprep.mubr.f32.mxu0 %v1826
    %2059 = vmatmul.mubr.f32.gmra.mxu0 %v1993
    %v2060 = vpop.f32.mrf.mxu0
    %v2061 = vadd.f32 %v309, %v2060
    %v2062 = vpop.f32.mrf.mxu0
    %v2063 = vadd.f32 %v313, %v2062
    %2064 = vdwg.mxu0
    %2065 = vmatprep.subr.mxu0 %v215
    %2066 = vmatpush1.msra.mxu0 %v214
    %2067 = vmatprep.subr.mxu0 %v211
    %2068 = vmatpush1.msra.mxu0 %v210
    %2069 = vmatprep.subr.mxu0 %v207
    %2070 = vmatpush1.msra.mxu0 %v206
    %2071 = vmatprep.subr.mxu0 %v203
    %2072 = vmatpush1.msra.mxu0 %v202
    %2073 = vmatprep.subr.mxu0 %v199
    %2074 = vmatpush1.msra.mxu0 %v198
    %2075 = vmatprep.subr.mxu0 %v195
    %2076 = vmatpush1.msra.mxu0 %v194
    %2077 = vmatprep.subr.mxu0 %v191
    %2078 = vmatpush1.msra.mxu0 %v190
    %2079 = vmatprep.subr.mxu0 %v187
    %2080 = vmatpush1.msra.mxu0 %v186
    %2081 = vmatprep.subr.mxu0 %v183
    %2082 = vmatpush1.msra.mxu0 %v182
    %2083 = vmatprep.subr.mxu0 %v179
    %2084 = vmatpush1.msra.mxu0 %v178
    %2085 = vmatprep.subr.mxu0 %v175
    %2086 = vmatpush1.msra.mxu0 %v174
    %2087 = vmatprep.subr.mxu0 %v171
    %2088 = vmatpush1.msra.mxu0 %v170
    %2089 = vmatprep.subr.mxu0 %v167
    %2090 = vmatpush1.msra.mxu0 %v166
    %2091 = vmatprep.subr.mxu0 %v163
    %2092 = vmatpush1.msra.mxu0 %v162
    %2093 = vmatprep.subr.mxu0 %v159
    %2094 = vmatpush1.msra.mxu0 %v158
    %2095 = vmatprep.subr.mxu0 %v155
    %2096 = vmatpush1.msra.mxu0 %v154
    %2097 = vmatprep.subr.mxu0 %v279
    %2098 = vmatpush2.msra.mxu0 %v278
    %2099 = vmatprep.subr.mxu0 %v275
    %2100 = vmatpush2.msra.mxu0 %v274
    %2101 = vmatprep.subr.mxu0 %v271
    %2102 = vmatpush2.msra.mxu0 %v270
    %2103 = vmatprep.subr.mxu0 %v267
    %2104 = vmatpush2.msra.mxu0 %v266
    %2105 = vmatprep.subr.mxu0 %v263
    %2106 = vmatpush2.msra.mxu0 %v262
    %2107 = vmatprep.subr.mxu0 %v259
    %2108 = vmatpush2.msra.mxu0 %v258
    %2109 = vmatprep.subr.mxu0 %v255
    %2110 = vmatpush2.msra.mxu0 %v254
    %2111 = vmatprep.subr.mxu0 %v251
    %2112 = vmatpush2.msra.mxu0 %v250
    %2113 = vmatprep.subr.mxu0 %v247
    %2114 = vmatpush2.msra.mxu0 %v246
    %2115 = vmatprep.subr.mxu0 %v243
    %2116 = vmatpush2.msra.mxu0 %v242
    %2117 = vmatprep.subr.mxu0 %v239
    %2118 = vmatpush2.msra.mxu0 %v238
    %2119 = vmatprep.subr.mxu0 %v235
    %2120 = vmatpush2.msra.mxu0 %v234
    %2121 = vmatprep.subr.mxu0 %v231
    %2122 = vmatpush2.msra.mxu0 %v230
    %2123 = vmatprep.subr.mxu0 %v227
    %2124 = vmatpush2.msra.mxu0 %v226
    %2125 = vmatprep.subr.mxu0 %v223
    %2126 = vmatpush2.msra.mxu0 %v222
    %2127 = vmatprep.subr.mxu0 %v219
    %2128 = vmatpush2.msra.mxu0 %v218
    %2129 = vmatprep.mubr.f32.mxu0 %v1826
    %2130 = vmatmul.mubr.f32.gmra.mxu0 %v1993
    %v2131 = vpop.f32.mrf.mxu0
    %v2132 = vadd.f32 %v317, %v2131
    %v2133 = vpop.f32.mrf.mxu0
    %v2134 = vadd.f32 %v321, %v2133
    %2135 = vdwg.mxu0
    %v2136 = vxor.u32 %v2061, 2147483648
    %v2137 = vmul.f32 %v2136, 1.442695
    %v2138 = vpow.pop %v2137
    %v2139 = vadd.f32 %v2138, 1.0
    %v2140 = vrcp.pop %v2139
    %v2141 = vmul.f32 1.0, %v2140
    %v2142 = vxor.u32 %v2063, 2147483648
    %v2143 = vmul.f32 %v2142, 1.442695
    %v2144 = vpow.pop %v2143
    %v2145 = vadd.f32 %v2144, 1.0
    %v2146 = vrcp.pop %v2145
    %v2147 = vmul.f32 1.0, %v2146
    %v2148 = vmul.f32 %v2141, %v2134
    %v2149 = vadd.f32 %v2132, %v2148
    %v2150 = vtanh.pop %v2149
    %v2151 = vsub.f32 1.0, %v2147
    %v2152 = vmul.f32 %v2151, %v2150
    %v2153 = vmul.f32 %v2147, %v1826
    %v2154 = vadd.f32 %v2152, %v2153
    %v2155 = vstv %s1830
    %vm2156 = vcmp.eq.s32.totalorder %v330, %v2155
    %v2157 = vsel %vm2156, %v2154, %v1829
    %s2158 = sadd.s32 %s1502, 2
    %2159 = vmatprep.subr.mxu0 %v150
    %2160 = vmatpush1.msra.mxu0 %v149
    %2161 = vmatprep.subr.mxu0 %v147
    %2162 = vmatpush1.msra.mxu0 %v146
    %2163 = vmatprep.subr.mxu0 %v144
    %2164 = vmatpush1.msra.mxu0 %v143
    %2165 = vmatprep.subr.mxu0 %v141
    %2166 = vmatpush1.msra.mxu0 %v140
    %2167 = vmatprep.subr.mxu0 %v138
    %2168 = vmatpush1.msra.mxu0 %v137
    %2169 = vmatprep.subr.mxu0 %v135
    %2170 = vmatpush1.msra.mxu0 %v134
    %2171 = vmatprep.subr.mxu0 %v132
    %2172 = vmatpush1.msra.mxu0 %v131
    %2173 = vmatprep.subr.mxu0 %v129
    %2174 = vmatpush1.msra.mxu0 %v128
    %2175 = vmatprep.subr.mxu0 %v126
    %2176 = vmatpush1.msra.mxu0 %v125
    %2177 = vmatprep.subr.mxu0 %v123
    %2178 = vmatpush1.msra.mxu0 %v122
    %2179 = vmatprep.subr.mxu0 %v120
    %2180 = vmatpush1.msra.mxu0 %v119
    %2181 = vmatprep.subr.mxu0 %v117
    %2182 = vmatpush1.msra.mxu0 %v116
    %2183 = vmatprep.subr.mxu0 %v114
    %2184 = vmatpush1.msra.mxu0 %v113
    %2185 = vmatprep.subr.mxu0 %v111
    %2186 = vmatpush1.msra.mxu0 %v110
    %2187 = vmatprep.subr.mxu0 %v108
    %2188 = vmatpush1.msra.mxu0 %v107
    %2189 = vmatprep.subr.mxu0 %v105
    %2190 = vmatpush1.msra.mxu0 %v104
    %2191 = vmatprep.subr.mxu0 0.0
    %2192 = vmatpush2.msra.mxu0 0.0
    %2193 = vmatprep.subr.mxu0 0.0
    %2194 = vmatpush2.msra.mxu0 0.0
    %2195 = vmatprep.subr.mxu0 0.0
    %2196 = vmatpush2.msra.mxu0 0.0
    %2197 = vmatprep.subr.mxu0 0.0
    %2198 = vmatpush2.msra.mxu0 0.0
    %2199 = vmatprep.subr.mxu0 0.0
    %2200 = vmatpush2.msra.mxu0 0.0
    %2201 = vmatprep.subr.mxu0 0.0
    %2202 = vmatpush2.msra.mxu0 0.0
    %2203 = vmatprep.subr.mxu0 0.0
    %2204 = vmatpush2.msra.mxu0 0.0
    %2205 = vmatprep.subr.mxu0 0.0
    %2206 = vmatpush2.msra.mxu0 0.0
    %2207 = vmatprep.subr.mxu0 0.0
    %2208 = vmatpush2.msra.mxu0 0.0
    %2209 = vmatprep.subr.mxu0 0.0
    %2210 = vmatpush2.msra.mxu0 0.0
    %2211 = vmatprep.subr.mxu0 0.0
    %2212 = vmatpush2.msra.mxu0 0.0
    %2213 = vmatprep.subr.mxu0 0.0
    %2214 = vmatpush2.msra.mxu0 0.0
    %2215 = vmatprep.subr.mxu0 0.0
    %2216 = vmatpush2.msra.mxu0 0.0
    %2217 = vmatprep.subr.mxu0 0.0
    %2218 = vmatpush2.msra.mxu0 0.0
    %2219 = vmatprep.subr.mxu0 0.0
    %2220 = vmatpush2.msra.mxu0 0.0
    %2221 = vmatprep.subr.mxu0 0.0
    %2222 = vmatpush2.msra.mxu0 0.0
    %2223 = vmatprep.mubr.f32.mxu0 0.0
    %2224 = vmatmul.mubr.f32.gmra.mxu0 %v1993
    %v2225 = vpop.f32.mrf.mxu0
    %v2226 = vadd.f32 0.0, %v2225
    %v2227 = vpop.f32.mrf.mxu0
    %v2228 = vadd.f32 0.0, %v2227
    %2229 = vdwg.mxu0
    %2230 = vmatprep.subr.mxu0 0.0
    %2231 = vmatpush1.msra.mxu0 %v151
    %2232 = vmatprep.subr.mxu0 0.0
    %2233 = vmatpush1.msra.mxu0 %v148
    %2234 = vmatprep.subr.mxu0 0.0
    %2235 = vmatpush1.msra.mxu0 %v145
    %2236 = vmatprep.subr.mxu0 0.0
    %2237 = vmatpush1.msra.mxu0 %v142
    %2238 = vmatprep.subr.mxu0 0.0
    %2239 = vmatpush1.msra.mxu0 %v139
    %2240 = vmatprep.subr.mxu0 0.0
    %2241 = vmatpush1.msra.mxu0 %v136
    %2242 = vmatprep.subr.mxu0 0.0
    %2243 = vmatpush1.msra.mxu0 %v133
    %2244 = vmatprep.subr.mxu0 0.0
    %2245 = vmatpush1.msra.mxu0 %v130
    %2246 = vmatprep.subr.mxu0 0.0
    %2247 = vmatpush1.msra.mxu0 %v127
    %2248 = vmatprep.subr.mxu0 0.0
    %2249 = vmatpush1.msra.mxu0 %v124
    %2250 = vmatprep.subr.mxu0 0.0
    %2251 = vmatpush1.msra.mxu0 %v121
    %2252 = vmatprep.subr.mxu0 0.0
    %2253 = vmatpush1.msra.mxu0 %v118
    %2254 = vmatprep.subr.mxu0 0.0
    %2255 = vmatpush1.msra.mxu0 %v115
    %2256 = vmatprep.subr.mxu0 0.0
    %2257 = vmatpush1.msra.mxu0 %v112
    %2258 = vmatprep.subr.mxu0 0.0
    %2259 = vmatpush1.msra.mxu0 %v109
    %2260 = vmatprep.subr.mxu0 0.0
    %2261 = vmatpush1.msra.mxu0 %v106
    %2262 = vmatprep.subr.mxu0 0.0
    %2263 = vmatpush2.msra.mxu0 0.0
    %2264 = vmatprep.subr.mxu0 0.0
    %2265 = vmatpush2.msra.mxu0 0.0
    %2266 = vmatprep.subr.mxu0 0.0
    %2267 = vmatpush2.msra.mxu0 0.0
    %2268 = vmatprep.subr.mxu0 0.0
    %2269 = vmatpush2.msra.mxu0 0.0
    %2270 = vmatprep.subr.mxu0 0.0
    %2271 = vmatpush2.msra.mxu0 0.0
    %2272 = vmatprep.subr.mxu0 0.0
    %2273 = vmatpush2.msra.mxu0 0.0
    %2274 = vmatprep.subr.mxu0 0.0
    %2275 = vmatpush2.msra.mxu0 0.0
    %2276 = vmatprep.subr.mxu0 0.0
    %2277 = vmatpush2.msra.mxu0 0.0
    %2278 = vmatprep.subr.mxu0 0.0
    %2279 = vmatpush2.msra.mxu0 0.0
    %2280 = vmatprep.subr.mxu0 0.0
    %2281 = vmatpush2.msra.mxu0 0.0
    %2282 = vmatprep.subr.mxu0 0.0
    %2283 = vmatpush2.msra.mxu0 0.0
    %2284 = vmatprep.subr.mxu0 0.0
    %2285 = vmatpush2.msra.mxu0 0.0
    %2286 = vmatprep.subr.mxu0 0.0
    %2287 = vmatpush2.msra.mxu0 0.0
    %2288 = vmatprep.subr.mxu0 0.0
    %2289 = vmatpush2.msra.mxu0 0.0
    %2290 = vmatprep.subr.mxu0 0.0
    %2291 = vmatpush2.msra.mxu0 0.0
    %2292 = vmatprep.subr.mxu0 0.0
    %2293 = vmatpush2.msra.mxu0 0.0
    %2294 = vmatprep.mubr.f32.mxu0 0.0
    %2295 = vmatmul.mubr.f32.gmra.mxu0 %v1993
    %v2296 = vpop.f32.mrf.mxu0
    %v2297 = vadd.f32 0.0, %v2296
    %v2298 = vpop.f32.mrf.mxu0
    %2299 = vdwg.mxu0
    %v2300 = vadd.f32 %v695, %v2226
    %v2301 = vxor.u32 %v2300, 2147483648
    %v2302 = vmul.f32 %v2301, 1.442695
    %v2303 = vpow.pop %v2302
    %v2304 = vadd.f32 %v2303, 1.0
    %v2305 = vrcp.pop %v2304
    %v2306 = vmul.f32 1.0, %v2305
    %v2307 = vadd.f32 %v697, %v2228
    %v2308 = vxor.u32 %v2307, 2147483648
    %v2309 = vmul.f32 %v2308, 1.442695
    %v2310 = vpow.pop %v2309
    %v2311 = vadd.f32 %v2310, 1.0
    %v2312 = vrcp.pop %v2311
    %v2313 = vmul.f32 1.0, %v2312
    %v2314 = vadd.f32 %v2297, %v302
    %v2315 = vmul.f32 %v2306, %v2314
    %v2316 = vadd.f32 %v766, %v2315
    %v2317 = vtanh.pop %v2316
    %v2318 = vsub.f32 1.0, %v2313
    %v2319 = vmul.f32 %v2318, %v2317
    %v2320 = vmul.f32 %v2313, %v1993
    %v2321 = vadd.f32 %v2319, %v2320
    %2322 = vmatprep.subr.mxu0 %v213
    %2323 = vmatpush1.msra.mxu0 %v212
    %2324 = vmatprep.subr.mxu0 %v209
    %2325 = vmatpush1.msra.mxu0 %v208
    %2326 = vmatprep.subr.mxu0 %v205
    %2327 = vmatpush1.msra.mxu0 %v204
    %2328 = vmatprep.subr.mxu0 %v201
    %2329 = vmatpush1.msra.mxu0 %v200
    %2330 = vmatprep.subr.mxu0 %v197
    %2331 = vmatpush1.msra.mxu0 %v196
    %2332 = vmatprep.subr.mxu0 %v193
    %2333 = vmatpush1.msra.mxu0 %v192
    %2334 = vmatprep.subr.mxu0 %v189
    %2335 = vmatpush1.msra.mxu0 %v188
    %2336 = vmatprep.subr.mxu0 %v185
    %2337 = vmatpush1.msra.mxu0 %v184
    %2338 = vmatprep.subr.mxu0 %v181
    %2339 = vmatpush1.msra.mxu0 %v180
    %2340 = vmatprep.subr.mxu0 %v177
    %2341 = vmatpush1.msra.mxu0 %v176
    %2342 = vmatprep.subr.mxu0 %v173
    %2343 = vmatpush1.msra.mxu0 %v172
    %2344 = vmatprep.subr.mxu0 %v169
    %2345 = vmatpush1.msra.mxu0 %v168
    %2346 = vmatprep.subr.mxu0 %v165
    %2347 = vmatpush1.msra.mxu0 %v164
    %2348 = vmatprep.subr.mxu0 %v161
    %2349 = vmatpush1.msra.mxu0 %v160
    %2350 = vmatprep.subr.mxu0 %v157
    %2351 = vmatpush1.msra.mxu0 %v156
    %2352 = vmatprep.subr.mxu0 %v153
    %2353 = vmatpush1.msra.mxu0 %v152
    %2354 = vmatprep.subr.mxu0 %v277
    %2355 = vmatpush2.msra.mxu0 %v276
    %2356 = vmatprep.subr.mxu0 %v273
    %2357 = vmatpush2.msra.mxu0 %v272
    %2358 = vmatprep.subr.mxu0 %v269
    %2359 = vmatpush2.msra.mxu0 %v268
    %2360 = vmatprep.subr.mxu0 %v265
    %2361 = vmatpush2.msra.mxu0 %v264
    %2362 = vmatprep.subr.mxu0 %v261
    %2363 = vmatpush2.msra.mxu0 %v260
    %2364 = vmatprep.subr.mxu0 %v257
    %2365 = vmatpush2.msra.mxu0 %v256
    %2366 = vmatprep.subr.mxu0 %v253
    %2367 = vmatpush2.msra.mxu0 %v252
    %2368 = vmatprep.subr.mxu0 %v249
    %2369 = vmatpush2.msra.mxu0 %v248
    %2370 = vmatprep.subr.mxu0 %v245
    %2371 = vmatpush2.msra.mxu0 %v244
    %2372 = vmatprep.subr.mxu0 %v241
    %2373 = vmatpush2.msra.mxu0 %v240
    %2374 = vmatprep.subr.mxu0 %v237
    %2375 = vmatpush2.msra.mxu0 %v236
    %2376 = vmatprep.subr.mxu0 %v233
    %2377 = vmatpush2.msra.mxu0 %v232
    %2378 = vmatprep.subr.mxu0 %v229
    %2379 = vmatpush2.msra.mxu0 %v228
    %2380 = vmatprep.subr.mxu0 %v225
    %2381 = vmatpush2.msra.mxu0 %v224
    %2382 = vmatprep.subr.mxu0 %v221
    %2383 = vmatpush2.msra.mxu0 %v220
    %2384 = vmatprep.subr.mxu0 %v217
    %2385 = vmatpush2.msra.mxu0 %v216
    %2386 = vmatprep.mubr.f32.mxu0 %v2154
    %2387 = vmatmul.mubr.f32.gmra.mxu0 %v2321
    %v2388 = vpop.f32.mrf.mxu0
    %v2389 = vadd.f32 %v309, %v2388
    %v2390 = vpop.f32.mrf.mxu0
    %v2391 = vadd.f32 %v313, %v2390
    %2392 = vdwg.mxu0
    %2393 = vmatprep.subr.mxu0 %v215
    %2394 = vmatpush1.msra.mxu0 %v214
    %2395 = vmatprep.subr.mxu0 %v211
    %2396 = vmatpush1.msra.mxu0 %v210
    %2397 = vmatprep.subr.mxu0 %v207
    %2398 = vmatpush1.msra.mxu0 %v206
    %2399 = vmatprep.subr.mxu0 %v203
    %2400 = vmatpush1.msra.mxu0 %v202
    %2401 = vmatprep.subr.mxu0 %v199
    %2402 = vmatpush1.msra.mxu0 %v198
    %2403 = vmatprep.subr.mxu0 %v195
    %2404 = vmatpush1.msra.mxu0 %v194
    %2405 = vmatprep.subr.mxu0 %v191
    %2406 = vmatpush1.msra.mxu0 %v190
    %2407 = vmatprep.subr.mxu0 %v187
    %2408 = vmatpush1.msra.mxu0 %v186
    %2409 = vmatprep.subr.mxu0 %v183
    %2410 = vmatpush1.msra.mxu0 %v182
    %2411 = vmatprep.subr.mxu0 %v179
    %2412 = vmatpush1.msra.mxu0 %v178
    %2413 = vmatprep.subr.mxu0 %v175
    %2414 = vmatpush1.msra.mxu0 %v174
    %2415 = vmatprep.subr.mxu0 %v171
    %2416 = vmatpush1.msra.mxu0 %v170
    %2417 = vmatprep.subr.mxu0 %v167
    %2418 = vmatpush1.msra.mxu0 %v166
    %2419 = vmatprep.subr.mxu0 %v163
    %2420 = vmatpush1.msra.mxu0 %v162
    %2421 = vmatprep.subr.mxu0 %v159
    %2422 = vmatpush1.msra.mxu0 %v158
    %2423 = vmatprep.subr.mxu0 %v155
    %2424 = vmatpush1.msra.mxu0 %v154
    %2425 = vmatprep.subr.mxu0 %v279
    %2426 = vmatpush2.msra.mxu0 %v278
    %2427 = vmatprep.subr.mxu0 %v275
    %2428 = vmatpush2.msra.mxu0 %v274
    %2429 = vmatprep.subr.mxu0 %v271
    %2430 = vmatpush2.msra.mxu0 %v270
    %2431 = vmatprep.subr.mxu0 %v267
    %2432 = vmatpush2.msra.mxu0 %v266
    %2433 = vmatprep.subr.mxu0 %v263
    %2434 = vmatpush2.msra.mxu0 %v262
    %2435 = vmatprep.subr.mxu0 %v259
    %2436 = vmatpush2.msra.mxu0 %v258
    %2437 = vmatprep.subr.mxu0 %v255
    %2438 = vmatpush2.msra.mxu0 %v254
    %2439 = vmatprep.subr.mxu0 %v251
    %2440 = vmatpush2.msra.mxu0 %v250
    %2441 = vmatprep.subr.mxu0 %v247
    %2442 = vmatpush2.msra.mxu0 %v246
    %2443 = vmatprep.subr.mxu0 %v243
    %2444 = vmatpush2.msra.mxu0 %v242
    %2445 = vmatprep.subr.mxu0 %v239
    %2446 = vmatpush2.msra.mxu0 %v238
    %2447 = vmatprep.subr.mxu0 %v235
    %2448 = vmatpush2.msra.mxu0 %v234
    %2449 = vmatprep.subr.mxu0 %v231
    %2450 = vmatpush2.msra.mxu0 %v230
    %2451 = vmatprep.subr.mxu0 %v227
    %2452 = vmatpush2.msra.mxu0 %v226
    %2453 = vmatprep.subr.mxu0 %v223
    %2454 = vmatpush2.msra.mxu0 %v222
    %2455 = vmatprep.subr.mxu0 %v219
    %2456 = vmatpush2.msra.mxu0 %v218
    %2457 = vmatprep.mubr.f32.mxu0 %v2154
    %2458 = vmatmul.mubr.f32.gmra.mxu0 %v2321
    %v2459 = vpop.f32.mrf.mxu0
    %v2460 = vadd.f32 %v317, %v2459
    %v2461 = vpop.f32.mrf.mxu0
    %v2462 = vadd.f32 %v321, %v2461
    %2463 = vdwg.mxu0
    %v2464 = vxor.u32 %v2389, 2147483648
    %v2465 = vmul.f32 %v2464, 1.442695
    %v2466 = vpow.pop %v2465
    %v2467 = vadd.f32 %v2466, 1.0
    %v2468 = vrcp.pop %v2467
    %v2469 = vmul.f32 1.0, %v2468
    %v2470 = vxor.u32 %v2391, 2147483648
    %v2471 = vmul.f32 %v2470, 1.442695
    %v2472 = vpow.pop %v2471
    %v2473 = vadd.f32 %v2472, 1.0
    %v2474 = vrcp.pop %v2473
    %v2475 = vmul.f32 1.0, %v2474
    %v2476 = vmul.f32 %v2469, %v2462
    %v2477 = vadd.f32 %v2460, %v2476
    %v2478 = vtanh.pop %v2477
    %v2479 = vsub.f32 1.0, %v2475
    %v2480 = vmul.f32 %v2479, %v2478
    %v2481 = vmul.f32 %v2475, %v2154
    %v2482 = vadd.f32 %v2480, %v2481
    %v2483 = vstv %s2158
    %vm2484 = vcmp.eq.s32.totalorder %v330, %v2483
    %v2485 = vsel %vm2484, %v2482, %v2157
    %s2486 = sadd.s32 %s1502, 3
    %2487 = vmatprep.subr.mxu0 %v150
    %2488 = vmatpush1.msra.mxu0 %v149
    %2489 = vmatprep.subr.mxu0 %v147
    %2490 = vmatpush1.msra.mxu0 %v146
    %2491 = vmatprep.subr.mxu0 %v144
    %2492 = vmatpush1.msra.mxu0 %v143
    %2493 = vmatprep.subr.mxu0 %v141
    %2494 = vmatpush1.msra.mxu0 %v140
    %2495 = vmatprep.subr.mxu0 %v138
    %2496 = vmatpush1.msra.mxu0 %v137
    %2497 = vmatprep.subr.mxu0 %v135
    %2498 = vmatpush1.msra.mxu0 %v134
    %2499 = vmatprep.subr.mxu0 %v132
    %2500 = vmatpush1.msra.mxu0 %v131
    %2501 = vmatprep.subr.mxu0 %v129
    %2502 = vmatpush1.msra.mxu0 %v128
    %2503 = vmatprep.subr.mxu0 %v126
    %2504 = vmatpush1.msra.mxu0 %v125
    %2505 = vmatprep.subr.mxu0 %v123
    %2506 = vmatpush1.msra.mxu0 %v122
    %2507 = vmatprep.subr.mxu0 %v120
    %2508 = vmatpush1.msra.mxu0 %v119
    %2509 = vmatprep.subr.mxu0 %v117
    %2510 = vmatpush1.msra.mxu0 %v116
    %2511 = vmatprep.subr.mxu0 %v114
    %2512 = vmatpush1.msra.mxu0 %v113
    %2513 = vmatprep.subr.mxu0 %v111
    %2514 = vmatpush1.msra.mxu0 %v110
    %2515 = vmatprep.subr.mxu0 %v108
    %2516 = vmatpush1.msra.mxu0 %v107
    %2517 = vmatprep.subr.mxu0 %v105
    %2518 = vmatpush1.msra.mxu0 %v104
    %2519 = vmatprep.subr.mxu0 0.0
    %2520 = vmatpush2.msra.mxu0 0.0
    %2521 = vmatprep.subr.mxu0 0.0
    %2522 = vmatpush2.msra.mxu0 0.0
    %2523 = vmatprep.subr.mxu0 0.0
    %2524 = vmatpush2.msra.mxu0 0.0
    %2525 = vmatprep.subr.mxu0 0.0
    %2526 = vmatpush2.msra.mxu0 0.0
    %2527 = vmatprep.subr.mxu0 0.0
    %2528 = vmatpush2.msra.mxu0 0.0
    %2529 = vmatprep.subr.mxu0 0.0
    %2530 = vmatpush2.msra.mxu0 0.0
    %2531 = vmatprep.subr.mxu0 0.0
    %2532 = vmatpush2.msra.mxu0 0.0
    %2533 = vmatprep.subr.mxu0 0.0
    %2534 = vmatpush2.msra.mxu0 0.0
    %2535 = vmatprep.subr.mxu0 0.0
    %2536 = vmatpush2.msra.mxu0 0.0
    %2537 = vmatprep.subr.mxu0 0.0
    %2538 = vmatpush2.msra.mxu0 0.0
    %2539 = vmatprep.subr.mxu0 0.0
    %2540 = vmatpush2.msra.mxu0 0.0
    %2541 = vmatprep.subr.mxu0 0.0
    %2542 = vmatpush2.msra.mxu0 0.0
    %2543 = vmatprep.subr.mxu0 0.0
    %2544 = vmatpush2.msra.mxu0 0.0
    %2545 = vmatprep.subr.mxu0 0.0
    %2546 = vmatpush2.msra.mxu0 0.0
    %2547 = vmatprep.subr.mxu0 0.0
    %2548 = vmatpush2.msra.mxu0 0.0
    %2549 = vmatprep.subr.mxu0 0.0
    %2550 = vmatpush2.msra.mxu0 0.0
    %2551 = vmatprep.mubr.f32.mxu0 0.0
    %2552 = vmatmul.mubr.f32.gmra.mxu0 %v2321
    %v2553 = vpop.f32.mrf.mxu0
    %v2554 = vadd.f32 0.0, %v2553
    %v2555 = vpop.f32.mrf.mxu0
    %v2556 = vadd.f32 0.0, %v2555
    %2557 = vdwg.mxu0
    %2558 = vmatprep.subr.mxu0 0.0
    %2559 = vmatpush1.msra.mxu0 %v151
    %2560 = vmatprep.subr.mxu0 0.0
    %2561 = vmatpush1.msra.mxu0 %v148
    %2562 = vmatprep.subr.mxu0 0.0
    %2563 = vmatpush1.msra.mxu0 %v145
    %2564 = vmatprep.subr.mxu0 0.0
    %2565 = vmatpush1.msra.mxu0 %v142
    %2566 = vmatprep.subr.mxu0 0.0
    %2567 = vmatpush1.msra.mxu0 %v139
    %2568 = vmatprep.subr.mxu0 0.0
    %2569 = vmatpush1.msra.mxu0 %v136
    %2570 = vmatprep.subr.mxu0 0.0
    %2571 = vmatpush1.msra.mxu0 %v133
    %2572 = vmatprep.subr.mxu0 0.0
    %2573 = vmatpush1.msra.mxu0 %v130
    %2574 = vmatprep.subr.mxu0 0.0
    %2575 = vmatpush1.msra.mxu0 %v127
    %2576 = vmatprep.subr.mxu0 0.0
    %2577 = vmatpush1.msra.mxu0 %v124
    %2578 = vmatprep.subr.mxu0 0.0
    %2579 = vmatpush1.msra.mxu0 %v121
    %2580 = vmatprep.subr.mxu0 0.0
    %2581 = vmatpush1.msra.mxu0 %v118
    %2582 = vmatprep.subr.mxu0 0.0
    %2583 = vmatpush1.msra.mxu0 %v115
    %2584 = vmatprep.subr.mxu0 0.0
    %2585 = vmatpush1.msra.mxu0 %v112
    %2586 = vmatprep.subr.mxu0 0.0
    %2587 = vmatpush1.msra.mxu0 %v109
    %2588 = vmatprep.subr.mxu0 0.0
    %2589 = vmatpush1.msra.mxu0 %v106
    %2590 = vmatprep.subr.mxu0 0.0
    %2591 = vmatpush2.msra.mxu0 0.0
    %2592 = vmatprep.subr.mxu0 0.0
    %2593 = vmatpush2.msra.mxu0 0.0
    %2594 = vmatprep.subr.mxu0 0.0
    %2595 = vmatpush2.msra.mxu0 0.0
    %2596 = vmatprep.subr.mxu0 0.0
    %2597 = vmatpush2.msra.mxu0 0.0
    %2598 = vmatprep.subr.mxu0 0.0
    %2599 = vmatpush2.msra.mxu0 0.0
    %2600 = vmatprep.subr.mxu0 0.0
    %2601 = vmatpush2.msra.mxu0 0.0
    %2602 = vmatprep.subr.mxu0 0.0
    %2603 = vmatpush2.msra.mxu0 0.0
    %2604 = vmatprep.subr.mxu0 0.0
    %2605 = vmatpush2.msra.mxu0 0.0
    %2606 = vmatprep.subr.mxu0 0.0
    %2607 = vmatpush2.msra.mxu0 0.0
    %2608 = vmatprep.subr.mxu0 0.0
    %2609 = vmatpush2.msra.mxu0 0.0
    %2610 = vmatprep.subr.mxu0 0.0
    %2611 = vmatpush2.msra.mxu0 0.0
    %2612 = vmatprep.subr.mxu0 0.0
    %2613 = vmatpush2.msra.mxu0 0.0
    %2614 = vmatprep.subr.mxu0 0.0
    %2615 = vmatpush2.msra.mxu0 0.0
    %2616 = vmatprep.subr.mxu0 0.0
    %2617 = vmatpush2.msra.mxu0 0.0
    %2618 = vmatprep.subr.mxu0 0.0
    %2619 = vmatpush2.msra.mxu0 0.0
    %2620 = vmatprep.subr.mxu0 0.0
    %2621 = vmatpush2.msra.mxu0 0.0
    %2622 = vmatprep.mubr.f32.mxu0 0.0
    %2623 = vmatmul.mubr.f32.gmra.mxu0 %v2321
    %v2624 = vpop.f32.mrf.mxu0
    %v2625 = vadd.f32 0.0, %v2624
    %v2626 = vpop.f32.mrf.mxu0
    %2627 = vdwg.mxu0
    %v2628 = vadd.f32 %v841, %v2554
    %v2629 = vxor.u32 %v2628, 2147483648
    %v2630 = vmul.f32 %v2629, 1.442695
    %v2631 = vpow.pop %v2630
    %v2632 = vadd.f32 %v2631, 1.0
    %v2633 = vrcp.pop %v2632
    %v2634 = vmul.f32 1.0, %v2633
    %v2635 = vadd.f32 %v843, %v2556
    %v2636 = vxor.u32 %v2635, 2147483648
    %v2637 = vmul.f32 %v2636, 1.442695
    %v2638 = vpow.pop %v2637
    %v2639 = vadd.f32 %v2638, 1.0
    %v2640 = vrcp.pop %v2639
    %v2641 = vmul.f32 1.0, %v2640
    %v2642 = vadd.f32 %v2625, %v302
    %v2643 = vmul.f32 %v2634, %v2642
    %v2644 = vadd.f32 %v912, %v2643
    %v2645 = vtanh.pop %v2644
    %v2646 = vsub.f32 1.0, %v2641
    %v2647 = vmul.f32 %v2646, %v2645
    %v2648 = vmul.f32 %v2641, %v2321
    %v2649 = vadd.f32 %v2647, %v2648
    %2650 = vmatprep.subr.mxu0 %v213
    %2651 = vmatpush1.msra.mxu0 %v212
    %2652 = vmatprep.subr.mxu0 %v209
    %2653 = vmatpush1.msra.mxu0 %v208
    %2654 = vmatprep.subr.mxu0 %v205
    %2655 = vmatpush1.msra.mxu0 %v204
    %2656 = vmatprep.subr.mxu0 %v201
    %2657 = vmatpush1.msra.mxu0 %v200
    %2658 = vmatprep.subr.mxu0 %v197
    %2659 = vmatpush1.msra.mxu0 %v196
    %2660 = vmatprep.subr.mxu0 %v193
    %2661 = vmatpush1.msra.mxu0 %v192
    %2662 = vmatprep.subr.mxu0 %v189
    %2663 = vmatpush1.msra.mxu0 %v188
    %2664 = vmatprep.subr.mxu0 %v185
    %2665 = vmatpush1.msra.mxu0 %v184
    %2666 = vmatprep.subr.mxu0 %v181
    %2667 = vmatpush1.msra.mxu0 %v180
    %2668 = vmatprep.subr.mxu0 %v177
    %2669 = vmatpush1.msra.mxu0 %v176
    %2670 = vmatprep.subr.mxu0 %v173
    %2671 = vmatpush1.msra.mxu0 %v172
    %2672 = vmatprep.subr.mxu0 %v169
    %2673 = vmatpush1.msra.mxu0 %v168
    %2674 = vmatprep.subr.mxu0 %v165
    %2675 = vmatpush1.msra.mxu0 %v164
    %2676 = vmatprep.subr.mxu0 %v161
    %2677 = vmatpush1.msra.mxu0 %v160
    %2678 = vmatprep.subr.mxu0 %v157
    %2679 = vmatpush1.msra.mxu0 %v156
    %2680 = vmatprep.subr.mxu0 %v153
    %2681 = vmatpush1.msra.mxu0 %v152
    %2682 = vmatprep.subr.mxu0 %v277
    %2683 = vmatpush2.msra.mxu0 %v276
    %2684 = vmatprep.subr.mxu0 %v273
    %2685 = vmatpush2.msra.mxu0 %v272
    %2686 = vmatprep.subr.mxu0 %v269
    %2687 = vmatpush2.msra.mxu0 %v268
    %2688 = vmatprep.subr.mxu0 %v265
    %2689 = vmatpush2.msra.mxu0 %v264
    %2690 = vmatprep.subr.mxu0 %v261
    %2691 = vmatpush2.msra.mxu0 %v260
    %2692 = vmatprep.subr.mxu0 %v257
    %2693 = vmatpush2.msra.mxu0 %v256
    %2694 = vmatprep.subr.mxu0 %v253
    %2695 = vmatpush2.msra.mxu0 %v252
    %2696 = vmatprep.subr.mxu0 %v249
    %2697 = vmatpush2.msra.mxu0 %v248
    %2698 = vmatprep.subr.mxu0 %v245
    %2699 = vmatpush2.msra.mxu0 %v244
    %2700 = vmatprep.subr.mxu0 %v241
    %2701 = vmatpush2.msra.mxu0 %v240
    %2702 = vmatprep.subr.mxu0 %v237
    %2703 = vmatpush2.msra.mxu0 %v236
    %2704 = vmatprep.subr.mxu0 %v233
    %2705 = vmatpush2.msra.mxu0 %v232
    %2706 = vmatprep.subr.mxu0 %v229
    %2707 = vmatpush2.msra.mxu0 %v228
    %2708 = vmatprep.subr.mxu0 %v225
    %2709 = vmatpush2.msra.mxu0 %v224
    %2710 = vmatprep.subr.mxu0 %v221
    %2711 = vmatpush2.msra.mxu0 %v220
    %2712 = vmatprep.subr.mxu0 %v217
    %2713 = vmatpush2.msra.mxu0 %v216
    %2714 = vmatprep.mubr.f32.mxu0 %v2482
    %2715 = vmatmul.mubr.f32.gmra.mxu0 %v2649
    %v2716 = vpop.f32.mrf.mxu0
    %v2717 = vadd.f32 %v309, %v2716
    %v2718 = vpop.f32.mrf.mxu0
    %v2719 = vadd.f32 %v313, %v2718
    %2720 = vdwg.mxu0
    %2721 = vmatprep.subr.mxu0 %v215
    %2722 = vmatpush1.msra.mxu0 %v214
    %2723 = vmatprep.subr.mxu0 %v211
    %2724 = vmatpush1.msra.mxu0 %v210
    %2725 = vmatprep.subr.mxu0 %v207
    %2726 = vmatpush1.msra.mxu0 %v206
    %2727 = vmatprep.subr.mxu0 %v203
    %2728 = vmatpush1.msra.mxu0 %v202
    %2729 = vmatprep.subr.mxu0 %v199
    %2730 = vmatpush1.msra.mxu0 %v198
    %2731 = vmatprep.subr.mxu0 %v195
    %2732 = vmatpush1.msra.mxu0 %v194
    %2733 = vmatprep.subr.mxu0 %v191
    %2734 = vmatpush1.msra.mxu0 %v190
    %2735 = vmatprep.subr.mxu0 %v187
    %2736 = vmatpush1.msra.mxu0 %v186
    %2737 = vmatprep.subr.mxu0 %v183
    %2738 = vmatpush1.msra.mxu0 %v182
    %2739 = vmatprep.subr.mxu0 %v179
    %2740 = vmatpush1.msra.mxu0 %v178
    %2741 = vmatprep.subr.mxu0 %v175
    %2742 = vmatpush1.msra.mxu0 %v174
    %2743 = vmatprep.subr.mxu0 %v171
    %2744 = vmatpush1.msra.mxu0 %v170
    %2745 = vmatprep.subr.mxu0 %v167
    %2746 = vmatpush1.msra.mxu0 %v166
    %2747 = vmatprep.subr.mxu0 %v163
    %2748 = vmatpush1.msra.mxu0 %v162
    %2749 = vmatprep.subr.mxu0 %v159
    %2750 = vmatpush1.msra.mxu0 %v158
    %2751 = vmatprep.subr.mxu0 %v155
    %2752 = vmatpush1.msra.mxu0 %v154
    %2753 = vmatprep.subr.mxu0 %v279
    %2754 = vmatpush2.msra.mxu0 %v278
    %2755 = vmatprep.subr.mxu0 %v275
    %2756 = vmatpush2.msra.mxu0 %v274
    %2757 = vmatprep.subr.mxu0 %v271
    %2758 = vmatpush2.msra.mxu0 %v270
    %2759 = vmatprep.subr.mxu0 %v267
    %2760 = vmatpush2.msra.mxu0 %v266
    %2761 = vmatprep.subr.mxu0 %v263
    %2762 = vmatpush2.msra.mxu0 %v262
    %2763 = vmatprep.subr.mxu0 %v259
    %2764 = vmatpush2.msra.mxu0 %v258
    %2765 = vmatprep.subr.mxu0 %v255
    %2766 = vmatpush2.msra.mxu0 %v254
    %2767 = vmatprep.subr.mxu0 %v251
    %2768 = vmatpush2.msra.mxu0 %v250
    %2769 = vmatprep.subr.mxu0 %v247
    %2770 = vmatpush2.msra.mxu0 %v246
    %2771 = vmatprep.subr.mxu0 %v243
    %2772 = vmatpush2.msra.mxu0 %v242
    %2773 = vmatprep.subr.mxu0 %v239
    %2774 = vmatpush2.msra.mxu0 %v238
    %2775 = vmatprep.subr.mxu0 %v235
    %2776 = vmatpush2.msra.mxu0 %v234
    %2777 = vmatprep.subr.mxu0 %v231
    %2778 = vmatpush2.msra.mxu0 %v230
    %2779 = vmatprep.subr.mxu0 %v227
    %2780 = vmatpush2.msra.mxu0 %v226
    %2781 = vmatprep.subr.mxu0 %v223
    %2782 = vmatpush2.msra.mxu0 %v222
    %2783 = vmatprep.subr.mxu0 %v219
    %2784 = vmatpush2.msra.mxu0 %v218
    %2785 = vmatprep.mubr.f32.mxu0 %v2482
    %2786 = vmatmul.mubr.f32.gmra.mxu0 %v2649
    %v2787 = vpop.f32.mrf.mxu0
    %v2788 = vadd.f32 %v317, %v2787
    %v2789 = vpop.f32.mrf.mxu0
    %v2790 = vadd.f32 %v321, %v2789
    %2791 = vdwg.mxu0
    %v2792 = vxor.u32 %v2717, 2147483648
    %v2793 = vmul.f32 %v2792, 1.442695
    %v2794 = vpow.pop %v2793
    %v2795 = vadd.f32 %v2794, 1.0
    %v2796 = vrcp.pop %v2795
    %v2797 = vmul.f32 1.0, %v2796
    %v2798 = vxor.u32 %v2719, 2147483648
    %v2799 = vmul.f32 %v2798, 1.442695
    %v2800 = vpow.pop %v2799
    %v2801 = vadd.f32 %v2800, 1.0
    %v2802 = vrcp.pop %v2801
    %v2803 = vmul.f32 1.0, %v2802
    %v2804 = vmul.f32 %v2797, %v2790
    %v2805 = vadd.f32 %v2788, %v2804
    %v2806 = vtanh.pop %v2805
    %v2807 = vsub.f32 1.0, %v2803
    %v2808 = vmul.f32 %v2807, %v2806
    %v2809 = vmul.f32 %v2803, %v2482
    %v2810 = vadd.f32 %v2808, %v2809
    %v2811 = vstv %s2486
    %vm2812 = vcmp.eq.s32.totalorder %v330, %v2811
    %v2813 = vsel %vm2812, %v2810, %v2485
    %s2814 = sadd.s32 %s1502, 4
    %2815 = vmatprep.subr.mxu0 %v150
    %2816 = vmatpush1.msra.mxu0 %v149
    %2817 = vmatprep.subr.mxu0 %v147
    %2818 = vmatpush1.msra.mxu0 %v146
    %2819 = vmatprep.subr.mxu0 %v144
    %2820 = vmatpush1.msra.mxu0 %v143
    %2821 = vmatprep.subr.mxu0 %v141
    %2822 = vmatpush1.msra.mxu0 %v140
    %2823 = vmatprep.subr.mxu0 %v138
    %2824 = vmatpush1.msra.mxu0 %v137
    %2825 = vmatprep.subr.mxu0 %v135
    %2826 = vmatpush1.msra.mxu0 %v134
    %2827 = vmatprep.subr.mxu0 %v132
    %2828 = vmatpush1.msra.mxu0 %v131
    %2829 = vmatprep.subr.mxu0 %v129
    %2830 = vmatpush1.msra.mxu0 %v128
    %2831 = vmatprep.subr.mxu0 %v126
    %2832 = vmatpush1.msra.mxu0 %v125
    %2833 = vmatprep.subr.mxu0 %v123
    %2834 = vmatpush1.msra.mxu0 %v122
    %2835 = vmatprep.subr.mxu0 %v120
    %2836 = vmatpush1.msra.mxu0 %v119
    %2837 = vmatprep.subr.mxu0 %v117
    %2838 = vmatpush1.msra.mxu0 %v116
    %2839 = vmatprep.subr.mxu0 %v114
    %2840 = vmatpush1.msra.mxu0 %v113
    %2841 = vmatprep.subr.mxu0 %v111
    %2842 = vmatpush1.msra.mxu0 %v110
    %2843 = vmatprep.subr.mxu0 %v108
    %2844 = vmatpush1.msra.mxu0 %v107
    %2845 = vmatprep.subr.mxu0 %v105
    %2846 = vmatpush1.msra.mxu0 %v104
    %2847 = vmatprep.subr.mxu0 0.0
    %2848 = vmatpush2.msra.mxu0 0.0
    %2849 = vmatprep.subr.mxu0 0.0
    %2850 = vmatpush2.msra.mxu0 0.0
    %2851 = vmatprep.subr.mxu0 0.0
    %2852 = vmatpush2.msra.mxu0 0.0
    %2853 = vmatprep.subr.mxu0 0.0
    %2854 = vmatpush2.msra.mxu0 0.0
    %2855 = vmatprep.subr.mxu0 0.0
    %2856 = vmatpush2.msra.mxu0 0.0
    %2857 = vmatprep.subr.mxu0 0.0
    %2858 = vmatpush2.msra.mxu0 0.0
    %2859 = vmatprep.subr.mxu0 0.0
    %2860 = vmatpush2.msra.mxu0 0.0
    %2861 = vmatprep.subr.mxu0 0.0
    %2862 = vmatpush2.msra.mxu0 0.0
    %2863 = vmatprep.subr.mxu0 0.0
    %2864 = vmatpush2.msra.mxu0 0.0
    %2865 = vmatprep.subr.mxu0 0.0
    %2866 = vmatpush2.msra.mxu0 0.0
    %2867 = vmatprep.subr.mxu0 0.0
    %2868 = vmatpush2.msra.mxu0 0.0
    %2869 = vmatprep.subr.mxu0 0.0
    %2870 = vmatpush2.msra.mxu0 0.0
    %2871 = vmatprep.subr.mxu0 0.0
    %2872 = vmatpush2.msra.mxu0 0.0
    %2873 = vmatprep.subr.mxu0 0.0
    %2874 = vmatpush2.msra.mxu0 0.0
    %2875 = vmatprep.subr.mxu0 0.0
    %2876 = vmatpush2.msra.mxu0 0.0
    %2877 = vmatprep.subr.mxu0 0.0
    %2878 = vmatpush2.msra.mxu0 0.0
    %2879 = vmatprep.mubr.f32.mxu0 0.0
    %2880 = vmatmul.mubr.f32.gmra.mxu0 %v2649
    %v2881 = vpop.f32.mrf.mxu0
    %v2882 = vadd.f32 0.0, %v2881
    %v2883 = vpop.f32.mrf.mxu0
    %v2884 = vadd.f32 0.0, %v2883
    %2885 = vdwg.mxu0
    %2886 = vmatprep.subr.mxu0 0.0
    %2887 = vmatpush1.msra.mxu0 %v151
    %2888 = vmatprep.subr.mxu0 0.0
    %2889 = vmatpush1.msra.mxu0 %v148
    %2890 = vmatprep.subr.mxu0 0.0
    %2891 = vmatpush1.msra.mxu0 %v145
    %2892 = vmatprep.subr.mxu0 0.0
    %2893 = vmatpush1.msra.mxu0 %v142
    %2894 = vmatprep.subr.mxu0 0.0
    %2895 = vmatpush1.msra.mxu0 %v139
    %2896 = vmatprep.subr.mxu0 0.0
    %2897 = vmatpush1.msra.mxu0 %v136
    %2898 = vmatprep.subr.mxu0 0.0
    %2899 = vmatpush1.msra.mxu0 %v133
    %2900 = vmatprep.subr.mxu0 0.0
    %2901 = vmatpush1.msra.mxu0 %v130
    %2902 = vmatprep.subr.mxu0 0.0
    %2903 = vmatpush1.msra.mxu0 %v127
    %2904 = vmatprep.subr.mxu0 0.0
    %2905 = vmatpush1.msra.mxu0 %v124
    %2906 = vmatprep.subr.mxu0 0.0
    %2907 = vmatpush1.msra.mxu0 %v121
    %2908 = vmatprep.subr.mxu0 0.0
    %2909 = vmatpush1.msra.mxu0 %v118
    %2910 = vmatprep.subr.mxu0 0.0
    %2911 = vmatpush1.msra.mxu0 %v115
    %2912 = vmatprep.subr.mxu0 0.0
    %2913 = vmatpush1.msra.mxu0 %v112
    %2914 = vmatprep.subr.mxu0 0.0
    %2915 = vmatpush1.msra.mxu0 %v109
    %2916 = vmatprep.subr.mxu0 0.0
    %2917 = vmatpush1.msra.mxu0 %v106
    %2918 = vmatprep.subr.mxu0 0.0
    %2919 = vmatpush2.msra.mxu0 0.0
    %2920 = vmatprep.subr.mxu0 0.0
    %2921 = vmatpush2.msra.mxu0 0.0
    %2922 = vmatprep.subr.mxu0 0.0
    %2923 = vmatpush2.msra.mxu0 0.0
    %2924 = vmatprep.subr.mxu0 0.0
    %2925 = vmatpush2.msra.mxu0 0.0
    %2926 = vmatprep.subr.mxu0 0.0
    %2927 = vmatpush2.msra.mxu0 0.0
    %2928 = vmatprep.subr.mxu0 0.0
    %2929 = vmatpush2.msra.mxu0 0.0
    %2930 = vmatprep.subr.mxu0 0.0
    %2931 = vmatpush2.msra.mxu0 0.0
    %2932 = vmatprep.subr.mxu0 0.0
    %2933 = vmatpush2.msra.mxu0 0.0
    %2934 = vmatprep.subr.mxu0 0.0
    %2935 = vmatpush2.msra.mxu0 0.0
    %2936 = vmatprep.subr.mxu0 0.0
    %2937 = vmatpush2.msra.mxu0 0.0
    %2938 = vmatprep.subr.mxu0 0.0
    %2939 = vmatpush2.msra.mxu0 0.0
    %2940 = vmatprep.subr.mxu0 0.0
    %2941 = vmatpush2.msra.mxu0 0.0
    %2942 = vmatprep.subr.mxu0 0.0
    %2943 = vmatpush2.msra.mxu0 0.0
    %2944 = vmatprep.subr.mxu0 0.0
    %2945 = vmatpush2.msra.mxu0 0.0
    %2946 = vmatprep.subr.mxu0 0.0
    %2947 = vmatpush2.msra.mxu0 0.0
    %2948 = vmatprep.subr.mxu0 0.0
    %2949 = vmatpush2.msra.mxu0 0.0
    %2950 = vmatprep.mubr.f32.mxu0 0.0
    %2951 = vmatmul.mubr.f32.gmra.mxu0 %v2649
    %v2952 = vpop.f32.mrf.mxu0
    %v2953 = vadd.f32 0.0, %v2952
    %v2954 = vpop.f32.mrf.mxu0
    %2955 = vdwg.mxu0
    %v2956 = vadd.f32 %v987, %v2882
    %v2957 = vxor.u32 %v2956, 2147483648
    %v2958 = vmul.f32 %v2957, 1.442695
    %v2959 = vpow.pop %v2958
    %v2960 = vadd.f32 %v2959, 1.0
    %v2961 = vrcp.pop %v2960
    %v2962 = vmul.f32 1.0, %v2961
    %v2963 = vadd.f32 %v989, %v2884
    %v2964 = vxor.u32 %v2963, 2147483648
    %v2965 = vmul.f32 %v2964, 1.442695
    %v2966 = vpow.pop %v2965
    %v2967 = vadd.f32 %v2966, 1.0
    %v2968 = vrcp.pop %v2967
    %v2969 = vmul.f32 1.0, %v2968
    %v2970 = vadd.f32 %v2953, %v302
    %v2971 = vmul.f32 %v2962, %v2970
    %v2972 = vadd.f32 %v1058, %v2971
    %v2973 = vtanh.pop %v2972
    %v2974 = vsub.f32 1.0, %v2969
    %v2975 = vmul.f32 %v2974, %v2973
    %v2976 = vmul.f32 %v2969, %v2649
    %v2977 = vadd.f32 %v2975, %v2976
    %2978 = vmatprep.subr.mxu0 %v213
    %2979 = vmatpush1.msra.mxu0 %v212
    %2980 = vmatprep.subr.mxu0 %v209
    %2981 = vmatpush1.msra.mxu0 %v208
    %2982 = vmatprep.subr.mxu0 %v205
    %2983 = vmatpush1.msra.mxu0 %v204
    %2984 = vmatprep.subr.mxu0 %v201
    %2985 = vmatpush1.msra.mxu0 %v200
    %2986 = vmatprep.subr.mxu0 %v197
    %2987 = vmatpush1.msra.mxu0 %v196
    %2988 = vmatprep.subr.mxu0 %v193
    %2989 = vmatpush1.msra.mxu0 %v192
    %2990 = vmatprep.subr.mxu0 %v189
    %2991 = vmatpush1.msra.mxu0 %v188
    %2992 = vmatprep.subr.mxu0 %v185
    %2993 = vmatpush1.msra.mxu0 %v184
    %2994 = vmatprep.subr.mxu0 %v181
    %2995 = vmatpush1.msra.mxu0 %v180
    %2996 = vmatprep.subr.mxu0 %v177
    %2997 = vmatpush1.msra.mxu0 %v176
    %2998 = vmatprep.subr.mxu0 %v173
    %2999 = vmatpush1.msra.mxu0 %v172
    %3000 = vmatprep.subr.mxu0 %v169
    %3001 = vmatpush1.msra.mxu0 %v168
    %3002 = vmatprep.subr.mxu0 %v165
    %3003 = vmatpush1.msra.mxu0 %v164
    %3004 = vmatprep.subr.mxu0 %v161
    %3005 = vmatpush1.msra.mxu0 %v160
    %3006 = vmatprep.subr.mxu0 %v157
    %3007 = vmatpush1.msra.mxu0 %v156
    %3008 = vmatprep.subr.mxu0 %v153
    %3009 = vmatpush1.msra.mxu0 %v152
    %3010 = vmatprep.subr.mxu0 %v277
    %3011 = vmatpush2.msra.mxu0 %v276
    %3012 = vmatprep.subr.mxu0 %v273
    %3013 = vmatpush2.msra.mxu0 %v272
    %3014 = vmatprep.subr.mxu0 %v269
    %3015 = vmatpush2.msra.mxu0 %v268
    %3016 = vmatprep.subr.mxu0 %v265
    %3017 = vmatpush2.msra.mxu0 %v264
    %3018 = vmatprep.subr.mxu0 %v261
    %3019 = vmatpush2.msra.mxu0 %v260
    %3020 = vmatprep.subr.mxu0 %v257
    %3021 = vmatpush2.msra.mxu0 %v256
    %3022 = vmatprep.subr.mxu0 %v253
    %3023 = vmatpush2.msra.mxu0 %v252
    %3024 = vmatprep.subr.mxu0 %v249
    %3025 = vmatpush2.msra.mxu0 %v248
    %3026 = vmatprep.subr.mxu0 %v245
    %3027 = vmatpush2.msra.mxu0 %v244
    %3028 = vmatprep.subr.mxu0 %v241
    %3029 = vmatpush2.msra.mxu0 %v240
    %3030 = vmatprep.subr.mxu0 %v237
    %3031 = vmatpush2.msra.mxu0 %v236
    %3032 = vmatprep.subr.mxu0 %v233
    %3033 = vmatpush2.msra.mxu0 %v232
    %3034 = vmatprep.subr.mxu0 %v229
    %3035 = vmatpush2.msra.mxu0 %v228
    %3036 = vmatprep.subr.mxu0 %v225
    %3037 = vmatpush2.msra.mxu0 %v224
    %3038 = vmatprep.subr.mxu0 %v221
    %3039 = vmatpush2.msra.mxu0 %v220
    %3040 = vmatprep.subr.mxu0 %v217
    %3041 = vmatpush2.msra.mxu0 %v216
    %3042 = vmatprep.mubr.f32.mxu0 %v2810
    %3043 = vmatmul.mubr.f32.gmra.mxu0 %v2977
    %v3044 = vpop.f32.mrf.mxu0
    %v3045 = vadd.f32 %v309, %v3044
    %v3046 = vpop.f32.mrf.mxu0
    %v3047 = vadd.f32 %v313, %v3046
    %3048 = vdwg.mxu0
    %3049 = vmatprep.subr.mxu0 %v215
    %3050 = vmatpush1.msra.mxu0 %v214
    %3051 = vmatprep.subr.mxu0 %v211
    %3052 = vmatpush1.msra.mxu0 %v210
    %3053 = vmatprep.subr.mxu0 %v207
    %3054 = vmatpush1.msra.mxu0 %v206
    %3055 = vmatprep.subr.mxu0 %v203
    %3056 = vmatpush1.msra.mxu0 %v202
    %3057 = vmatprep.subr.mxu0 %v199
    %3058 = vmatpush1.msra.mxu0 %v198
    %3059 = vmatprep.subr.mxu0 %v195
    %3060 = vmatpush1.msra.mxu0 %v194
    %3061 = vmatprep.subr.mxu0 %v191
    %3062 = vmatpush1.msra.mxu0 %v190
    %3063 = vmatprep.subr.mxu0 %v187
    %3064 = vmatpush1.msra.mxu0 %v186
    %3065 = vmatprep.subr.mxu0 %v183
    %3066 = vmatpush1.msra.mxu0 %v182
    %3067 = vmatprep.subr.mxu0 %v179
    %3068 = vmatpush1.msra.mxu0 %v178
    %3069 = vmatprep.subr.mxu0 %v175
    %3070 = vmatpush1.msra.mxu0 %v174
    %3071 = vmatprep.subr.mxu0 %v171
    %3072 = vmatpush1.msra.mxu0 %v170
    %3073 = vmatprep.subr.mxu0 %v167
    %3074 = vmatpush1.msra.mxu0 %v166
    %3075 = vmatprep.subr.mxu0 %v163
    %3076 = vmatpush1.msra.mxu0 %v162
    %3077 = vmatprep.subr.mxu0 %v159
    %3078 = vmatpush1.msra.mxu0 %v158
    %3079 = vmatprep.subr.mxu0 %v155
    %3080 = vmatpush1.msra.mxu0 %v154
    %3081 = vmatprep.subr.mxu0 %v279
    %3082 = vmatpush2.msra.mxu0 %v278
    %3083 = vmatprep.subr.mxu0 %v275
    %3084 = vmatpush2.msra.mxu0 %v274
    %3085 = vmatprep.subr.mxu0 %v271
    %3086 = vmatpush2.msra.mxu0 %v270
    %3087 = vmatprep.subr.mxu0 %v267
    %3088 = vmatpush2.msra.mxu0 %v266
    %3089 = vmatprep.subr.mxu0 %v263
    %3090 = vmatpush2.msra.mxu0 %v262
    %3091 = vmatprep.subr.mxu0 %v259
    %3092 = vmatpush2.msra.mxu0 %v258
    %3093 = vmatprep.subr.mxu0 %v255
    %3094 = vmatpush2.msra.mxu0 %v254
    %3095 = vmatprep.subr.mxu0 %v251
    %3096 = vmatpush2.msra.mxu0 %v250
    %3097 = vmatprep.subr.mxu0 %v247
    %3098 = vmatpush2.msra.mxu0 %v246
    %3099 = vmatprep.subr.mxu0 %v243
    %3100 = vmatpush2.msra.mxu0 %v242
    %3101 = vmatprep.subr.mxu0 %v239
    %3102 = vmatpush2.msra.mxu0 %v238
    %3103 = vmatprep.subr.mxu0 %v235
    %3104 = vmatpush2.msra.mxu0 %v234
    %3105 = vmatprep.subr.mxu0 %v231
    %3106 = vmatpush2.msra.mxu0 %v230
    %3107 = vmatprep.subr.mxu0 %v227
    %3108 = vmatpush2.msra.mxu0 %v226
    %3109 = vmatprep.subr.mxu0 %v223
    %3110 = vmatpush2.msra.mxu0 %v222
    %3111 = vmatprep.subr.mxu0 %v219
    %3112 = vmatpush2.msra.mxu0 %v218
    %3113 = vmatprep.mubr.f32.mxu0 %v2810
    %3114 = vmatmul.mubr.f32.gmra.mxu0 %v2977
    %v3115 = vpop.f32.mrf.mxu0
    %v3116 = vadd.f32 %v317, %v3115
    %v3117 = vpop.f32.mrf.mxu0
    %v3118 = vadd.f32 %v321, %v3117
    %3119 = vdwg.mxu0
    %v3120 = vxor.u32 %v3045, 2147483648
    %v3121 = vmul.f32 %v3120, 1.442695
    %v3122 = vpow.pop %v3121
    %v3123 = vadd.f32 %v3122, 1.0
    %v3124 = vrcp.pop %v3123
    %v3125 = vmul.f32 1.0, %v3124
    %v3126 = vxor.u32 %v3047, 2147483648
    %v3127 = vmul.f32 %v3126, 1.442695
    %v3128 = vpow.pop %v3127
    %v3129 = vadd.f32 %v3128, 1.0
    %v3130 = vrcp.pop %v3129
    %v3131 = vmul.f32 1.0, %v3130
    %v3132 = vmul.f32 %v3125, %v3118
    %v3133 = vadd.f32 %v3116, %v3132
    %v3134 = vtanh.pop %v3133
    %v3135 = vsub.f32 1.0, %v3131
    %v3136 = vmul.f32 %v3135, %v3134
    %v3137 = vmul.f32 %v3131, %v2810
    %v3138 = vadd.f32 %v3136, %v3137
    %v3139 = vstv %s2814
    %vm3140 = vcmp.eq.s32.totalorder %v330, %v3139
    %v3141 = vsel %vm3140, %v3138, %v2813
    %s3142 = sadd.s32 %s1502, 5
    %3143 = vmatprep.subr.mxu0 %v150
    %3144 = vmatpush1.msra.mxu0 %v149
    %3145 = vmatprep.subr.mxu0 %v147
    %3146 = vmatpush1.msra.mxu0 %v146
    %3147 = vmatprep.subr.mxu0 %v144
    %3148 = vmatpush1.msra.mxu0 %v143
    %3149 = vmatprep.subr.mxu0 %v141
    %3150 = vmatpush1.msra.mxu0 %v140
    %3151 = vmatprep.subr.mxu0 %v138
    %3152 = vmatpush1.msra.mxu0 %v137
    %3153 = vmatprep.subr.mxu0 %v135
    %3154 = vmatpush1.msra.mxu0 %v134
    %3155 = vmatprep.subr.mxu0 %v132
    %3156 = vmatpush1.msra.mxu0 %v131
    %3157 = vmatprep.subr.mxu0 %v129
    %3158 = vmatpush1.msra.mxu0 %v128
    %3159 = vmatprep.subr.mxu0 %v126
    %3160 = vmatpush1.msra.mxu0 %v125
    %3161 = vmatprep.subr.mxu0 %v123
    %3162 = vmatpush1.msra.mxu0 %v122
    %3163 = vmatprep.subr.mxu0 %v120
    %3164 = vmatpush1.msra.mxu0 %v119
    %3165 = vmatprep.subr.mxu0 %v117
    %3166 = vmatpush1.msra.mxu0 %v116
    %3167 = vmatprep.subr.mxu0 %v114
    %3168 = vmatpush1.msra.mxu0 %v113
    %3169 = vmatprep.subr.mxu0 %v111
    %3170 = vmatpush1.msra.mxu0 %v110
    %3171 = vmatprep.subr.mxu0 %v108
    %3172 = vmatpush1.msra.mxu0 %v107
    %3173 = vmatprep.subr.mxu0 %v105
    %3174 = vmatpush1.msra.mxu0 %v104
    %3175 = vmatprep.subr.mxu0 0.0
    %3176 = vmatpush2.msra.mxu0 0.0
    %3177 = vmatprep.subr.mxu0 0.0
    %3178 = vmatpush2.msra.mxu0 0.0
    %3179 = vmatprep.subr.mxu0 0.0
    %3180 = vmatpush2.msra.mxu0 0.0
    %3181 = vmatprep.subr.mxu0 0.0
    %3182 = vmatpush2.msra.mxu0 0.0
    %3183 = vmatprep.subr.mxu0 0.0
    %3184 = vmatpush2.msra.mxu0 0.0
    %3185 = vmatprep.subr.mxu0 0.0
    %3186 = vmatpush2.msra.mxu0 0.0
    %3187 = vmatprep.subr.mxu0 0.0
    %3188 = vmatpush2.msra.mxu0 0.0
    %3189 = vmatprep.subr.mxu0 0.0
    %3190 = vmatpush2.msra.mxu0 0.0
    %3191 = vmatprep.subr.mxu0 0.0
    %3192 = vmatpush2.msra.mxu0 0.0
    %3193 = vmatprep.subr.mxu0 0.0
    %3194 = vmatpush2.msra.mxu0 0.0
    %3195 = vmatprep.subr.mxu0 0.0
    %3196 = vmatpush2.msra.mxu0 0.0
    %3197 = vmatprep.subr.mxu0 0.0
    %3198 = vmatpush2.msra.mxu0 0.0
    %3199 = vmatprep.subr.mxu0 0.0
    %3200 = vmatpush2.msra.mxu0 0.0
    %3201 = vmatprep.subr.mxu0 0.0
    %3202 = vmatpush2.msra.mxu0 0.0
    %3203 = vmatprep.subr.mxu0 0.0
    %3204 = vmatpush2.msra.mxu0 0.0
    %3205 = vmatprep.subr.mxu0 0.0
    %3206 = vmatpush2.msra.mxu0 0.0
    %3207 = vmatprep.mubr.f32.mxu0 0.0
    %3208 = vmatmul.mubr.f32.gmra.mxu0 %v2977
    %v3209 = vpop.f32.mrf.mxu0
    %v3210 = vadd.f32 0.0, %v3209
    %v3211 = vpop.f32.mrf.mxu0
    %v3212 = vadd.f32 0.0, %v3211
    %3213 = vdwg.mxu0
    %3214 = vmatprep.subr.mxu0 0.0
    %3215 = vmatpush1.msra.mxu0 %v151
    %3216 = vmatprep.subr.mxu0 0.0
    %3217 = vmatpush1.msra.mxu0 %v148
    %3218 = vmatprep.subr.mxu0 0.0
    %3219 = vmatpush1.msra.mxu0 %v145
    %3220 = vmatprep.subr.mxu0 0.0
    %3221 = vmatpush1.msra.mxu0 %v142
    %3222 = vmatprep.subr.mxu0 0.0
    %3223 = vmatpush1.msra.mxu0 %v139
    %3224 = vmatprep.subr.mxu0 0.0
    %3225 = vmatpush1.msra.mxu0 %v136
    %3226 = vmatprep.subr.mxu0 0.0
    %3227 = vmatpush1.msra.mxu0 %v133
    %3228 = vmatprep.subr.mxu0 0.0
    %3229 = vmatpush1.msra.mxu0 %v130
    %3230 = vmatprep.subr.mxu0 0.0
    %3231 = vmatpush1.msra.mxu0 %v127
    %3232 = vmatprep.subr.mxu0 0.0
    %3233 = vmatpush1.msra.mxu0 %v124
    %3234 = vmatprep.subr.mxu0 0.0
    %3235 = vmatpush1.msra.mxu0 %v121
    %3236 = vmatprep.subr.mxu0 0.0
    %3237 = vmatpush1.msra.mxu0 %v118
    %3238 = vmatprep.subr.mxu0 0.0
    %3239 = vmatpush1.msra.mxu0 %v115
    %3240 = vmatprep.subr.mxu0 0.0
    %3241 = vmatpush1.msra.mxu0 %v112
    %3242 = vmatprep.subr.mxu0 0.0
    %3243 = vmatpush1.msra.mxu0 %v109
    %3244 = vmatprep.subr.mxu0 0.0
    %3245 = vmatpush1.msra.mxu0 %v106
    %3246 = vmatprep.subr.mxu0 0.0
    %3247 = vmatpush2.msra.mxu0 0.0
    %3248 = vmatprep.subr.mxu0 0.0
    %3249 = vmatpush2.msra.mxu0 0.0
    %3250 = vmatprep.subr.mxu0 0.0
    %3251 = vmatpush2.msra.mxu0 0.0
    %3252 = vmatprep.subr.mxu0 0.0
    %3253 = vmatpush2.msra.mxu0 0.0
    %3254 = vmatprep.subr.mxu0 0.0
    %3255 = vmatpush2.msra.mxu0 0.0
    %3256 = vmatprep.subr.mxu0 0.0
    %3257 = vmatpush2.msra.mxu0 0.0
    %3258 = vmatprep.subr.mxu0 0.0
    %3259 = vmatpush2.msra.mxu0 0.0
    %3260 = vmatprep.subr.mxu0 0.0
    %3261 = vmatpush2.msra.mxu0 0.0
    %3262 = vmatprep.subr.mxu0 0.0
    %3263 = vmatpush2.msra.mxu0 0.0
    %3264 = vmatprep.subr.mxu0 0.0
    %3265 = vmatpush2.msra.mxu0 0.0
    %3266 = vmatprep.subr.mxu0 0.0
    %3267 = vmatpush2.msra.mxu0 0.0
    %3268 = vmatprep.subr.mxu0 0.0
    %3269 = vmatpush2.msra.mxu0 0.0
    %3270 = vmatprep.subr.mxu0 0.0
    %3271 = vmatpush2.msra.mxu0 0.0
    %3272 = vmatprep.subr.mxu0 0.0
    %3273 = vmatpush2.msra.mxu0 0.0
    %3274 = vmatprep.subr.mxu0 0.0
    %3275 = vmatpush2.msra.mxu0 0.0
    %3276 = vmatprep.subr.mxu0 0.0
    %3277 = vmatpush2.msra.mxu0 0.0
    %3278 = vmatprep.mubr.f32.mxu0 0.0
    %3279 = vmatmul.mubr.f32.gmra.mxu0 %v2977
    %v3280 = vpop.f32.mrf.mxu0
    %v3281 = vadd.f32 0.0, %v3280
    %v3282 = vpop.f32.mrf.mxu0
    %3283 = vdwg.mxu0
    %v3284 = vadd.f32 %v1133, %v3210
    %v3285 = vxor.u32 %v3284, 2147483648
    %v3286 = vmul.f32 %v3285, 1.442695
    %v3287 = vpow.pop %v3286
    %v3288 = vadd.f32 %v3287, 1.0
    %v3289 = vrcp.pop %v3288
    %v3290 = vmul.f32 1.0, %v3289
    %v3291 = vadd.f32 %v1135, %v3212
    %v3292 = vxor.u32 %v3291, 2147483648
    %v3293 = vmul.f32 %v3292, 1.442695
    %v3294 = vpow.pop %v3293
    %v3295 = vadd.f32 %v3294, 1.0
    %v3296 = vrcp.pop %v3295
    %v3297 = vmul.f32 1.0, %v3296
    %v3298 = vadd.f32 %v3281, %v302
    %v3299 = vmul.f32 %v3290, %v3298
    %v3300 = vadd.f32 %v1204, %v3299
    %v3301 = vtanh.pop %v3300
    %v3302 = vsub.f32 1.0, %v3297
    %v3303 = vmul.f32 %v3302, %v3301
    %v3304 = vmul.f32 %v3297, %v2977
    %v3305 = vadd.f32 %v3303, %v3304
    %3306 = vmatprep.subr.mxu0 %v213
    %3307 = vmatpush1.msra.mxu0 %v212
    %3308 = vmatprep.subr.mxu0 %v209
    %3309 = vmatpush1.msra.mxu0 %v208
    %3310 = vmatprep.subr.mxu0 %v205
    %3311 = vmatpush1.msra.mxu0 %v204
    %3312 = vmatprep.subr.mxu0 %v201
    %3313 = vmatpush1.msra.mxu0 %v200
    %3314 = vmatprep.subr.mxu0 %v197
    %3315 = vmatpush1.msra.mxu0 %v196
    %3316 = vmatprep.subr.mxu0 %v193
    %3317 = vmatpush1.msra.mxu0 %v192
    %3318 = vmatprep.subr.mxu0 %v189
    %3319 = vmatpush1.msra.mxu0 %v188
    %3320 = vmatprep.subr.mxu0 %v185
    %3321 = vmatpush1.msra.mxu0 %v184
    %3322 = vmatprep.subr.mxu0 %v181
    %3323 = vmatpush1.msra.mxu0 %v180
    %3324 = vmatprep.subr.mxu0 %v177
    %3325 = vmatpush1.msra.mxu0 %v176
    %3326 = vmatprep.subr.mxu0 %v173
    %3327 = vmatpush1.msra.mxu0 %v172
    %3328 = vmatprep.subr.mxu0 %v169
    %3329 = vmatpush1.msra.mxu0 %v168
    %3330 = vmatprep.subr.mxu0 %v165
    %3331 = vmatpush1.msra.mxu0 %v164
    %3332 = vmatprep.subr.mxu0 %v161
    %3333 = vmatpush1.msra.mxu0 %v160
    %3334 = vmatprep.subr.mxu0 %v157
    %3335 = vmatpush1.msra.mxu0 %v156
    %3336 = vmatprep.subr.mxu0 %v153
    %3337 = vmatpush1.msra.mxu0 %v152
    %3338 = vmatprep.subr.mxu0 %v277
    %3339 = vmatpush2.msra.mxu0 %v276
    %3340 = vmatprep.subr.mxu0 %v273
    %3341 = vmatpush2.msra.mxu0 %v272
    %3342 = vmatprep.subr.mxu0 %v269
    %3343 = vmatpush2.msra.mxu0 %v268
    %3344 = vmatprep.subr.mxu0 %v265
    %3345 = vmatpush2.msra.mxu0 %v264
    %3346 = vmatprep.subr.mxu0 %v261
    %3347 = vmatpush2.msra.mxu0 %v260
    %3348 = vmatprep.subr.mxu0 %v257
    %3349 = vmatpush2.msra.mxu0 %v256
    %3350 = vmatprep.subr.mxu0 %v253
    %3351 = vmatpush2.msra.mxu0 %v252
    %3352 = vmatprep.subr.mxu0 %v249
    %3353 = vmatpush2.msra.mxu0 %v248
    %3354 = vmatprep.subr.mxu0 %v245
    %3355 = vmatpush2.msra.mxu0 %v244
    %3356 = vmatprep.subr.mxu0 %v241
    %3357 = vmatpush2.msra.mxu0 %v240
    %3358 = vmatprep.subr.mxu0 %v237
    %3359 = vmatpush2.msra.mxu0 %v236
    %3360 = vmatprep.subr.mxu0 %v233
    %3361 = vmatpush2.msra.mxu0 %v232
    %3362 = vmatprep.subr.mxu0 %v229
    %3363 = vmatpush2.msra.mxu0 %v228
    %3364 = vmatprep.subr.mxu0 %v225
    %3365 = vmatpush2.msra.mxu0 %v224
    %3366 = vmatprep.subr.mxu0 %v221
    %3367 = vmatpush2.msra.mxu0 %v220
    %3368 = vmatprep.subr.mxu0 %v217
    %3369 = vmatpush2.msra.mxu0 %v216
    %3370 = vmatprep.mubr.f32.mxu0 %v3138
    %3371 = vmatmul.mubr.f32.gmra.mxu0 %v3305
    %v3372 = vpop.f32.mrf.mxu0
    %v3373 = vadd.f32 %v309, %v3372
    %v3374 = vpop.f32.mrf.mxu0
    %v3375 = vadd.f32 %v313, %v3374
    %3376 = vdwg.mxu0
    %3377 = vmatprep.subr.mxu0 %v215
    %3378 = vmatpush1.msra.mxu0 %v214
    %3379 = vmatprep.subr.mxu0 %v211
    %3380 = vmatpush1.msra.mxu0 %v210
    %3381 = vmatprep.subr.mxu0 %v207
    %3382 = vmatpush1.msra.mxu0 %v206
    %3383 = vmatprep.subr.mxu0 %v203
    %3384 = vmatpush1.msra.mxu0 %v202
    %3385 = vmatprep.subr.mxu0 %v199
    %3386 = vmatpush1.msra.mxu0 %v198
    %3387 = vmatprep.subr.mxu0 %v195
    %3388 = vmatpush1.msra.mxu0 %v194
    %3389 = vmatprep.subr.mxu0 %v191
    %3390 = vmatpush1.msra.mxu0 %v190
    %3391 = vmatprep.subr.mxu0 %v187
    %3392 = vmatpush1.msra.mxu0 %v186
    %3393 = vmatprep.subr.mxu0 %v183
    %3394 = vmatpush1.msra.mxu0 %v182
    %3395 = vmatprep.subr.mxu0 %v179
    %3396 = vmatpush1.msra.mxu0 %v178
    %3397 = vmatprep.subr.mxu0 %v175
    %3398 = vmatpush1.msra.mxu0 %v174
    %3399 = vmatprep.subr.mxu0 %v171
    %3400 = vmatpush1.msra.mxu0 %v170
    %3401 = vmatprep.subr.mxu0 %v167
    %3402 = vmatpush1.msra.mxu0 %v166
    %3403 = vmatprep.subr.mxu0 %v163
    %3404 = vmatpush1.msra.mxu0 %v162
    %3405 = vmatprep.subr.mxu0 %v159
    %3406 = vmatpush1.msra.mxu0 %v158
    %3407 = vmatprep.subr.mxu0 %v155
    %3408 = vmatpush1.msra.mxu0 %v154
    %3409 = vmatprep.subr.mxu0 %v279
    %3410 = vmatpush2.msra.mxu0 %v278
    %3411 = vmatprep.subr.mxu0 %v275
    %3412 = vmatpush2.msra.mxu0 %v274
    %3413 = vmatprep.subr.mxu0 %v271
    %3414 = vmatpush2.msra.mxu0 %v270
    %3415 = vmatprep.subr.mxu0 %v267
    %3416 = vmatpush2.msra.mxu0 %v266
    %3417 = vmatprep.subr.mxu0 %v263
    %3418 = vmatpush2.msra.mxu0 %v262
    %3419 = vmatprep.subr.mxu0 %v259
    %3420 = vmatpush2.msra.mxu0 %v258
    %3421 = vmatprep.subr.mxu0 %v255
    %3422 = vmatpush2.msra.mxu0 %v254
    %3423 = vmatprep.subr.mxu0 %v251
    %3424 = vmatpush2.msra.mxu0 %v250
    %3425 = vmatprep.subr.mxu0 %v247
    %3426 = vmatpush2.msra.mxu0 %v246
    %3427 = vmatprep.subr.mxu0 %v243
    %3428 = vmatpush2.msra.mxu0 %v242
    %3429 = vmatprep.subr.mxu0 %v239
    %3430 = vmatpush2.msra.mxu0 %v238
    %3431 = vmatprep.subr.mxu0 %v235
    %3432 = vmatpush2.msra.mxu0 %v234
    %3433 = vmatprep.subr.mxu0 %v231
    %3434 = vmatpush2.msra.mxu0 %v230
    %3435 = vmatprep.subr.mxu0 %v227
    %3436 = vmatpush2.msra.mxu0 %v226
    %3437 = vmatprep.subr.mxu0 %v223
    %3438 = vmatpush2.msra.mxu0 %v222
    %3439 = vmatprep.subr.mxu0 %v219
    %3440 = vmatpush2.msra.mxu0 %v218
    %3441 = vmatprep.mubr.f32.mxu0 %v3138
    %3442 = vmatmul.mubr.f32.gmra.mxu0 %v3305
    %v3443 = vpop.f32.mrf.mxu0
    %v3444 = vadd.f32 %v317, %v3443
    %v3445 = vpop.f32.mrf.mxu0
    %v3446 = vadd.f32 %v321, %v3445
    %3447 = vdwg.mxu0
    %v3448 = vxor.u32 %v3373, 2147483648
    %v3449 = vmul.f32 %v3448, 1.442695
    %v3450 = vpow.pop %v3449
    %v3451 = vadd.f32 %v3450, 1.0
    %v3452 = vrcp.pop %v3451
    %v3453 = vmul.f32 1.0, %v3452
    %v3454 = vxor.u32 %v3375, 2147483648
    %v3455 = vmul.f32 %v3454, 1.442695
    %v3456 = vpow.pop %v3455
    %v3457 = vadd.f32 %v3456, 1.0
    %v3458 = vrcp.pop %v3457
    %v3459 = vmul.f32 1.0, %v3458
    %v3460 = vmul.f32 %v3453, %v3446
    %v3461 = vadd.f32 %v3444, %v3460
    %v3462 = vtanh.pop %v3461
    %v3463 = vsub.f32 1.0, %v3459
    %v3464 = vmul.f32 %v3463, %v3462
    %v3465 = vmul.f32 %v3459, %v3138
    %v3466 = vadd.f32 %v3464, %v3465
    %v3467 = vstv %s3142
    %vm3468 = vcmp.eq.s32.totalorder %v330, %v3467
    %v3469 = vsel %vm3468, %v3466, %v3141
    %s3470 = sadd.s32 %s1502, 6
    %3471 = vmatprep.subr.mxu0 %v150
    %3472 = vmatpush1.msra.mxu0 %v149
    %3473 = vmatprep.subr.mxu0 %v147
    %3474 = vmatpush1.msra.mxu0 %v146
    %3475 = vmatprep.subr.mxu0 %v144
    %3476 = vmatpush1.msra.mxu0 %v143
    %3477 = vmatprep.subr.mxu0 %v141
    %3478 = vmatpush1.msra.mxu0 %v140
    %3479 = vmatprep.subr.mxu0 %v138
    %3480 = vmatpush1.msra.mxu0 %v137
    %3481 = vmatprep.subr.mxu0 %v135
    %3482 = vmatpush1.msra.mxu0 %v134
    %3483 = vmatprep.subr.mxu0 %v132
    %3484 = vmatpush1.msra.mxu0 %v131
    %3485 = vmatprep.subr.mxu0 %v129
    %3486 = vmatpush1.msra.mxu0 %v128
    %3487 = vmatprep.subr.mxu0 %v126
    %3488 = vmatpush1.msra.mxu0 %v125
    %3489 = vmatprep.subr.mxu0 %v123
    %3490 = vmatpush1.msra.mxu0 %v122
    %3491 = vmatprep.subr.mxu0 %v120
    %3492 = vmatpush1.msra.mxu0 %v119
    %3493 = vmatprep.subr.mxu0 %v117
    %3494 = vmatpush1.msra.mxu0 %v116
    %3495 = vmatprep.subr.mxu0 %v114
    %3496 = vmatpush1.msra.mxu0 %v113
    %3497 = vmatprep.subr.mxu0 %v111
    %3498 = vmatpush1.msra.mxu0 %v110
    %3499 = vmatprep.subr.mxu0 %v108
    %3500 = vmatpush1.msra.mxu0 %v107
    %3501 = vmatprep.subr.mxu0 %v105
    %3502 = vmatpush1.msra.mxu0 %v104
    %3503 = vmatprep.subr.mxu0 0.0
    %3504 = vmatpush2.msra.mxu0 0.0
    %3505 = vmatprep.subr.mxu0 0.0
    %3506 = vmatpush2.msra.mxu0 0.0
    %3507 = vmatprep.subr.mxu0 0.0
    %3508 = vmatpush2.msra.mxu0 0.0
    %3509 = vmatprep.subr.mxu0 0.0
    %3510 = vmatpush2.msra.mxu0 0.0
    %3511 = vmatprep.subr.mxu0 0.0
    %3512 = vmatpush2.msra.mxu0 0.0
    %3513 = vmatprep.subr.mxu0 0.0
    %3514 = vmatpush2.msra.mxu0 0.0
    %3515 = vmatprep.subr.mxu0 0.0
    %3516 = vmatpush2.msra.mxu0 0.0
    %3517 = vmatprep.subr.mxu0 0.0
    %3518 = vmatpush2.msra.mxu0 0.0
    %3519 = vmatprep.subr.mxu0 0.0
    %3520 = vmatpush2.msra.mxu0 0.0
    %3521 = vmatprep.subr.mxu0 0.0
    %3522 = vmatpush2.msra.mxu0 0.0
    %3523 = vmatprep.subr.mxu0 0.0
    %3524 = vmatpush2.msra.mxu0 0.0
    %3525 = vmatprep.subr.mxu0 0.0
    %3526 = vmatpush2.msra.mxu0 0.0
    %3527 = vmatprep.subr.mxu0 0.0
    %3528 = vmatpush2.msra.mxu0 0.0
    %3529 = vmatprep.subr.mxu0 0.0
    %3530 = vmatpush2.msra.mxu0 0.0
    %3531 = vmatprep.subr.mxu0 0.0
    %3532 = vmatpush2.msra.mxu0 0.0
    %3533 = vmatprep.subr.mxu0 0.0
    %3534 = vmatpush2.msra.mxu0 0.0
    %3535 = vmatprep.mubr.f32.mxu0 0.0
    %3536 = vmatmul.mubr.f32.gmra.mxu0 %v3305
    %v3537 = vpop.f32.mrf.mxu0
    %v3538 = vadd.f32 0.0, %v3537
    %v3539 = vpop.f32.mrf.mxu0
    %v3540 = vadd.f32 0.0, %v3539
    %3541 = vdwg.mxu0
    %3542 = vmatprep.subr.mxu0 0.0
    %3543 = vmatpush1.msra.mxu0 %v151
    %3544 = vmatprep.subr.mxu0 0.0
    %3545 = vmatpush1.msra.mxu0 %v148
    %3546 = vmatprep.subr.mxu0 0.0
    %3547 = vmatpush1.msra.mxu0 %v145
    %3548 = vmatprep.subr.mxu0 0.0
    %3549 = vmatpush1.msra.mxu0 %v142
    %3550 = vmatprep.subr.mxu0 0.0
    %3551 = vmatpush1.msra.mxu0 %v139
    %3552 = vmatprep.subr.mxu0 0.0
    %3553 = vmatpush1.msra.mxu0 %v136
    %3554 = vmatprep.subr.mxu0 0.0
    %3555 = vmatpush1.msra.mxu0 %v133
    %3556 = vmatprep.subr.mxu0 0.0
    %3557 = vmatpush1.msra.mxu0 %v130
    %3558 = vmatprep.subr.mxu0 0.0
    %3559 = vmatpush1.msra.mxu0 %v127
    %3560 = vmatprep.subr.mxu0 0.0
    %3561 = vmatpush1.msra.mxu0 %v124
    %3562 = vmatprep.subr.mxu0 0.0
    %3563 = vmatpush1.msra.mxu0 %v121
    %3564 = vmatprep.subr.mxu0 0.0
    %3565 = vmatpush1.msra.mxu0 %v118
    %3566 = vmatprep.subr.mxu0 0.0
    %3567 = vmatpush1.msra.mxu0 %v115
    %3568 = vmatprep.subr.mxu0 0.0
    %3569 = vmatpush1.msra.mxu0 %v112
    %3570 = vmatprep.subr.mxu0 0.0
    %3571 = vmatpush1.msra.mxu0 %v109
    %3572 = vmatprep.subr.mxu0 0.0
    %3573 = vmatpush1.msra.mxu0 %v106
    %3574 = vmatprep.subr.mxu0 0.0
    %3575 = vmatpush2.msra.mxu0 0.0
    %3576 = vmatprep.subr.mxu0 0.0
    %3577 = vmatpush2.msra.mxu0 0.0
    %3578 = vmatprep.subr.mxu0 0.0
    %3579 = vmatpush2.msra.mxu0 0.0
    %3580 = vmatprep.subr.mxu0 0.0
    %3581 = vmatpush2.msra.mxu0 0.0
    %3582 = vmatprep.subr.mxu0 0.0
    %3583 = vmatpush2.msra.mxu0 0.0
    %3584 = vmatprep.subr.mxu0 0.0
    %3585 = vmatpush2.msra.mxu0 0.0
    %3586 = vmatprep.subr.mxu0 0.0
    %3587 = vmatpush2.msra.mxu0 0.0
    %3588 = vmatprep.subr.mxu0 0.0
    %3589 = vmatpush2.msra.mxu0 0.0
    %3590 = vmatprep.subr.mxu0 0.0
    %3591 = vmatpush2.msra.mxu0 0.0
    %3592 = vmatprep.subr.mxu0 0.0
    %3593 = vmatpush2.msra.mxu0 0.0
    %3594 = vmatprep.subr.mxu0 0.0
    %3595 = vmatpush2.msra.mxu0 0.0
    %3596 = vmatprep.subr.mxu0 0.0
    %3597 = vmatpush2.msra.mxu0 0.0
    %3598 = vmatprep.subr.mxu0 0.0
    %3599 = vmatpush2.msra.mxu0 0.0
    %3600 = vmatprep.subr.mxu0 0.0
    %3601 = vmatpush2.msra.mxu0 0.0
    %3602 = vmatprep.subr.mxu0 0.0
    %3603 = vmatpush2.msra.mxu0 0.0
    %3604 = vmatprep.subr.mxu0 0.0
    %3605 = vmatpush2.msra.mxu0 0.0
    %3606 = vmatprep.mubr.f32.mxu0 0.0
    %3607 = vmatmul.mubr.f32.gmra.mxu0 %v3305
    %v3608 = vpop.f32.mrf.mxu0
    %v3609 = vadd.f32 0.0, %v3608
    %v3610 = vpop.f32.mrf.mxu0
    %3611 = vdwg.mxu0
    %v3612 = vadd.f32 %v1279, %v3538
    %v3613 = vxor.u32 %v3612, 2147483648
    %v3614 = vmul.f32 %v3613, 1.442695
    %v3615 = vpow.pop %v3614
    %v3616 = vadd.f32 %v3615, 1.0
    %v3617 = vrcp.pop %v3616
    %v3618 = vmul.f32 1.0, %v3617
    %v3619 = vadd.f32 %v1281, %v3540
    %v3620 = vxor.u32 %v3619, 2147483648
    %v3621 = vmul.f32 %v3620, 1.442695
    %v3622 = vpow.pop %v3621
    %v3623 = vadd.f32 %v3622, 1.0
    %v3624 = vrcp.pop %v3623
    %v3625 = vmul.f32 1.0, %v3624
    %v3626 = vadd.f32 %v3609, %v302
    %v3627 = vmul.f32 %v3618, %v3626
    %v3628 = vadd.f32 %v1350, %v3627
    %v3629 = vtanh.pop %v3628
    %v3630 = vsub.f32 1.0, %v3625
    %v3631 = vmul.f32 %v3630, %v3629
    %v3632 = vmul.f32 %v3625, %v3305
    %v3633 = vadd.f32 %v3631, %v3632
    %3634 = vmatprep.subr.mxu0 %v213
    %3635 = vmatpush1.msra.mxu0 %v212
    %3636 = vmatprep.subr.mxu0 %v209
    %3637 = vmatpush1.msra.mxu0 %v208
    %3638 = vmatprep.subr.mxu0 %v205
    %3639 = vmatpush1.msra.mxu0 %v204
    %3640 = vmatprep.subr.mxu0 %v201
    %3641 = vmatpush1.msra.mxu0 %v200
    %3642 = vmatprep.subr.mxu0 %v197
    %3643 = vmatpush1.msra.mxu0 %v196
    %3644 = vmatprep.subr.mxu0 %v193
    %3645 = vmatpush1.msra.mxu0 %v192
    %3646 = vmatprep.subr.mxu0 %v189
    %3647 = vmatpush1.msra.mxu0 %v188
    %3648 = vmatprep.subr.mxu0 %v185
    %3649 = vmatpush1.msra.mxu0 %v184
    %3650 = vmatprep.subr.mxu0 %v181
    %3651 = vmatpush1.msra.mxu0 %v180
    %3652 = vmatprep.subr.mxu0 %v177
    %3653 = vmatpush1.msra.mxu0 %v176
    %3654 = vmatprep.subr.mxu0 %v173
    %3655 = vmatpush1.msra.mxu0 %v172
    %3656 = vmatprep.subr.mxu0 %v169
    %3657 = vmatpush1.msra.mxu0 %v168
    %3658 = vmatprep.subr.mxu0 %v165
    %3659 = vmatpush1.msra.mxu0 %v164
    %3660 = vmatprep.subr.mxu0 %v161
    %3661 = vmatpush1.msra.mxu0 %v160
    %3662 = vmatprep.subr.mxu0 %v157
    %3663 = vmatpush1.msra.mxu0 %v156
    %3664 = vmatprep.subr.mxu0 %v153
    %3665 = vmatpush1.msra.mxu0 %v152
    %3666 = vmatprep.subr.mxu0 %v277
    %3667 = vmatpush2.msra.mxu0 %v276
    %3668 = vmatprep.subr.mxu0 %v273
    %3669 = vmatpush2.msra.mxu0 %v272
    %3670 = vmatprep.subr.mxu0 %v269
    %3671 = vmatpush2.msra.mxu0 %v268
    %3672 = vmatprep.subr.mxu0 %v265
    %3673 = vmatpush2.msra.mxu0 %v264
    %3674 = vmatprep.subr.mxu0 %v261
    %3675 = vmatpush2.msra.mxu0 %v260
    %3676 = vmatprep.subr.mxu0 %v257
    %3677 = vmatpush2.msra.mxu0 %v256
    %3678 = vmatprep.subr.mxu0 %v253
    %3679 = vmatpush2.msra.mxu0 %v252
    %3680 = vmatprep.subr.mxu0 %v249
    %3681 = vmatpush2.msra.mxu0 %v248
    %3682 = vmatprep.subr.mxu0 %v245
    %3683 = vmatpush2.msra.mxu0 %v244
    %3684 = vmatprep.subr.mxu0 %v241
    %3685 = vmatpush2.msra.mxu0 %v240
    %3686 = vmatprep.subr.mxu0 %v237
    %3687 = vmatpush2.msra.mxu0 %v236
    %3688 = vmatprep.subr.mxu0 %v233
    %3689 = vmatpush2.msra.mxu0 %v232
    %3690 = vmatprep.subr.mxu0 %v229
    %3691 = vmatpush2.msra.mxu0 %v228
    %3692 = vmatprep.subr.mxu0 %v225
    %3693 = vmatpush2.msra.mxu0 %v224
    %3694 = vmatprep.subr.mxu0 %v221
    %3695 = vmatpush2.msra.mxu0 %v220
    %3696 = vmatprep.subr.mxu0 %v217
    %3697 = vmatpush2.msra.mxu0 %v216
    %3698 = vmatprep.mubr.f32.mxu0 %v3466
    %3699 = vmatmul.mubr.f32.gmra.mxu0 %v3633
    %v3700 = vpop.f32.mrf.mxu0
    %v3701 = vadd.f32 %v309, %v3700
    %v3702 = vpop.f32.mrf.mxu0
    %v3703 = vadd.f32 %v313, %v3702
    %3704 = vdwg.mxu0
    %3705 = vmatprep.subr.mxu0 %v215
    %3706 = vmatpush1.msra.mxu0 %v214
    %3707 = vmatprep.subr.mxu0 %v211
    %3708 = vmatpush1.msra.mxu0 %v210
    %3709 = vmatprep.subr.mxu0 %v207
    %3710 = vmatpush1.msra.mxu0 %v206
    %3711 = vmatprep.subr.mxu0 %v203
    %3712 = vmatpush1.msra.mxu0 %v202
    %3713 = vmatprep.subr.mxu0 %v199
    %3714 = vmatpush1.msra.mxu0 %v198
    %3715 = vmatprep.subr.mxu0 %v195
    %3716 = vmatpush1.msra.mxu0 %v194
    %3717 = vmatprep.subr.mxu0 %v191
    %3718 = vmatpush1.msra.mxu0 %v190
    %3719 = vmatprep.subr.mxu0 %v187
    %3720 = vmatpush1.msra.mxu0 %v186
    %3721 = vmatprep.subr.mxu0 %v183
    %3722 = vmatpush1.msra.mxu0 %v182
    %3723 = vmatprep.subr.mxu0 %v179
    %3724 = vmatpush1.msra.mxu0 %v178
    %3725 = vmatprep.subr.mxu0 %v175
    %3726 = vmatpush1.msra.mxu0 %v174
    %3727 = vmatprep.subr.mxu0 %v171
    %3728 = vmatpush1.msra.mxu0 %v170
    %3729 = vmatprep.subr.mxu0 %v167
    %3730 = vmatpush1.msra.mxu0 %v166
    %3731 = vmatprep.subr.mxu0 %v163
    %3732 = vmatpush1.msra.mxu0 %v162
    %3733 = vmatprep.subr.mxu0 %v159
    %3734 = vmatpush1.msra.mxu0 %v158
    %3735 = vmatprep.subr.mxu0 %v155
    %3736 = vmatpush1.msra.mxu0 %v154
    %3737 = vmatprep.subr.mxu0 %v279
    %3738 = vmatpush2.msra.mxu0 %v278
    %3739 = vmatprep.subr.mxu0 %v275
    %3740 = vmatpush2.msra.mxu0 %v274
    %3741 = vmatprep.subr.mxu0 %v271
    %3742 = vmatpush2.msra.mxu0 %v270
    %3743 = vmatprep.subr.mxu0 %v267
    %3744 = vmatpush2.msra.mxu0 %v266
    %3745 = vmatprep.subr.mxu0 %v263
    %3746 = vmatpush2.msra.mxu0 %v262
    %3747 = vmatprep.subr.mxu0 %v259
    %3748 = vmatpush2.msra.mxu0 %v258
    %3749 = vmatprep.subr.mxu0 %v255
    %3750 = vmatpush2.msra.mxu0 %v254
    %3751 = vmatprep.subr.mxu0 %v251
    %3752 = vmatpush2.msra.mxu0 %v250
    %3753 = vmatprep.subr.mxu0 %v247
    %3754 = vmatpush2.msra.mxu0 %v246
    %3755 = vmatprep.subr.mxu0 %v243
    %3756 = vmatpush2.msra.mxu0 %v242
    %3757 = vmatprep.subr.mxu0 %v239
    %3758 = vmatpush2.msra.mxu0 %v238
    %3759 = vmatprep.subr.mxu0 %v235
    %3760 = vmatpush2.msra.mxu0 %v234
    %3761 = vmatprep.subr.mxu0 %v231
    %3762 = vmatpush2.msra.mxu0 %v230
    %3763 = vmatprep.subr.mxu0 %v227
    %3764 = vmatpush2.msra.mxu0 %v226
    %3765 = vmatprep.subr.mxu0 %v223
    %3766 = vmatpush2.msra.mxu0 %v222
    %3767 = vmatprep.subr.mxu0 %v219
    %3768 = vmatpush2.msra.mxu0 %v218
    %3769 = vmatprep.mubr.f32.mxu0 %v3466
    %3770 = vmatmul.mubr.f32.gmra.mxu0 %v3633
    %v3771 = vpop.f32.mrf.mxu0
    %v3772 = vadd.f32 %v317, %v3771
    %v3773 = vpop.f32.mrf.mxu0
    %v3774 = vadd.f32 %v321, %v3773
    %3775 = vdwg.mxu0
    %v3776 = vxor.u32 %v3701, 2147483648
    %v3777 = vmul.f32 %v3776, 1.442695
    %v3778 = vpow.pop %v3777
    %v3779 = vadd.f32 %v3778, 1.0
    %v3780 = vrcp.pop %v3779
    %v3781 = vmul.f32 1.0, %v3780
    %v3782 = vxor.u32 %v3703, 2147483648
    %v3783 = vmul.f32 %v3782, 1.442695
    %v3784 = vpow.pop %v3783
    %v3785 = vadd.f32 %v3784, 1.0
    %v3786 = vrcp.pop %v3785
    %v3787 = vmul.f32 1.0, %v3786
    %v3788 = vmul.f32 %v3781, %v3774
    %v3789 = vadd.f32 %v3772, %v3788
    %v3790 = vtanh.pop %v3789
    %v3791 = vsub.f32 1.0, %v3787
    %v3792 = vmul.f32 %v3791, %v3790
    %v3793 = vmul.f32 %v3787, %v3466
    %v3794 = vadd.f32 %v3792, %v3793
    %v3795 = vstv %s3470
    %vm3796 = vcmp.eq.s32.totalorder %v330, %v3795
    %v3797 = vsel %vm3796, %v3794, %v3469
    %s3798 = sadd.s32 %s1502, 7
    %3799 = vmatprep.subr.mxu0 %v150
    %3800 = vmatpush1.msra.mxu0 %v149
    %3801 = vmatprep.subr.mxu0 %v147
    %3802 = vmatpush1.msra.mxu0 %v146
    %3803 = vmatprep.subr.mxu0 %v144
    %3804 = vmatpush1.msra.mxu0 %v143
    %3805 = vmatprep.subr.mxu0 %v141
    %3806 = vmatpush1.msra.mxu0 %v140
    %3807 = vmatprep.subr.mxu0 %v138
    %3808 = vmatpush1.msra.mxu0 %v137
    %3809 = vmatprep.subr.mxu0 %v135
    %3810 = vmatpush1.msra.mxu0 %v134
    %3811 = vmatprep.subr.mxu0 %v132
    %3812 = vmatpush1.msra.mxu0 %v131
    %3813 = vmatprep.subr.mxu0 %v129
    %3814 = vmatpush1.msra.mxu0 %v128
    %3815 = vmatprep.subr.mxu0 %v126
    %3816 = vmatpush1.msra.mxu0 %v125
    %3817 = vmatprep.subr.mxu0 %v123
    %3818 = vmatpush1.msra.mxu0 %v122
    %3819 = vmatprep.subr.mxu0 %v120
    %3820 = vmatpush1.msra.mxu0 %v119
    %3821 = vmatprep.subr.mxu0 %v117
    %3822 = vmatpush1.msra.mxu0 %v116
    %3823 = vmatprep.subr.mxu0 %v114
    %3824 = vmatpush1.msra.mxu0 %v113
    %3825 = vmatprep.subr.mxu0 %v111
    %3826 = vmatpush1.msra.mxu0 %v110
    %3827 = vmatprep.subr.mxu0 %v108
    %3828 = vmatpush1.msra.mxu0 %v107
    %3829 = vmatprep.subr.mxu0 %v105
    %3830 = vmatpush1.msra.mxu0 %v104
    %3831 = vmatprep.subr.mxu0 0.0
    %3832 = vmatpush2.msra.mxu0 0.0
    %3833 = vmatprep.subr.mxu0 0.0
    %3834 = vmatpush2.msra.mxu0 0.0
    %3835 = vmatprep.subr.mxu0 0.0
    %3836 = vmatpush2.msra.mxu0 0.0
    %3837 = vmatprep.subr.mxu0 0.0
    %3838 = vmatpush2.msra.mxu0 0.0
    %3839 = vmatprep.subr.mxu0 0.0
    %3840 = vmatpush2.msra.mxu0 0.0
    %3841 = vmatprep.subr.mxu0 0.0
    %3842 = vmatpush2.msra.mxu0 0.0
    %3843 = vmatprep.subr.mxu0 0.0
    %3844 = vmatpush2.msra.mxu0 0.0
    %3845 = vmatprep.subr.mxu0 0.0
    %3846 = vmatpush2.msra.mxu0 0.0
    %3847 = vmatprep.subr.mxu0 0.0
    %3848 = vmatpush2.msra.mxu0 0.0
    %3849 = vmatprep.subr.mxu0 0.0
    %3850 = vmatpush2.msra.mxu0 0.0
    %3851 = vmatprep.subr.mxu0 0.0
    %3852 = vmatpush2.msra.mxu0 0.0
    %3853 = vmatprep.subr.mxu0 0.0
    %3854 = vmatpush2.msra.mxu0 0.0
    %3855 = vmatprep.subr.mxu0 0.0
    %3856 = vmatpush2.msra.mxu0 0.0
    %3857 = vmatprep.subr.mxu0 0.0
    %3858 = vmatpush2.msra.mxu0 0.0
    %3859 = vmatprep.subr.mxu0 0.0
    %3860 = vmatpush2.msra.mxu0 0.0
    %3861 = vmatprep.subr.mxu0 0.0
    %3862 = vmatpush2.msra.mxu0 0.0
    %3863 = vmatprep.mubr.f32.mxu0 0.0
    %3864 = vmatmul.mubr.f32.gmra.mxu0 %v3633
    %v3865 = vpop.f32.mrf.mxu0
    %v3866 = vadd.f32 0.0, %v3865
    %v3867 = vpop.f32.mrf.mxu0
    %v3868 = vadd.f32 0.0, %v3867
    %3869 = vdwg.mxu0
    %3870 = vmatprep.subr.mxu0 0.0
    %3871 = vmatpush1.msra.mxu0 %v151
    %3872 = vmatprep.subr.mxu0 0.0
    %3873 = vmatpush1.msra.mxu0 %v148
    %3874 = vmatprep.subr.mxu0 0.0
    %3875 = vmatpush1.msra.mxu0 %v145
    %3876 = vmatprep.subr.mxu0 0.0
    %3877 = vmatpush1.msra.mxu0 %v142
    %3878 = vmatprep.subr.mxu0 0.0
    %3879 = vmatpush1.msra.mxu0 %v139
    %3880 = vmatprep.subr.mxu0 0.0
    %3881 = vmatpush1.msra.mxu0 %v136
    %3882 = vmatprep.subr.mxu0 0.0
    %3883 = vmatpush1.msra.mxu0 %v133
    %3884 = vmatprep.subr.mxu0 0.0
    %3885 = vmatpush1.msra.mxu0 %v130
    %3886 = vmatprep.subr.mxu0 0.0
    %3887 = vmatpush1.msra.mxu0 %v127
    %3888 = vmatprep.subr.mxu0 0.0
    %3889 = vmatpush1.msra.mxu0 %v124
    %3890 = vmatprep.subr.mxu0 0.0
    %3891 = vmatpush1.msra.mxu0 %v121
    %3892 = vmatprep.subr.mxu0 0.0
    %3893 = vmatpush1.msra.mxu0 %v118
    %3894 = vmatprep.subr.mxu0 0.0
    %3895 = vmatpush1.msra.mxu0 %v115
    %3896 = vmatprep.subr.mxu0 0.0
    %3897 = vmatpush1.msra.mxu0 %v112
    %3898 = vmatprep.subr.mxu0 0.0
    %3899 = vmatpush1.msra.mxu0 %v109
    %3900 = vmatprep.subr.mxu0 0.0
    %3901 = vmatpush1.msra.mxu0 %v106
    %3902 = vmatprep.subr.mxu0 0.0
    %3903 = vmatpush2.msra.mxu0 0.0
    %3904 = vmatprep.subr.mxu0 0.0
    %3905 = vmatpush2.msra.mxu0 0.0
    %3906 = vmatprep.subr.mxu0 0.0
    %3907 = vmatpush2.msra.mxu0 0.0
    %3908 = vmatprep.subr.mxu0 0.0
    %3909 = vmatpush2.msra.mxu0 0.0
    %3910 = vmatprep.subr.mxu0 0.0
    %3911 = vmatpush2.msra.mxu0 0.0
    %3912 = vmatprep.subr.mxu0 0.0
    %3913 = vmatpush2.msra.mxu0 0.0
    %3914 = vmatprep.subr.mxu0 0.0
    %3915 = vmatpush2.msra.mxu0 0.0
    %3916 = vmatprep.subr.mxu0 0.0
    %3917 = vmatpush2.msra.mxu0 0.0
    %3918 = vmatprep.subr.mxu0 0.0
    %3919 = vmatpush2.msra.mxu0 0.0
    %3920 = vmatprep.subr.mxu0 0.0
    %3921 = vmatpush2.msra.mxu0 0.0
    %3922 = vmatprep.subr.mxu0 0.0
    %3923 = vmatpush2.msra.mxu0 0.0
    %3924 = vmatprep.subr.mxu0 0.0
    %3925 = vmatpush2.msra.mxu0 0.0
    %3926 = vmatprep.subr.mxu0 0.0
    %3927 = vmatpush2.msra.mxu0 0.0
    %3928 = vmatprep.subr.mxu0 0.0
    %3929 = vmatpush2.msra.mxu0 0.0
    %3930 = vmatprep.subr.mxu0 0.0
    %3931 = vmatpush2.msra.mxu0 0.0
    %3932 = vmatprep.subr.mxu0 0.0
    %3933 = vmatpush2.msra.mxu0 0.0
    %3934 = vmatprep.mubr.f32.mxu0 0.0
    %3935 = vmatmul.mubr.f32.gmra.mxu0 %v3633
    %v3936 = vpop.f32.mrf.mxu0
    %v3937 = vadd.f32 0.0, %v3936
    %v3938 = vpop.f32.mrf.mxu0
    %3939 = vdwg.mxu0
    %v3940 = vadd.f32 %v1425, %v3866
    %v3941 = vxor.u32 %v3940, 2147483648
    %v3942 = vmul.f32 %v3941, 1.442695
    %v3943 = vpow.pop %v3942
    %v3944 = vadd.f32 %v3943, 1.0
    %v3945 = vrcp.pop %v3944
    %v3946 = vmul.f32 1.0, %v3945
    %v3947 = vadd.f32 %v1427, %v3868
    %v3948 = vxor.u32 %v3947, 2147483648
    %v3949 = vmul.f32 %v3948, 1.442695
    %v3950 = vpow.pop %v3949
    %v3951 = vadd.f32 %v3950, 1.0
    %v3952 = vrcp.pop %v3951
    %v3953 = vmul.f32 1.0, %v3952
    %v3954 = vadd.f32 %v3937, %v302
    %v3955 = vmul.f32 %v3946, %v3954
    %v3956 = vadd.f32 %v1496, %v3955
    %v3957 = vtanh.pop %v3956
    %v3958 = vsub.f32 1.0, %v3953
    %v3959 = vmul.f32 %v3958, %v3957
    %v3960 = vmul.f32 %v3953, %v3633
    %v3961 = vadd.f32 %v3959, %v3960
    %3962 = vmatprep.subr.mxu0 %v213
    %3963 = vmatpush1.msra.mxu0 %v212
    %3964 = vmatprep.subr.mxu0 %v209
    %3965 = vmatpush1.msra.mxu0 %v208
    %3966 = vmatprep.subr.mxu0 %v205
    %3967 = vmatpush1.msra.mxu0 %v204
    %3968 = vmatprep.subr.mxu0 %v201
    %3969 = vmatpush1.msra.mxu0 %v200
    %3970 = vmatprep.subr.mxu0 %v197
    %3971 = vmatpush1.msra.mxu0 %v196
    %3972 = vmatprep.subr.mxu0 %v193
    %3973 = vmatpush1.msra.mxu0 %v192
    %3974 = vmatprep.subr.mxu0 %v189
    %3975 = vmatpush1.msra.mxu0 %v188
    %3976 = vmatprep.subr.mxu0 %v185
    %3977 = vmatpush1.msra.mxu0 %v184
    %3978 = vmatprep.subr.mxu0 %v181
    %3979 = vmatpush1.msra.mxu0 %v180
    %3980 = vmatprep.subr.mxu0 %v177
    %3981 = vmatpush1.msra.mxu0 %v176
    %3982 = vmatprep.subr.mxu0 %v173
    %3983 = vmatpush1.msra.mxu0 %v172
    %3984 = vmatprep.subr.mxu0 %v169
    %3985 = vmatpush1.msra.mxu0 %v168
    %3986 = vmatprep.subr.mxu0 %v165
    %3987 = vmatpush1.msra.mxu0 %v164
    %3988 = vmatprep.subr.mxu0 %v161
    %3989 = vmatpush1.msra.mxu0 %v160
    %3990 = vmatprep.subr.mxu0 %v157
    %3991 = vmatpush1.msra.mxu0 %v156
    %3992 = vmatprep.subr.mxu0 %v153
    %3993 = vmatpush1.msra.mxu0 %v152
    %3994 = vmatprep.subr.mxu0 %v277
    %3995 = vmatpush2.msra.mxu0 %v276
    %3996 = vmatprep.subr.mxu0 %v273
    %3997 = vmatpush2.msra.mxu0 %v272
    %3998 = vmatprep.subr.mxu0 %v269
    %3999 = vmatpush2.msra.mxu0 %v268
    %4000 = vmatprep.subr.mxu0 %v265
    %4001 = vmatpush2.msra.mxu0 %v264
    %4002 = vmatprep.subr.mxu0 %v261
    %4003 = vmatpush2.msra.mxu0 %v260
    %4004 = vmatprep.subr.mxu0 %v257
    %4005 = vmatpush2.msra.mxu0 %v256
    %4006 = vmatprep.subr.mxu0 %v253
    %4007 = vmatpush2.msra.mxu0 %v252
    %4008 = vmatprep.subr.mxu0 %v249
    %4009 = vmatpush2.msra.mxu0 %v248
    %4010 = vmatprep.subr.mxu0 %v245
    %4011 = vmatpush2.msra.mxu0 %v244
    %4012 = vmatprep.subr.mxu0 %v241
    %4013 = vmatpush2.msra.mxu0 %v240
    %4014 = vmatprep.subr.mxu0 %v237
    %4015 = vmatpush2.msra.mxu0 %v236
    %4016 = vmatprep.subr.mxu0 %v233
    %4017 = vmatpush2.msra.mxu0 %v232
    %4018 = vmatprep.subr.mxu0 %v229
    %4019 = vmatpush2.msra.mxu0 %v228
    %4020 = vmatprep.subr.mxu0 %v225
    %4021 = vmatpush2.msra.mxu0 %v224
    %4022 = vmatprep.subr.mxu0 %v221
    %4023 = vmatpush2.msra.mxu0 %v220
    %4024 = vmatprep.subr.mxu0 %v217
    %4025 = vmatpush2.msra.mxu0 %v216
    %4026 = vmatprep.mubr.f32.mxu0 %v3794
    %4027 = vmatmul.mubr.f32.gmra.mxu0 %v3961
    %v4028 = vpop.f32.mrf.mxu0
    %v4029 = vadd.f32 %v309, %v4028
    %v4030 = vpop.f32.mrf.mxu0
    %v4031 = vadd.f32 %v313, %v4030
    %4032 = vdwg.mxu0
    %4033 = vmatprep.subr.mxu0 %v215
    %4034 = vmatpush1.msra.mxu0 %v214
    %4035 = vmatprep.subr.mxu0 %v211
    %4036 = vmatpush1.msra.mxu0 %v210
    %4037 = vmatprep.subr.mxu0 %v207
    %4038 = vmatpush1.msra.mxu0 %v206
    %4039 = vmatprep.subr.mxu0 %v203
    %4040 = vmatpush1.msra.mxu0 %v202
    %4041 = vmatprep.subr.mxu0 %v199
    %4042 = vmatpush1.msra.mxu0 %v198
    %4043 = vmatprep.subr.mxu0 %v195
    %4044 = vmatpush1.msra.mxu0 %v194
    %4045 = vmatprep.subr.mxu0 %v191
    %4046 = vmatpush1.msra.mxu0 %v190
    %4047 = vmatprep.subr.mxu0 %v187
    %4048 = vmatpush1.msra.mxu0 %v186
    %4049 = vmatprep.subr.mxu0 %v183
    %4050 = vmatpush1.msra.mxu0 %v182
    %4051 = vmatprep.subr.mxu0 %v179
    %4052 = vmatpush1.msra.mxu0 %v178
    %4053 = vmatprep.subr.mxu0 %v175
    %4054 = vmatpush1.msra.mxu0 %v174
    %4055 = vmatprep.subr.mxu0 %v171
    %4056 = vmatpush1.msra.mxu0 %v170
    %4057 = vmatprep.subr.mxu0 %v167
    %4058 = vmatpush1.msra.mxu0 %v166
    %4059 = vmatprep.subr.mxu0 %v163
    %4060 = vmatpush1.msra.mxu0 %v162
    %4061 = vmatprep.subr.mxu0 %v159
    %4062 = vmatpush1.msra.mxu0 %v158
    %4063 = vmatprep.subr.mxu0 %v155
    %4064 = vmatpush1.msra.mxu0 %v154
    %4065 = vmatprep.subr.mxu0 %v279
    %4066 = vmatpush2.msra.mxu0 %v278
    %4067 = vmatprep.subr.mxu0 %v275
    %4068 = vmatpush2.msra.mxu0 %v274
    %4069 = vmatprep.subr.mxu0 %v271
    %4070 = vmatpush2.msra.mxu0 %v270
    %4071 = vmatprep.subr.mxu0 %v267
    %4072 = vmatpush2.msra.mxu0 %v266
    %4073 = vmatprep.subr.mxu0 %v263
    %4074 = vmatpush2.msra.mxu0 %v262
    %4075 = vmatprep.subr.mxu0 %v259
    %4076 = vmatpush2.msra.mxu0 %v258
    %4077 = vmatprep.subr.mxu0 %v255
    %4078 = vmatpush2.msra.mxu0 %v254
    %4079 = vmatprep.subr.mxu0 %v251
    %4080 = vmatpush2.msra.mxu0 %v250
    %4081 = vmatprep.subr.mxu0 %v247
    %4082 = vmatpush2.msra.mxu0 %v246
    %4083 = vmatprep.subr.mxu0 %v243
    %4084 = vmatpush2.msra.mxu0 %v242
    %4085 = vmatprep.subr.mxu0 %v239
    %4086 = vmatpush2.msra.mxu0 %v238
    %4087 = vmatprep.subr.mxu0 %v235
    %4088 = vmatpush2.msra.mxu0 %v234
    %4089 = vmatprep.subr.mxu0 %v231
    %4090 = vmatpush2.msra.mxu0 %v230
    %4091 = vmatprep.subr.mxu0 %v227
    %4092 = vmatpush2.msra.mxu0 %v226
    %4093 = vmatprep.subr.mxu0 %v223
    %4094 = vmatpush2.msra.mxu0 %v222
    %4095 = vmatprep.subr.mxu0 %v219
    %4096 = vmatpush2.msra.mxu0 %v218
    %4097 = vmatprep.mubr.f32.mxu0 %v3794
    %4098 = vmatmul.mubr.f32.gmra.mxu0 %v3961
    %v4099 = vpop.f32.mrf.mxu0
    %v4100 = vadd.f32 %v317, %v4099
    %v4101 = vpop.f32.mrf.mxu0
    %v4102 = vadd.f32 %v321, %v4101
    %4103 = vdwg.mxu0
    %v4104 = vxor.u32 %v4029, 2147483648
    %v4105 = vmul.f32 %v4104, 1.442695
    %v4106 = vpow.pop %v4105
    %v4107 = vadd.f32 %v4106, 1.0
    %v4108 = vrcp.pop %v4107
    %v4109 = vmul.f32 1.0, %v4108
    %v4110 = vxor.u32 %v4031, 2147483648
    %v4111 = vmul.f32 %v4110, 1.442695
    %v4112 = vpow.pop %v4111
    %v4113 = vadd.f32 %v4112, 1.0
    %v4114 = vrcp.pop %v4113
    %v4115 = vmul.f32 1.0, %v4114
    %v4116 = vmul.f32 %v4109, %v4102
    %v4117 = vadd.f32 %v4100, %v4116
    %v4118 = vtanh.pop %v4117
    %v4119 = vsub.f32 1.0, %v4115
    %v4120 = vmul.f32 %v4119, %v4118
    %v4121 = vmul.f32 %v4115, %v3794
    %v4122 = vadd.f32 %v4120, %v4121
    %v4123 = vstv %s3798
    %vm4124 = vcmp.eq.s32.totalorder %v330, %v4123
    %v4125 = vsel %vm4124, %v4122, %v3797
    %4126 = vst [vmem:[#allocation2] sm:$0xff] %v3961
    %4127 = vst [vmem:[#allocation3] sm:$0xff] %v4122
    %4128 = vst [vmem:[#allocation4] sm:$0xff] %v4125
    // Predicated region
    $region54: #{tpu_custom_call.1} parent=1 // pred_check
      %p4129 = pneg %p85
    $region55: #{tpu_custom_call.1} parent=1 // pred_check_branch
      %4131 = sbr.rel (%p4129) target = $region57
    $region56: #{tpu_custom_call.1} parent=1 // pred_region
      %v4132 = vmul.f32 %v4125, %v4125
      %4133 = vadd.xlane.f32.xlu0 %v4132
      %v4134 = vpop.xlane.xlu0 %4133
      %v4135 = vmax.f32 %v4134, 1e-12
      %v4136 = vrsqrt.pop %v4135
      %v4137 = vmul.f32 %v4125, %v4136
      %4138 = vst [vmem:[#allocation13] sm:$0xff] %v4137
    $region57: #{tpu_custom_call.1} parent=1 // pred_fallthru
      _
    // Predicated region
    $region58: #{tpu_custom_call.1} parent=1 // pred_check
      _
    $region59: #{tpu_custom_call.1} parent=1 // pred_check_branch
      %4140 = sbr.rel (0) target = $region61
    $region60: #{tpu_custom_call.1} parent=1 // pred_region
      %s4142 = ssub.s32 128, 128
      %4143 = vsyncadd [#allocation7], %s4142
      %s4145 = sshll.u32 [#allocation13], 4
      %s4146 = int_to_ptr.vmem [resolvable:$true] %s4145
      %4148 = dma.vmem_to_hbm [thread:$0]  %s4146, 128, %s8, [#allocation7]
    $region61: #{tpu_custom_call.1} parent=1 // pred_fallthru
      _
    // Predicated region
    $region62: #{tpu_custom_call.1} parent=1 // pred_check
      _
    $region63: #{tpu_custom_call.1} parent=1 // pred_check_branch
      %4150 = sbr.rel (0) target = $region65
    $region64: #{tpu_custom_call.1} parent=1 // pred_region
      %4151 = dma.done [#allocation7], 128
    $region65: #{tpu_custom_call.1} parent=1 // pred_fallthru
      _
    %4152 = vsyncpa [#allocation6], 1
    %4153 = vsyncpa [#allocation9], 1
    %4154 = vsyncpa [#allocation12], 1
    %4155 = vsyncpa [#allocation7], 1

</llo_original>
